<compile_context>
chip_gen: v7x
topology: tpu7x:2x2x1
jax: 0.10.0
libtpu: 0.0.40
codegen_flags: <defaults>
</compile_context>

<pallas_src>
import numpy as np
import jax
import jax.numpy as jnp
from jax.experimental import pallas as pl
from jax.experimental.pallas import tpu as pltpu

# Constants hard-coded in AttentionPageExample.__init__ / forward.
BS = 4                      # bs
SEQ = 128                   # max_seqlen
LAYERS = 6                  # transformer_block_count
HEADS = 32                  # attn_head_count
HEAD_DIM = 128              # attn_head_dim
TS = 16                     # block_pos_stride
FEAT = HEADS * HEAD_DIM     # feature_dim = 4096
NBLOCKS = SEQ // TS         # 8 sequence blocks per sequence
CACHE_LINES = 2             # k / v
PAGE_BYTES = LAYERS * CACHE_LINES * TS * FEAT * 4   # 3 MiB per page


def _fused_kernel(ids_ref, slab_in_hbm, h_out_ref, slab_out_hbm, page_buf, sems):
    """One batch row: run all 6 'attention' layers for each of the 8 sequence
    blocks; scatter every finished (LAYERS, 2, TS, HEADS, HEAD_DIM) KV page
    straight to its page id in HBM with a double-buffered DMA."""
    # slab_in_hbm exists only so it can be aliased into slab_out_hbm (untouched
    # pages keep their original contents through the alias); it is never read.
    del slab_in_hbm
    b = pl.program_id(0)

    def page_wait(slot):
        # Only the transfer size matters for the wait; page 0 is a same-shaped
        # stand-in for whatever page this slot's DMA actually targeted.
        pltpu.make_async_copy(page_buf.at[slot], slab_out_hbm.at[0],
                              sems.at[slot]).wait()

    # NBLOCKS is even; process sequence blocks in pairs so the double-buffer
    # slot (0/1) is a static index everywhere.
    @pl.loop(0, NBLOCKS // 2)
    def _pair(p):
        for slot in range(2):                       # static unroll (2)
            j = p * 2 + slot                        # sequence block index

            # Re-use this slot only after its previous scatter DMA (issued one
            # pair ago) has drained.
            @pl.when(p >= 1)
            def _():
                page_wait(slot)

            # torch starts from ones -> regenerate the h tile in-kernel instead
            # of streaming an 8 MiB ones tensor from HBM.
            h = jnp.ones((TS, HEADS, HEAD_DIM), jnp.float32)
            for l in range(LAYERS):                 # static unroll (6)
                page_buf[slot, l, 0] = h * 2.0      # xk cache line
                page_buf[slot, l, 1] = h * 4.0      # xv cache line
                # h + (h * xk) * xv with the power-of-two scales folded at the
                # end; bit-identical to the reference evaluation order.
                h = h + h * h * h * 8.0
            h_out_ref[0, pl.ds(j, 1)] = h[None]

            # Scatter the finished page to its destination page id.
            pid = ids_ref[b, j]
            pltpu.make_async_copy(page_buf.at[slot], slab_out_hbm.at[pid],
                                  sems.at[slot]).start()

    # Drain the last two in-flight page writebacks before this grid step ends
    # (scratch and semaphores are reused by the next step / other core).
    for slot in range(2):
        page_wait(slot)


def _attention_page_example(seq_lens, attn_block_ids, attn_page_slab):
    del seq_lens                                    # unused by the torch forward too
    ids = attn_block_ids.astype(jnp.int32)          # (BS, NBLOCKS) page table
    # Native paged layout; deliberately NOT flattened so the input->output alias
    # / donation cannot be dropped by a host-side layout change.
    slab = attn_page_slab.reshape(-1, LAYERS, CACHE_LINES, TS, HEADS, HEAD_DIM)

    flops = LAYERS * 5 * BS * SEQ * FEAT                        # elementwise only
    bytes_accessed = BS * NBLOCKS * PAGE_BYTES + BS * SEQ * FEAT * 4

    h_blk, new_slab = pl.pallas_call(
        _fused_kernel,
        out_shape=(
            jax.ShapeDtypeStruct((BS, NBLOCKS, TS, HEADS, HEAD_DIM), jnp.float32),
            jax.ShapeDtypeStruct(slab.shape, jnp.float32),
        ),
        grid_spec=pltpu.PrefetchScalarGridSpec(
            num_scalar_prefetch=1,                              # attn_block_ids -> SMEM
            grid=(BS,),
            in_specs=[pl.BlockSpec(memory_space=pl.ANY)],       # slab: alias only
            out_specs=(
                pl.BlockSpec((1, NBLOCKS, TS, HEADS, HEAD_DIM),
                             lambda b, ids: (b, 0, 0, 0, 0)),
                pl.BlockSpec(memory_space=pl.ANY),              # slab: manual DMA
            ),
            scratch_shapes=[
                pltpu.VMEM((2, LAYERS, CACHE_LINES, TS, HEADS, HEAD_DIM),
                           jnp.float32),                        # page double-buffer (6 MiB)
                pltpu.SemaphoreType.DMA((2,)),
            ],
        ),
        # Call args are (ids, slab): slab is input index 1 (scalar-prefetch args
        # count in the alias numbering); outputs are (h, slab): slab is output 1.
        input_output_aliases={1: 1},
        compiler_params=pltpu.CompilerParams(
            dimension_semantics=("parallel",),
            vmem_limit_bytes=32 * 1024 * 1024),
        cost_estimate=pl.CostEstimate(flops=flops, transcendentals=0,
                                      bytes_accessed=bytes_accessed),
    )(ids, slab)

    h = h_blk.reshape(BS, SEQ, FEAT)                # contiguous, free reshape
    return h, new_slab.reshape(attn_page_slab.shape)


# Donate the slab so the aliased slab output reuses its HBM buffer in place.
attention_page_example = jax.jit(_attention_page_example, donate_argnums=(2,))


def _reference(seq_lens, attn_block_ids, attn_page_slab):
    """Pure-JAX reference matching the torch module (functionalized mutation)."""
    del seq_lens
    slab_flat = attn_page_slab.reshape(-1, TS, HEADS, HEAD_DIM)
    ids = attn_block_ids.astype(jnp.int32)
    h = jnp.ones((BS, SEQ, FEAT), jnp.float32)
    for l in range(LAYERS):
        xk = h * 2.0
        xv = h * 4.0
        xk_b = xk.reshape(BS * NBLOCKS, TS, HEADS, HEAD_DIM)
        xv_b = xv.reshape(BS * NBLOCKS, TS, HEADS, HEAD_DIM)
        k_ids = (ids * (LAYERS * CACHE_LINES) + l * CACHE_LINES).reshape(-1)
        slab_flat = slab_flat.at[k_ids].set(xk_b)
        slab_flat = slab_flat.at[k_ids + 1].set(xv_b)
        h = h + (h * xk) * xv
    return h, slab_flat.reshape(attn_page_slab.shape)


if __name__ == "__main__":
    key = jax.random.PRNGKey(0)
    k1, k2, k3 = jax.random.split(key, 3)

    # Slab has more pages than the block-id table references, so the
    # untouched-pages-through-the-alias path is actually exercised.
    PAGES_TOTAL = BS * NBLOCKS + 16                 # 48 pages, only 32 written
    seq_lens = jax.random.randint(k1, (BS,), 1, SEQ + 1, dtype=jnp.int32)
    perm = jax.random.permutation(k2, PAGES_TOTAL).astype(jnp.int32)
    attn_block_ids = perm[: BS * NBLOCKS].reshape(BS, NBLOCKS)   # unique page ids
    attn_page_slab = jax.random.normal(
        k3, (PAGES_TOTAL, LAYERS, CACHE_LINES, TS, HEADS, HEAD_DIM), jnp.float32)

    # Compute the reference (and pull to host) BEFORE the kernel call, since the
    # kernel call donates attn_page_slab's buffer.
    ref_h, ref_slab = _reference(seq_lens, attn_block_ids, attn_page_slab)
    ref_h = np.asarray(ref_h)
    ref_slab = np.asarray(ref_slab)

    h, new_slab = attention_page_example(seq_lens, attn_block_ids, attn_page_slab)
    jax.block_until_ready((h, new_slab))

    assert h.shape == (BS, SEQ, FEAT) and h.dtype == jnp.float32
    assert new_slab.shape == (PAGES_TOTAL, LAYERS, CACHE_LINES, TS, HEADS, HEAD_DIM)
    # h overflows to inf by the last layers exactly like the torch reference;
    # allclose requires inf positions/signs to match exactly.
    assert np.allclose(np.asarray(h), ref_h, equal_nan=True)
    assert np.allclose(np.asarray(new_slab), ref_slab, equal_nan=True)
    print("KERNEL_OK")
</pallas_src>

<mosaic_0001>
module attributes {stable_mosaic.version = 11 : i64} {
  func.func @_fused_kernel(%arg0: i32, %arg1: memref<4x8xi32, #tpu.memory_space<smem>>, %arg2: memref<48x6x2x16x32x128xf32, #tpu.memory_space<any>>, %arg3: memref<1x8x16x32x128xf32, #tpu.memory_space<vmem>>, %arg4: memref<48x6x2x16x32x128xf32, #tpu.memory_space<any>>, %arg5: memref<2x6x2x16x32x128xf32, #tpu.memory_space<vmem>>, %arg6: memref<2x!tpu.dma_semaphore, #tpu.memory_space<semaphore_mem>>) attributes {dimension_semantics = [#tpu.dimension_semantics<parallel>], iteration_bounds = array<i64: 4>, scalar_prefetch = 1 : i64, scratch_operands = 2 : i64, tpu.core_type = #tpu.core_type<tc>, window_params = [{}, {transform_indices = @transform_1, window_bounds = array<i64: 1, 8, 16, 32, 128>}, {}]} {
    %c0_i32 = arith.constant 0 : i32
    %c4_i32 = arith.constant 4 : i32
    %0 = arith.addi %c0_i32, %c4_i32 : i32
    %c1_i32 = arith.constant 1 : i32
    scf.for %arg7 = %c0_i32 to %0 step %c1_i32  : i32 {
      %c1_i32_27 = arith.constant 1 : i32
      %13 = arith.muli %arg7, %c1_i32_27 : i32
      %c0_i32_28 = arith.constant 0 : i32
      %14 = arith.addi %c0_i32_28, %13 : i32
      %c2_i32 = arith.constant 2 : i32
      %15 = arith.muli %14, %c2_i32 : i32
      %c0_i32_29 = arith.constant 0 : i32
      %16 = arith.addi %15, %c0_i32_29 : i32
      %c1_i32_30 = arith.constant 1 : i32
      %17 = arith.cmpi sge, %14, %c1_i32_30 : i32
      %18 = arith.extui %17 : i1 to i32
      %c0_i32_31 = arith.constant 0 : i32
      %19 = arith.cmpi ne, %18, %c0_i32_31 : i32
      scf.if %19 {
        %c0_i32_243 = arith.constant 0 : i32
        %c0_i32_244 = arith.constant 0 : i32
        %c0_i32_245 = arith.constant 0 : i32
        %c0_i32_246 = arith.constant 0 : i32
        %c0_i32_247 = arith.constant 0 : i32
        %c0_i32_248 = arith.constant 0 : i32
        %c0_i32_249 = arith.constant 0 : i32
        %c0_i32_250 = arith.constant 0 : i32
        %235 = tpu.memref_slice %arg5[%c0_i32_243, %c0_i32_246, %c0_i32_247, %c0_i32_248, %c0_i32_249, %c0_i32_250] : memref<2x6x2x16x32x128xf32, #tpu.memory_space<vmem>> -> memref<1x6x2x16x32x128xf32, #tpu.memory_space<vmem>>
        %236 = tpu.memref_squeeze %235 : memref<1x6x2x16x32x128xf32, #tpu.memory_space<vmem>> -> memref<6x2x16x32x128xf32, #tpu.memory_space<vmem>>
        %c0_i32_251 = arith.constant 0 : i32
        %c0_i32_252 = arith.constant 0 : i32
        %c0_i32_253 = arith.constant 0 : i32
        %c0_i32_254 = arith.constant 0 : i32
        %c0_i32_255 = arith.constant 0 : i32
        %237 = tpu.memref_slice %arg4[%c0_i32_244, %c0_i32_251, %c0_i32_252, %c0_i32_253, %c0_i32_254, %c0_i32_255] : memref<48x6x2x16x32x128xf32, #tpu.memory_space<any>> -> memref<1x6x2x16x32x128xf32, #tpu.memory_space<any>>
        %238 = tpu.memref_squeeze %237 : memref<1x6x2x16x32x128xf32, #tpu.memory_space<any>> -> memref<6x2x16x32x128xf32, #tpu.memory_space<any>>
        %239 = tpu.memref_slice %arg6[%c0_i32_245] : memref<2x!tpu.dma_semaphore, #tpu.memory_space<semaphore_mem>> -> memref<1x!tpu.dma_semaphore, #tpu.memory_space<semaphore_mem>>
        %240 = tpu.memref_squeeze %239 : memref<1x!tpu.dma_semaphore, #tpu.memory_space<semaphore_mem>> -> memref<!tpu.dma_semaphore, #tpu.memory_space<semaphore_mem>>
        tpu.wait_dma2 semaphore(%240 : memref<!tpu.dma_semaphore, #tpu.memory_space<semaphore_mem>>) src(%236 : memref<6x2x16x32x128xf32, #tpu.memory_space<vmem>>) dst(%238 : memref<6x2x16x32x128xf32, #tpu.memory_space<any>>)
      } else {
      }
      %cst = arith.constant 1.000000e+00 : f32
      %20 = vector.broadcast %cst : f32 to vector<16x32x128xf32>
      %cst_32 = arith.constant 2.000000e+00 : f32
      %21 = vector.broadcast %cst_32 : f32 to vector<16x32x128xf32>
      %22 = arith.mulf %20, %21 : vector<16x32x128xf32>
      %c0 = arith.constant 0 : index
      %c0_33 = arith.constant 0 : index
      %c0_34 = arith.constant 0 : index
      %c0_35 = arith.constant 0 : index
      %c0_36 = arith.constant 0 : index
      %c0_37 = arith.constant 0 : index
      %23 = vector.load %arg5[%c0, %c0_33, %c0_34, %c0_35, %c0_36, %c0_37] : memref<2x6x2x16x32x128xf32, #tpu.memory_space<vmem>>, vector<1x1x1x16x32x128xf32>
      %24 = vector.shape_cast %23 : vector<1x1x1x16x32x128xf32> to vector<16x32x128xf32>
      %25 = vector.shape_cast %22 : vector<16x32x128xf32> to vector<1x1x1x16x32x128xf32>
      tpu.vector_store %arg5[%c0, %c0_33, %c0_34, %c0_35, %c0_36, %c0_37], %25 {strides = array<i32>} : memref<2x6x2x16x32x128xf32, #tpu.memory_space<vmem>>, vector<1x1x1x16x32x128xf32>,
      %cst_38 = arith.constant 4.000000e+00 : f32
      %26 = vector.broadcast %cst_38 : f32 to vector<16x32x128xf32>
      %27 = arith.mulf %20, %26 : vector<16x32x128xf32>
      %c0_39 = arith.constant 0 : index
      %c0_40 = arith.constant 0 : index
      %c1 = arith.constant 1 : index
      %c0_41 = arith.constant 0 : index
      %c0_42 = arith.constant 0 : index
      %c0_43 = arith.constant 0 : index
      %28 = vector.load %arg5[%c0_39, %c0_40, %c1, %c0_41, %c0_42, %c0_43] : memref<2x6x2x16x32x128xf32, #tpu.memory_space<vmem>>, vector<1x1x1x16x32x128xf32>
      %29 = vector.shape_cast %28 : vector<1x1x1x16x32x128xf32> to vector<16x32x128xf32>
      %30 = vector.shape_cast %27 : vector<16x32x128xf32> to vector<1x1x1x16x32x128xf32>
      tpu.vector_store %arg5[%c0_39, %c0_40, %c1, %c0_41, %c0_42, %c0_43], %30 {strides = array<i32>} : memref<2x6x2x16x32x128xf32, #tpu.memory_space<vmem>>, vector<1x1x1x16x32x128xf32>,
      %31 = arith.mulf %20, %20 : vector<16x32x128xf32>
      %32 = arith.mulf %31, %20 : vector<16x32x128xf32>
      %cst_44 = arith.constant 8.000000e+00 : f32
      %33 = vector.broadcast %cst_44 : f32 to vector<16x32x128xf32>
      %34 = arith.mulf %32, %33 : vector<16x32x128xf32>
      %35 = arith.addf %20, %34 : vector<16x32x128xf32>
      %cst_45 = arith.constant 2.000000e+00 : f32
      %36 = vector.broadcast %cst_45 : f32 to vector<16x32x128xf32>
      %37 = arith.mulf %35, %36 : vector<16x32x128xf32>
      %c0_46 = arith.constant 0 : index
      %c1_47 = arith.constant 1 : index
      %c0_48 = arith.constant 0 : index
      %c0_49 = arith.constant 0 : index
      %c0_50 = arith.constant 0 : index
      %c0_51 = arith.constant 0 : index
      %38 = vector.load %arg5[%c0_46, %c1_47, %c0_48, %c0_49, %c0_50, %c0_51] : memref<2x6x2x16x32x128xf32, #tpu.memory_space<vmem>>, vector<1x1x1x16x32x128xf32>
      %39 = vector.shape_cast %38 : vector<1x1x1x16x32x128xf32> to vector<16x32x128xf32>
      %40 = vector.shape_cast %37 : vector<16x32x128xf32> to vector<1x1x1x16x32x128xf32>
      tpu.vector_store %arg5[%c0_46, %c1_47, %c0_48, %c0_49, %c0_50, %c0_51], %40 {strides = array<i32>} : memref<2x6x2x16x32x128xf32, #tpu.memory_space<vmem>>, vector<1x1x1x16x32x128xf32>,
      %cst_52 = arith.constant 4.000000e+00 : f32
      %41 = vector.broadcast %cst_52 : f32 to vector<16x32x128xf32>
      %42 = arith.mulf %35, %41 : vector<16x32x128xf32>
      %c0_53 = arith.constant 0 : index
      %c1_54 = arith.constant 1 : index
      %c1_55 = arith.constant 1 : index
      %c0_56 = arith.constant 0 : index
      %c0_57 = arith.constant 0 : index
      %c0_58 = arith.constant 0 : index
      %43 = vector.load %arg5[%c0_53, %c1_54, %c1_55, %c0_56, %c0_57, %c0_58] : memref<2x6x2x16x32x128xf32, #tpu.memory_space<vmem>>, vector<1x1x1x16x32x128xf32>
      %44 = vector.shape_cast %43 : vector<1x1x1x16x32x128xf32> to vector<16x32x128xf32>
      %45 = vector.shape_cast %42 : vector<16x32x128xf32> to vector<1x1x1x16x32x128xf32>
      tpu.vector_store %arg5[%c0_53, %c1_54, %c1_55, %c0_56, %c0_57, %c0_58], %45 {strides = array<i32>} : memref<2x6x2x16x32x128xf32, #tpu.memory_space<vmem>>, vector<1x1x1x16x32x128xf32>,
      %46 = arith.mulf %35, %35 : vector<16x32x128xf32>
      %47 = arith.mulf %46, %35 : vector<16x32x128xf32>
      %cst_59 = arith.constant 8.000000e+00 : f32
      %48 = vector.broadcast %cst_59 : f32 to vector<16x32x128xf32>
      %49 = arith.mulf %47, %48 : vector<16x32x128xf32>
      %50 = arith.addf %35, %49 : vector<16x32x128xf32>
      %cst_60 = arith.constant 2.000000e+00 : f32
      %51 = vector.broadcast %cst_60 : f32 to vector<16x32x128xf32>
      %52 = arith.mulf %50, %51 : vector<16x32x128xf32>
      %c0_61 = arith.constant 0 : index
      %c2 = arith.constant 2 : index
      %c0_62 = arith.constant 0 : index
      %c0_63 = arith.constant 0 : index
      %c0_64 = arith.constant 0 : index
      %c0_65 = arith.constant 0 : index
      %53 = vector.load %arg5[%c0_61, %c2, %c0_62, %c0_63, %c0_64, %c0_65] : memref<2x6x2x16x32x128xf32, #tpu.memory_space<vmem>>, vector<1x1x1x16x32x128xf32>
      %54 = vector.shape_cast %53 : vector<1x1x1x16x32x128xf32> to vector<16x32x128xf32>
      %55 = vector.shape_cast %52 : vector<16x32x128xf32> to vector<1x1x1x16x32x128xf32>
      tpu.vector_store %arg5[%c0_61, %c2, %c0_62, %c0_63, %c0_64, %c0_65], %55 {strides = array<i32>} : memref<2x6x2x16x32x128xf32, #tpu.memory_space<vmem>>, vector<1x1x1x16x32x128xf32>,
      %cst_66 = arith.constant 4.000000e+00 : f32
      %56 = vector.broadcast %cst_66 : f32 to vector<16x32x128xf32>
      %57 = arith.mulf %50, %56 : vector<16x32x128xf32>
      %c0_67 = arith.constant 0 : index
      %c2_68 = arith.constant 2 : index
      %c1_69 = arith.constant 1 : index
      %c0_70 = arith.constant 0 : index
      %c0_71 = arith.constant 0 : index
      %c0_72 = arith.constant 0 : index
      %58 = vector.load %arg5[%c0_67, %c2_68, %c1_69, %c0_70, %c0_71, %c0_72] : memref<2x6x2x16x32x128xf32, #tpu.memory_space<vmem>>, vector<1x1x1x16x32x128xf32>
      %59 = vector.shape_cast %58 : vector<1x1x1x16x32x128xf32> to vector<16x32x128xf32>
      %60 = vector.shape_cast %57 : vector<16x32x128xf32> to vector<1x1x1x16x32x128xf32>
      tpu.vector_store %arg5[%c0_67, %c2_68, %c1_69, %c0_70, %c0_71, %c0_72], %60 {strides = array<i32>} : memref<2x6x2x16x32x128xf32, #tpu.memory_space<vmem>>, vector<1x1x1x16x32x128xf32>,
      %61 = arith.mulf %50, %50 : vector<16x32x128xf32>
      %62 = arith.mulf %61, %50 : vector<16x32x128xf32>
      %cst_73 = arith.constant 8.000000e+00 : f32
      %63 = vector.broadcast %cst_73 : f32 to vector<16x32x128xf32>
      %64 = arith.mulf %62, %63 : vector<16x32x128xf32>
      %65 = arith.addf %50, %64 : vector<16x32x128xf32>
      %cst_74 = arith.constant 2.000000e+00 : f32
      %66 = vector.broadcast %cst_74 : f32 to vector<16x32x128xf32>
      %67 = arith.mulf %65, %66 : vector<16x32x128xf32>
      %c0_75 = arith.constant 0 : index
      %c3 = arith.constant 3 : index
      %c0_76 = arith.constant 0 : index
      %c0_77 = arith.constant 0 : index
      %c0_78 = arith.constant 0 : index
      %c0_79 = arith.constant 0 : index
      %68 = vector.load %arg5[%c0_75, %c3, %c0_76, %c0_77, %c0_78, %c0_79] : memref<2x6x2x16x32x128xf32, #tpu.memory_space<vmem>>, vector<1x1x1x16x32x128xf32>
      %69 = vector.shape_cast %68 : vector<1x1x1x16x32x128xf32> to vector<16x32x128xf32>
      %70 = vector.shape_cast %67 : vector<16x32x128xf32> to vector<1x1x1x16x32x128xf32>
      tpu.vector_store %arg5[%c0_75, %c3, %c0_76, %c0_77, %c0_78, %c0_79], %70 {strides = array<i32>} : memref<2x6x2x16x32x128xf32, #tpu.memory_space<vmem>>, vector<1x1x1x16x32x128xf32>,
      %cst_80 = arith.constant 4.000000e+00 : f32
      %71 = vector.broadcast %cst_80 : f32 to vector<16x32x128xf32>
      %72 = arith.mulf %65, %71 : vector<16x32x128xf32>
      %c0_81 = arith.constant 0 : index
      %c3_82 = arith.constant 3 : index
      %c1_83 = arith.constant 1 : index
      %c0_84 = arith.constant 0 : index
      %c0_85 = arith.constant 0 : index
      %c0_86 = arith.constant 0 : index
      %73 = vector.load %arg5[%c0_81, %c3_82, %c1_83, %c0_84, %c0_85, %c0_86] : memref<2x6x2x16x32x128xf32, #tpu.memory_space<vmem>>, vector<1x1x1x16x32x128xf32>
      %74 = vector.shape_cast %73 : vector<1x1x1x16x32x128xf32> to vector<16x32x128xf32>
      %75 = vector.shape_cast %72 : vector<16x32x128xf32> to vector<1x1x1x16x32x128xf32>
      tpu.vector_store %arg5[%c0_81, %c3_82, %c1_83, %c0_84, %c0_85, %c0_86], %75 {strides = array<i32>} : memref<2x6x2x16x32x128xf32, #tpu.memory_space<vmem>>, vector<1x1x1x16x32x128xf32>,
      %76 = arith.mulf %65, %65 : vector<16x32x128xf32>
      %77 = arith.mulf %76, %65 : vector<16x32x128xf32>
      %cst_87 = arith.constant 8.000000e+00 : f32
      %78 = vector.broadcast %cst_87 : f32 to vector<16x32x128xf32>
      %79 = arith.mulf %77, %78 : vector<16x32x128xf32>
      %80 = arith.addf %65, %79 : vector<16x32x128xf32>
      %cst_88 = arith.constant 2.000000e+00 : f32
      %81 = vector.broadcast %cst_88 : f32 to vector<16x32x128xf32>
      %82 = arith.mulf %80, %81 : vector<16x32x128xf32>
      %c0_89 = arith.constant 0 : index
      %c4 = arith.constant 4 : index
      %c0_90 = arith.constant 0 : index
      %c0_91 = arith.constant 0 : index
      %c0_92 = arith.constant 0 : index
      %c0_93 = arith.constant 0 : index
      %83 = vector.load %arg5[%c0_89, %c4, %c0_90, %c0_91, %c0_92, %c0_93] : memref<2x6x2x16x32x128xf32, #tpu.memory_space<vmem>>, vector<1x1x1x16x32x128xf32>
      %84 = vector.shape_cast %83 : vector<1x1x1x16x32x128xf32> to vector<16x32x128xf32>
      %85 = vector.shape_cast %82 : vector<16x32x128xf32> to vector<1x1x1x16x32x128xf32>
      tpu.vector_store %arg5[%c0_89, %c4, %c0_90, %c0_91, %c0_92, %c0_93], %85 {strides = array<i32>} : memref<2x6x2x16x32x128xf32, #tpu.memory_space<vmem>>, vector<1x1x1x16x32x128xf32>,
      %cst_94 = arith.constant 4.000000e+00 : f32
      %86 = vector.broadcast %cst_94 : f32 to vector<16x32x128xf32>
      %87 = arith.mulf %80, %86 : vector<16x32x128xf32>
      %c0_95 = arith.constant 0 : index
      %c4_96 = arith.constant 4 : index
      %c1_97 = arith.constant 1 : index
      %c0_98 = arith.constant 0 : index
      %c0_99 = arith.constant 0 : index
      %c0_100 = arith.constant 0 : index
      %88 = vector.load %arg5[%c0_95, %c4_96, %c1_97, %c0_98, %c0_99, %c0_100] : memref<2x6x2x16x32x128xf32, #tpu.memory_space<vmem>>, vector<1x1x1x16x32x128xf32>
      %89 = vector.shape_cast %88 : vector<1x1x1x16x32x128xf32> to vector<16x32x128xf32>
      %90 = vector.shape_cast %87 : vector<16x32x128xf32> to vector<1x1x1x16x32x128xf32>
      tpu.vector_store %arg5[%c0_95, %c4_96, %c1_97, %c0_98, %c0_99, %c0_100], %90 {strides = array<i32>} : memref<2x6x2x16x32x128xf32, #tpu.memory_space<vmem>>, vector<1x1x1x16x32x128xf32>,
      %91 = arith.mulf %80, %80 : vector<16x32x128xf32>
      %92 = arith.mulf %91, %80 : vector<16x32x128xf32>
      %cst_101 = arith.constant 8.000000e+00 : f32
      %93 = vector.broadcast %cst_101 : f32 to vector<16x32x128xf32>
      %94 = arith.mulf %92, %93 : vector<16x32x128xf32>
      %95 = arith.addf %80, %94 : vector<16x32x128xf32>
      %cst_102 = arith.constant 2.000000e+00 : f32
      %96 = vector.broadcast %cst_102 : f32 to vector<16x32x128xf32>
      %97 = arith.mulf %95, %96 : vector<16x32x128xf32>
      %c0_103 = arith.constant 0 : index
      %c5 = arith.constant 5 : index
      %c0_104 = arith.constant 0 : index
      %c0_105 = arith.constant 0 : index
      %c0_106 = arith.constant 0 : index
      %c0_107 = arith.constant 0 : index
      %98 = vector.load %arg5[%c0_103, %c5, %c0_104, %c0_105, %c0_106, %c0_107] : memref<2x6x2x16x32x128xf32, #tpu.memory_space<vmem>>, vector<1x1x1x16x32x128xf32>
      %99 = vector.shape_cast %98 : vector<1x1x1x16x32x128xf32> to vector<16x32x128xf32>
      %100 = vector.shape_cast %97 : vector<16x32x128xf32> to vector<1x1x1x16x32x128xf32>
      tpu.vector_store %arg5[%c0_103, %c5, %c0_104, %c0_105, %c0_106, %c0_107], %100 {strides = array<i32>} : memref<2x6x2x16x32x128xf32, #tpu.memory_space<vmem>>, vector<1x1x1x16x32x128xf32>,
      %cst_108 = arith.constant 4.000000e+00 : f32
      %101 = vector.broadcast %cst_108 : f32 to vector<16x32x128xf32>
      %102 = arith.mulf %95, %101 : vector<16x32x128xf32>
      %c0_109 = arith.constant 0 : index
      %c5_110 = arith.constant 5 : index
      %c1_111 = arith.constant 1 : index
      %c0_112 = arith.constant 0 : index
      %c0_113 = arith.constant 0 : index
      %c0_114 = arith.constant 0 : index
      %103 = vector.load %arg5[%c0_109, %c5_110, %c1_111, %c0_112, %c0_113, %c0_114] : memref<2x6x2x16x32x128xf32, #tpu.memory_space<vmem>>, vector<1x1x1x16x32x128xf32>
      %104 = vector.shape_cast %103 : vector<1x1x1x16x32x128xf32> to vector<16x32x128xf32>
      %105 = vector.shape_cast %102 : vector<16x32x128xf32> to vector<1x1x1x16x32x128xf32>
      tpu.vector_store %arg5[%c0_109, %c5_110, %c1_111, %c0_112, %c0_113, %c0_114], %105 {strides = array<i32>} : memref<2x6x2x16x32x128xf32, #tpu.memory_space<vmem>>, vector<1x1x1x16x32x128xf32>,
      %106 = arith.mulf %95, %95 : vector<16x32x128xf32>
      %107 = arith.mulf %106, %95 : vector<16x32x128xf32>
      %cst_115 = arith.constant 8.000000e+00 : f32
      %108 = vector.broadcast %cst_115 : f32 to vector<16x32x128xf32>
      %109 = arith.mulf %107, %108 : vector<16x32x128xf32>
      %110 = arith.addf %95, %109 : vector<16x32x128xf32>
      %111 = vector.shape_cast %110 : vector<16x32x128xf32> to vector<1x16x32x128xf32>
      %c0_116 = arith.constant 0 : index
      %112 = arith.index_cast %16 : i32 to index
      %c0_117 = arith.constant 0 : index
      %c0_118 = arith.constant 0 : index
      %c0_119 = arith.constant 0 : index
      %113 = vector.load %arg3[%c0_116, %112, %c0_117, %c0_118, %c0_119] : memref<1x8x16x32x128xf32, #tpu.memory_space<vmem>>, vector<1x1x16x32x128xf32>
      %114 = vector.shape_cast %113 : vector<1x1x16x32x128xf32> to vector<1x16x32x128xf32>
      %115 = vector.shape_cast %111 : vector<1x16x32x128xf32> to vector<1x1x16x32x128xf32>
      tpu.vector_store %arg3[%c0_116, %112, %c0_117, %c0_118, %c0_119], %115 {strides = array<i32>} : memref<1x8x16x32x128xf32, #tpu.memory_space<vmem>>, vector<1x1x16x32x128xf32>,
      %116 = arith.index_cast %arg0 : i32 to index
      %117 = arith.index_cast %16 : i32 to index
      %118 = memref.load %arg1[%116, %117] : memref<4x8xi32, #tpu.memory_space<smem>>
      %c0_i32_120 = arith.constant 0 : i32
      %c0_i32_121 = arith.constant 0 : i32
      %c0_i32_122 = arith.constant 0 : i32
      %c0_i32_123 = arith.constant 0 : i32
      %c0_i32_124 = arith.constant 0 : i32
      %c0_i32_125 = arith.constant 0 : i32
      %c0_i32_126 = arith.constant 0 : i32
      %119 = tpu.memref_slice %arg5[%c0_i32_120, %c0_i32_122, %c0_i32_123, %c0_i32_124, %c0_i32_125, %c0_i32_126] : memref<2x6x2x16x32x128xf32, #tpu.memory_space<vmem>> -> memref<1x6x2x16x32x128xf32, #tpu.memory_space<vmem>>
      %120 = tpu.memref_squeeze %119 : memref<1x6x2x16x32x128xf32, #tpu.memory_space<vmem>> -> memref<6x2x16x32x128xf32, #tpu.memory_space<vmem>>
      %c0_i32_127 = arith.constant 0 : i32
      %c0_i32_128 = arith.constant 0 : i32
      %c0_i32_129 = arith.constant 0 : i32
      %c0_i32_130 = arith.constant 0 : i32
      %c0_i32_131 = arith.constant 0 : i32
      %121 = tpu.memref_slice %arg4[%118, %c0_i32_127, %c0_i32_128, %c0_i32_129, %c0_i32_130, %c0_i32_131] : memref<48x6x2x16x32x128xf32, #tpu.memory_space<any>> -> memref<1x6x2x16x32x128xf32, #tpu.memory_space<any>>
      %122 = tpu.memref_squeeze %121 : memref<1x6x2x16x32x128xf32, #tpu.memory_space<any>> -> memref<6x2x16x32x128xf32, #tpu.memory_space<any>>
      %123 = tpu.memref_slice %arg6[%c0_i32_121] : memref<2x!tpu.dma_semaphore, #tpu.memory_space<semaphore_mem>> -> memref<1x!tpu.dma_semaphore, #tpu.memory_space<semaphore_mem>>
      %124 = tpu.memref_squeeze %123 : memref<1x!tpu.dma_semaphore, #tpu.memory_space<semaphore_mem>> -> memref<!tpu.dma_semaphore, #tpu.memory_space<semaphore_mem>>
      tpu.enqueue_dma source(%120 : memref<6x2x16x32x128xf32, #tpu.memory_space<vmem>>) target(%122 : memref<6x2x16x32x128xf32, #tpu.memory_space<any>>) target_semaphore(%124 : memref<!tpu.dma_semaphore, #tpu.memory_space<semaphore_mem>>)
      %c2_i32_132 = arith.constant 2 : i32
      %125 = arith.muli %14, %c2_i32_132 : i32
      %c1_i32_133 = arith.constant 1 : i32
      %126 = arith.addi %125, %c1_i32_133 : i32
      %c1_i32_134 = arith.constant 1 : i32
      %127 = arith.cmpi sge, %14, %c1_i32_134 : i32
      %128 = arith.extui %127 : i1 to i32
      %c0_i32_135 = arith.constant 0 : i32
      %129 = arith.cmpi ne, %128, %c0_i32_135 : i32
      scf.if %129 {
        %c1_i32_243 = arith.constant 1 : i32
        %c0_i32_244 = arith.constant 0 : i32
        %c1_i32_245 = arith.constant 1 : i32
        %c0_i32_246 = arith.constant 0 : i32
        %c0_i32_247 = arith.constant 0 : i32
        %c0_i32_248 = arith.constant 0 : i32
        %c0_i32_249 = arith.constant 0 : i32
        %c0_i32_250 = arith.constant 0 : i32
        %235 = tpu.memref_slice %arg5[%c1_i32_243, %c0_i32_246, %c0_i32_247, %c0_i32_248, %c0_i32_249, %c0_i32_250] : memref<2x6x2x16x32x128xf32, #tpu.memory_space<vmem>> -> memref<1x6x2x16x32x128xf32, #tpu.memory_space<vmem>>
        %236 = tpu.memref_squeeze %235 : memref<1x6x2x16x32x128xf32, #tpu.memory_space<vmem>> -> memref<6x2x16x32x128xf32, #tpu.memory_space<vmem>>
        %c0_i32_251 = arith.constant 0 : i32
        %c0_i32_252 = arith.constant 0 : i32
        %c0_i32_253 = arith.constant 0 : i32
        %c0_i32_254 = arith.constant 0 : i32
        %c0_i32_255 = arith.constant 0 : i32
        %237 = tpu.memref_slice %arg4[%c0_i32_244, %c0_i32_251, %c0_i32_252, %c0_i32_253, %c0_i32_254, %c0_i32_255] : memref<48x6x2x16x32x128xf32, #tpu.memory_space<any>> -> memref<1x6x2x16x32x128xf32, #tpu.memory_space<any>>
        %238 = tpu.memref_squeeze %237 : memref<1x6x2x16x32x128xf32, #tpu.memory_space<any>> -> memref<6x2x16x32x128xf32, #tpu.memory_space<any>>
        %239 = tpu.memref_slice %arg6[%c1_i32_245] : memref<2x!tpu.dma_semaphore, #tpu.memory_space<semaphore_mem>> -> memref<1x!tpu.dma_semaphore, #tpu.memory_space<semaphore_mem>>
        %240 = tpu.memref_squeeze %239 : memref<1x!tpu.dma_semaphore, #tpu.memory_space<semaphore_mem>> -> memref<!tpu.dma_semaphore, #tpu.memory_space<semaphore_mem>>
        tpu.wait_dma2 semaphore(%240 : memref<!tpu.dma_semaphore, #tpu.memory_space<semaphore_mem>>) src(%236 : memref<6x2x16x32x128xf32, #tpu.memory_space<vmem>>) dst(%238 : memref<6x2x16x32x128xf32, #tpu.memory_space<any>>)
      } else {
      }
      %cst_136 = arith.constant 1.000000e+00 : f32
      %130 = vector.broadcast %cst_136 : f32 to vector<16x32x128xf32>
      %cst_137 = arith.constant 2.000000e+00 : f32
      %131 = vector.broadcast %cst_137 : f32 to vector<16x32x128xf32>
      %132 = arith.mulf %130, %131 : vector<16x32x128xf32>
      %c1_138 = arith.constant 1 : index
      %c0_139 = arith.constant 0 : index
      %c0_140 = arith.constant 0 : index
      %c0_141 = arith.constant 0 : index
      %c0_142 = arith.constant 0 : index
      %c0_143 = arith.constant 0 : index
      %133 = vector.load %arg5[%c1_138, %c0_139, %c0_140, %c0_141, %c0_142, %c0_143] : memref<2x6x2x16x32x128xf32, #tpu.memory_space<vmem>>, vector<1x1x1x16x32x128xf32>
      %134 = vector.shape_cast %133 : vector<1x1x1x16x32x128xf32> to vector<16x32x128xf32>
      %135 = vector.shape_cast %132 : vector<16x32x128xf32> to vector<1x1x1x16x32x128xf32>
      tpu.vector_store %arg5[%c1_138, %c0_139, %c0_140, %c0_141, %c0_142, %c0_143], %135 {strides = array<i32>} : memref<2x6x2x16x32x128xf32, #tpu.memory_space<vmem>>, vector<1x1x1x16x32x128xf32>,
      %cst_144 = arith.constant 4.000000e+00 : f32
      %136 = vector.broadcast %cst_144 : f32 to vector<16x32x128xf32>
      %137 = arith.mulf %130, %136 : vector<16x32x128xf32>
      %c1_145 = arith.constant 1 : index
      %c0_146 = arith.constant 0 : index
      %c1_147 = arith.constant 1 : index
      %c0_148 = arith.constant 0 : index
      %c0_149 = arith.constant 0 : index
      %c0_150 = arith.constant 0 : index
      %138 = vector.load %arg5[%c1_145, %c0_146, %c1_147, %c0_148, %c0_149, %c0_150] : memref<2x6x2x16x32x128xf32, #tpu.memory_space<vmem>>, vector<1x1x1x16x32x128xf32>
      %139 = vector.shape_cast %138 : vector<1x1x1x16x32x128xf32> to vector<16x32x128xf32>
      %140 = vector.shape_cast %137 : vector<16x32x128xf32> to vector<1x1x1x16x32x128xf32>
      tpu.vector_store %arg5[%c1_145, %c0_146, %c1_147, %c0_148, %c0_149, %c0_150], %140 {strides = array<i32>} : memref<2x6x2x16x32x128xf32, #tpu.memory_space<vmem>>, vector<1x1x1x16x32x128xf32>,
      %141 = arith.mulf %130, %130 : vector<16x32x128xf32>
      %142 = arith.mulf %141, %130 : vector<16x32x128xf32>
      %cst_151 = arith.constant 8.000000e+00 : f32
      %143 = vector.broadcast %cst_151 : f32 to vector<16x32x128xf32>
      %144 = arith.mulf %142, %143 : vector<16x32x128xf32>
      %145 = arith.addf %130, %144 : vector<16x32x128xf32>
      %cst_152 = arith.constant 2.000000e+00 : f32
      %146 = vector.broadcast %cst_152 : f32 to vector<16x32x128xf32>
      %147 = arith.mulf %145, %146 : vector<16x32x128xf32>
      %c1_153 = arith.constant 1 : index
      %c1_154 = arith.constant 1 : index
      %c0_155 = arith.constant 0 : index
      %c0_156 = arith.constant 0 : index
      %c0_157 = arith.constant 0 : index
      %c0_158 = arith.constant 0 : index
      %148 = vector.load %arg5[%c1_153, %c1_154, %c0_155, %c0_156, %c0_157, %c0_158] : memref<2x6x2x16x32x128xf32, #tpu.memory_space<vmem>>, vector<1x1x1x16x32x128xf32>
      %149 = vector.shape_cast %148 : vector<1x1x1x16x32x128xf32> to vector<16x32x128xf32>
      %150 = vector.shape_cast %147 : vector<16x32x128xf32> to vector<1x1x1x16x32x128xf32>
      tpu.vector_store %arg5[%c1_153, %c1_154, %c0_155, %c0_156, %c0_157, %c0_158], %150 {strides = array<i32>} : memref<2x6x2x16x32x128xf32, #tpu.memory_space<vmem>>, vector<1x1x1x16x32x128xf32>,
      %cst_159 = arith.constant 4.000000e+00 : f32
      %151 = vector.broadcast %cst_159 : f32 to vector<16x32x128xf32>
      %152 = arith.mulf %145, %151 : vector<16x32x128xf32>
      %c1_160 = arith.constant 1 : index
      %c1_161 = arith.constant 1 : index
      %c1_162 = arith.constant 1 : index
      %c0_163 = arith.constant 0 : index
      %c0_164 = arith.constant 0 : index
      %c0_165 = arith.constant 0 : index
      %153 = vector.load %arg5[%c1_160, %c1_161, %c1_162, %c0_163, %c0_164, %c0_165] : memref<2x6x2x16x32x128xf32, #tpu.memory_space<vmem>>, vector<1x1x1x16x32x128xf32>
      %154 = vector.shape_cast %153 : vector<1x1x1x16x32x128xf32> to vector<16x32x128xf32>
      %155 = vector.shape_cast %152 : vector<16x32x128xf32> to vector<1x1x1x16x32x128xf32>
      tpu.vector_store %arg5[%c1_160, %c1_161, %c1_162, %c0_163, %c0_164, %c0_165], %155 {strides = array<i32>} : memref<2x6x2x16x32x128xf32, #tpu.memory_space<vmem>>, vector<1x1x1x16x32x128xf32>,
      %156 = arith.mulf %145, %145 : vector<16x32x128xf32>
      %157 = arith.mulf %156, %145 : vector<16x32x128xf32>
      %cst_166 = arith.constant 8.000000e+00 : f32
      %158 = vector.broadcast %cst_166 : f32 to vector<16x32x128xf32>
      %159 = arith.mulf %157, %158 : vector<16x32x128xf32>
      %160 = arith.addf %145, %159 : vector<16x32x128xf32>
      %cst_167 = arith.constant 2.000000e+00 : f32
      %161 = vector.broadcast %cst_167 : f32 to vector<16x32x128xf32>
      %162 = arith.mulf %160, %161 : vector<16x32x128xf32>
      %c1_168 = arith.constant 1 : index
      %c2_169 = arith.constant 2 : index
      %c0_170 = arith.constant 0 : index
      %c0_171 = arith.constant 0 : index
      %c0_172 = arith.constant 0 : index
      %c0_173 = arith.constant 0 : index
      %163 = vector.load %arg5[%c1_168, %c2_169, %c0_170, %c0_171, %c0_172, %c0_173] : memref<2x6x2x16x32x128xf32, #tpu.memory_space<vmem>>, vector<1x1x1x16x32x128xf32>
      %164 = vector.shape_cast %163 : vector<1x1x1x16x32x128xf32> to vector<16x32x128xf32>
      %165 = vector.shape_cast %162 : vector<16x32x128xf32> to vector<1x1x1x16x32x128xf32>
      tpu.vector_store %arg5[%c1_168, %c2_169, %c0_170, %c0_171, %c0_172, %c0_173], %165 {strides = array<i32>} : memref<2x6x2x16x32x128xf32, #tpu.memory_space<vmem>>, vector<1x1x1x16x32x128xf32>,
      %cst_174 = arith.constant 4.000000e+00 : f32
      %166 = vector.broadcast %cst_174 : f32 to vector<16x32x128xf32>
      %167 = arith.mulf %160, %166 : vector<16x32x128xf32>
      %c1_175 = arith.constant 1 : index
      %c2_176 = arith.constant 2 : index
      %c1_177 = arith.constant 1 : index
      %c0_178 = arith.constant 0 : index
      %c0_179 = arith.constant 0 : index
      %c0_180 = arith.constant 0 : index
      %168 = vector.load %arg5[%c1_175, %c2_176, %c1_177, %c0_178, %c0_179, %c0_180] : memref<2x6x2x16x32x128xf32, #tpu.memory_space<vmem>>, vector<1x1x1x16x32x128xf32>
      %169 = vector.shape_cast %168 : vector<1x1x1x16x32x128xf32> to vector<16x32x128xf32>
      %170 = vector.shape_cast %167 : vector<16x32x128xf32> to vector<1x1x1x16x32x128xf32>
      tpu.vector_store %arg5[%c1_175, %c2_176, %c1_177, %c0_178, %c0_179, %c0_180], %170 {strides = array<i32>} : memref<2x6x2x16x32x128xf32, #tpu.memory_space<vmem>>, vector<1x1x1x16x32x128xf32>,
      %171 = arith.mulf %160, %160 : vector<16x32x128xf32>
      %172 = arith.mulf %171, %160 : vector<16x32x128xf32>
      %cst_181 = arith.constant 8.000000e+00 : f32
      %173 = vector.broadcast %cst_181 : f32 to vector<16x32x128xf32>
      %174 = arith.mulf %172, %173 : vector<16x32x128xf32>
      %175 = arith.addf %160, %174 : vector<16x32x128xf32>
      %cst_182 = arith.constant 2.000000e+00 : f32
      %176 = vector.broadcast %cst_182 : f32 to vector<16x32x128xf32>
      %177 = arith.mulf %175, %176 : vector<16x32x128xf32>
      %c1_183 = arith.constant 1 : index
      %c3_184 = arith.constant 3 : index
      %c0_185 = arith.constant 0 : index
      %c0_186 = arith.constant 0 : index
      %c0_187 = arith.constant 0 : index
      %c0_188 = arith.constant 0 : index
      %178 = vector.load %arg5[%c1_183, %c3_184, %c0_185, %c0_186, %c0_187, %c0_188] : memref<2x6x2x16x32x128xf32, #tpu.memory_space<vmem>>, vector<1x1x1x16x32x128xf32>
      %179 = vector.shape_cast %178 : vector<1x1x1x16x32x128xf32> to vector<16x32x128xf32>
      %180 = vector.shape_cast %177 : vector<16x32x128xf32> to vector<1x1x1x16x32x128xf32>
      tpu.vector_store %arg5[%c1_183, %c3_184, %c0_185, %c0_186, %c0_187, %c0_188], %180 {strides = array<i32>} : memref<2x6x2x16x32x128xf32, #tpu.memory_space<vmem>>, vector<1x1x1x16x32x128xf32>,
      %cst_189 = arith.constant 4.000000e+00 : f32
      %181 = vector.broadcast %cst_189 : f32 to vector<16x32x128xf32>
      %182 = arith.mulf %175, %181 : vector<16x32x128xf32>
      %c1_190 = arith.constant 1 : index
      %c3_191 = arith.constant 3 : index
      %c1_192 = arith.constant 1 : index
      %c0_193 = arith.constant 0 : index
      %c0_194 = arith.constant 0 : index
      %c0_195 = arith.constant 0 : index
      %183 = vector.load %arg5[%c1_190, %c3_191, %c1_192, %c0_193, %c0_194, %c0_195] : memref<2x6x2x16x32x128xf32, #tpu.memory_space<vmem>>, vector<1x1x1x16x32x128xf32>
      %184 = vector.shape_cast %183 : vector<1x1x1x16x32x128xf32> to vector<16x32x128xf32>
      %185 = vector.shape_cast %182 : vector<16x32x128xf32> to vector<1x1x1x16x32x128xf32>
      tpu.vector_store %arg5[%c1_190, %c3_191, %c1_192, %c0_193, %c0_194, %c0_195], %185 {strides = array<i32>} : memref<2x6x2x16x32x128xf32, #tpu.memory_space<vmem>>, vector<1x1x1x16x32x128xf32>,
      %186 = arith.mulf %175, %175 : vector<16x32x128xf32>
      %187 = arith.mulf %186, %175 : vector<16x32x128xf32>
      %cst_196 = arith.constant 8.000000e+00 : f32
      %188 = vector.broadcast %cst_196 : f32 to vector<16x32x128xf32>
      %189 = arith.mulf %187, %188 : vector<16x32x128xf32>
      %190 = arith.addf %175, %189 : vector<16x32x128xf32>
      %cst_197 = arith.constant 2.000000e+00 : f32
      %191 = vector.broadcast %cst_197 : f32 to vector<16x32x128xf32>
      %192 = arith.mulf %190, %191 : vector<16x32x128xf32>
      %c1_198 = arith.constant 1 : index
      %c4_199 = arith.constant 4 : index
      %c0_200 = arith.constant 0 : index
      %c0_201 = arith.constant 0 : index
      %c0_202 = arith.constant 0 : index
      %c0_203 = arith.constant 0 : index
      %193 = vector.load %arg5[%c1_198, %c4_199, %c0_200, %c0_201, %c0_202, %c0_203] : memref<2x6x2x16x32x128xf32, #tpu.memory_space<vmem>>, vector<1x1x1x16x32x128xf32>
      %194 = vector.shape_cast %193 : vector<1x1x1x16x32x128xf32> to vector<16x32x128xf32>
      %195 = vector.shape_cast %192 : vector<16x32x128xf32> to vector<1x1x1x16x32x128xf32>
      tpu.vector_store %arg5[%c1_198, %c4_199, %c0_200, %c0_201, %c0_202, %c0_203], %195 {strides = array<i32>} : memref<2x6x2x16x32x128xf32, #tpu.memory_space<vmem>>, vector<1x1x1x16x32x128xf32>,
      %cst_204 = arith.constant 4.000000e+00 : f32
      %196 = vector.broadcast %cst_204 : f32 to vector<16x32x128xf32>
      %197 = arith.mulf %190, %196 : vector<16x32x128xf32>
      %c1_205 = arith.constant 1 : index
      %c4_206 = arith.constant 4 : index
      %c1_207 = arith.constant 1 : index
      %c0_208 = arith.constant 0 : index
      %c0_209 = arith.constant 0 : index
      %c0_210 = arith.constant 0 : index
      %198 = vector.load %arg5[%c1_205, %c4_206, %c1_207, %c0_208, %c0_209, %c0_210] : memref<2x6x2x16x32x128xf32, #tpu.memory_space<vmem>>, vector<1x1x1x16x32x128xf32>
      %199 = vector.shape_cast %198 : vector<1x1x1x16x32x128xf32> to vector<16x32x128xf32>
      %200 = vector.shape_cast %197 : vector<16x32x128xf32> to vector<1x1x1x16x32x128xf32>
      tpu.vector_store %arg5[%c1_205, %c4_206, %c1_207, %c0_208, %c0_209, %c0_210], %200 {strides = array<i32>} : memref<2x6x2x16x32x128xf32, #tpu.memory_space<vmem>>, vector<1x1x1x16x32x128xf32>,
      %201 = arith.mulf %190, %190 : vector<16x32x128xf32>
      %202 = arith.mulf %201, %190 : vector<16x32x128xf32>
      %cst_211 = arith.constant 8.000000e+00 : f32
      %203 = vector.broadcast %cst_211 : f32 to vector<16x32x128xf32>
      %204 = arith.mulf %202, %203 : vector<16x32x128xf32>
      %205 = arith.addf %190, %204 : vector<16x32x128xf32>
      %cst_212 = arith.constant 2.000000e+00 : f32
      %206 = vector.broadcast %cst_212 : f32 to vector<16x32x128xf32>
      %207 = arith.mulf %205, %206 : vector<16x32x128xf32>
      %c1_213 = arith.constant 1 : index
      %c5_214 = arith.constant 5 : index
      %c0_215 = arith.constant 0 : index
      %c0_216 = arith.constant 0 : index
      %c0_217 = arith.constant 0 : index
      %c0_218 = arith.constant 0 : index
      %208 = vector.load %arg5[%c1_213, %c5_214, %c0_215, %c0_216, %c0_217, %c0_218] : memref<2x6x2x16x32x128xf32, #tpu.memory_space<vmem>>, vector<1x1x1x16x32x128xf32>
      %209 = vector.shape_cast %208 : vector<1x1x1x16x32x128xf32> to vector<16x32x128xf32>
      %210 = vector.shape_cast %207 : vector<16x32x128xf32> to vector<1x1x1x16x32x128xf32>
      tpu.vector_store %arg5[%c1_213, %c5_214, %c0_215, %c0_216, %c0_217, %c0_218], %210 {strides = array<i32>} : memref<2x6x2x16x32x128xf32, #tpu.memory_space<vmem>>, vector<1x1x1x16x32x128xf32>,
      %cst_219 = arith.constant 4.000000e+00 : f32
      %211 = vector.broadcast %cst_219 : f32 to vector<16x32x128xf32>
      %212 = arith.mulf %205, %211 : vector<16x32x128xf32>
      %c1_220 = arith.constant 1 : index
      %c5_221 = arith.constant 5 : index
      %c1_222 = arith.constant 1 : index
      %c0_223 = arith.constant 0 : index
      %c0_224 = arith.constant 0 : index
      %c0_225 = arith.constant 0 : index
      %213 = vector.load %arg5[%c1_220, %c5_221, %c1_222, %c0_223, %c0_224, %c0_225] : memref<2x6x2x16x32x128xf32, #tpu.memory_space<vmem>>, vector<1x1x1x16x32x128xf32>
      %214 = vector.shape_cast %213 : vector<1x1x1x16x32x128xf32> to vector<16x32x128xf32>
      %215 = vector.shape_cast %212 : vector<16x32x128xf32> to vector<1x1x1x16x32x128xf32>
      tpu.vector_store %arg5[%c1_220, %c5_221, %c1_222, %c0_223, %c0_224, %c0_225], %215 {strides = array<i32>} : memref<2x6x2x16x32x128xf32, #tpu.memory_space<vmem>>, vector<1x1x1x16x32x128xf32>,
      %216 = arith.mulf %205, %205 : vector<16x32x128xf32>
      %217 = arith.mulf %216, %205 : vector<16x32x128xf32>
      %cst_226 = arith.constant 8.000000e+00 : f32
      %218 = vector.broadcast %cst_226 : f32 to vector<16x32x128xf32>
      %219 = arith.mulf %217, %218 : vector<16x32x128xf32>
      %220 = arith.addf %205, %219 : vector<16x32x128xf32>
      %221 = vector.shape_cast %220 : vector<16x32x128xf32> to vector<1x16x32x128xf32>
      %c0_227 = arith.constant 0 : index
      %222 = arith.index_cast %126 : i32 to index
      %c0_228 = arith.constant 0 : index
      %c0_229 = arith.constant 0 : index
      %c0_230 = arith.constant 0 : index
      %223 = vector.load %arg3[%c0_227, %222, %c0_228, %c0_229, %c0_230] : memref<1x8x16x32x128xf32, #tpu.memory_space<vmem>>, vector<1x1x16x32x128xf32>
      %224 = vector.shape_cast %223 : vector<1x1x16x32x128xf32> to vector<1x16x32x128xf32>
      %225 = vector.shape_cast %221 : vector<1x16x32x128xf32> to vector<1x1x16x32x128xf32>
      tpu.vector_store %arg3[%c0_227, %222, %c0_228, %c0_229, %c0_230], %225 {strides = array<i32>} : memref<1x8x16x32x128xf32, #tpu.memory_space<vmem>>, vector<1x1x16x32x128xf32>,
      %226 = arith.index_cast %arg0 : i32 to index
      %227 = arith.index_cast %126 : i32 to index
      %228 = memref.load %arg1[%226, %227] : memref<4x8xi32, #tpu.memory_space<smem>>
      %c1_i32_231 = arith.constant 1 : i32
      %c1_i32_232 = arith.constant 1 : i32
      %c0_i32_233 = arith.constant 0 : i32
      %c0_i32_234 = arith.constant 0 : i32
      %c0_i32_235 = arith.constant 0 : i32
      %c0_i32_236 = arith.constant 0 : i32
      %c0_i32_237 = arith.constant 0 : i32
      %229 = tpu.memref_slice %arg5[%c1_i32_231, %c0_i32_233, %c0_i32_234, %c0_i32_235, %c0_i32_236, %c0_i32_237] : memref<2x6x2x16x32x128xf32, #tpu.memory_space<vmem>> -> memref<1x6x2x16x32x128xf32, #tpu.memory_space<vmem>>
      %230 = tpu.memref_squeeze %229 : memref<1x6x2x16x32x128xf32, #tpu.memory_space<vmem>> -> memref<6x2x16x32x128xf32, #tpu.memory_space<vmem>>
      %c0_i32_238 = arith.constant 0 : i32
      %c0_i32_239 = arith.constant 0 : i32
      %c0_i32_240 = arith.constant 0 : i32
      %c0_i32_241 = arith.constant 0 : i32
      %c0_i32_242 = arith.constant 0 : i32
      %231 = tpu.memref_slice %arg4[%228, %c0_i32_238, %c0_i32_239, %c0_i32_240, %c0_i32_241, %c0_i32_242] : memref<48x6x2x16x32x128xf32, #tpu.memory_space<any>> -> memref<1x6x2x16x32x128xf32, #tpu.memory_space<any>>
      %232 = tpu.memref_squeeze %231 : memref<1x6x2x16x32x128xf32, #tpu.memory_space<any>> -> memref<6x2x16x32x128xf32, #tpu.memory_space<any>>
      %233 = tpu.memref_slice %arg6[%c1_i32_232] : memref<2x!tpu.dma_semaphore, #tpu.memory_space<semaphore_mem>> -> memref<1x!tpu.dma_semaphore, #tpu.memory_space<semaphore_mem>>
      %234 = tpu.memref_squeeze %233 : memref<1x!tpu.dma_semaphore, #tpu.memory_space<semaphore_mem>> -> memref<!tpu.dma_semaphore, #tpu.memory_space<semaphore_mem>>
      tpu.enqueue_dma source(%230 : memref<6x2x16x32x128xf32, #tpu.memory_space<vmem>>) target(%232 : memref<6x2x16x32x128xf32, #tpu.memory_space<any>>) target_semaphore(%234 : memref<!tpu.dma_semaphore, #tpu.memory_space<semaphore_mem>>)
    }
    %c4_i32_0 = arith.constant 4 : i32
    %c0_i32_1 = arith.constant 0 : i32
    %c0_i32_2 = arith.constant 0 : i32
    %c0_i32_3 = arith.constant 0 : i32
    %c0_i32_4 = arith.constant 0 : i32
    %c0_i32_5 = arith.constant 0 : i32
    %c0_i32_6 = arith.constant 0 : i32
    %c0_i32_7 = arith.constant 0 : i32
    %c0_i32_8 = arith.constant 0 : i32
    %1 = tpu.memref_slice %arg5[%c0_i32_1, %c0_i32_4, %c0_i32_5, %c0_i32_6, %c0_i32_7, %c0_i32_8] : memref<2x6x2x16x32x128xf32, #tpu.memory_space<vmem>> -> memref<1x6x2x16x32x128xf32, #tpu.memory_space<vmem>>
    %2 = tpu.memref_squeeze %1 : memref<1x6x2x16x32x128xf32, #tpu.memory_space<vmem>> -> memref<6x2x16x32x128xf32, #tpu.memory_space<vmem>>
    %c0_i32_9 = arith.constant 0 : i32
    %c0_i32_10 = arith.constant 0 : i32
    %c0_i32_11 = arith.constant 0 : i32
    %c0_i32_12 = arith.constant 0 : i32
    %c0_i32_13 = arith.constant 0 : i32
    %3 = tpu.memref_slice %arg4[%c0_i32_2, %c0_i32_9, %c0_i32_10, %c0_i32_11, %c0_i32_12, %c0_i32_13] : memref<48x6x2x16x32x128xf32, #tpu.memory_space<any>> -> memref<1x6x2x16x32x128xf32, #tpu.memory_space<any>>
    %4 = tpu.memref_squeeze %3 : memref<1x6x2x16x32x128xf32, #tpu.memory_space<any>> -> memref<6x2x16x32x128xf32, #tpu.memory_space<any>>
    %5 = tpu.memref_slice %arg6[%c0_i32_3] : memref<2x!tpu.dma_semaphore, #tpu.memory_space<semaphore_mem>> -> memref<1x!tpu.dma_semaphore, #tpu.memory_space<semaphore_mem>>
    %6 = tpu.memref_squeeze %5 : memref<1x!tpu.dma_semaphore, #tpu.memory_space<semaphore_mem>> -> memref<!tpu.dma_semaphore, #tpu.memory_space<semaphore_mem>>
    tpu.wait_dma2 semaphore(%6 : memref<!tpu.dma_semaphore, #tpu.memory_space<semaphore_mem>>) src(%2 : memref<6x2x16x32x128xf32, #tpu.memory_space<vmem>>) dst(%4 : memref<6x2x16x32x128xf32, #tpu.memory_space<any>>)
    %c1_i32_14 = arith.constant 1 : i32
    %c0_i32_15 = arith.constant 0 : i32
    %c1_i32_16 = arith.constant 1 : i32
    %c0_i32_17 = arith.constant 0 : i32
    %c0_i32_18 = arith.constant 0 : i32
    %c0_i32_19 = arith.constant 0 : i32
    %c0_i32_20 = arith.constant 0 : i32
    %c0_i32_21 = arith.constant 0 : i32
    %7 = tpu.memref_slice %arg5[%c1_i32_14, %c0_i32_17, %c0_i32_18, %c0_i32_19, %c0_i32_20, %c0_i32_21] : memref<2x6x2x16x32x128xf32, #tpu.memory_space<vmem>> -> memref<1x6x2x16x32x128xf32, #tpu.memory_space<vmem>>
    %8 = tpu.memref_squeeze %7 : memref<1x6x2x16x32x128xf32, #tpu.memory_space<vmem>> -> memref<6x2x16x32x128xf32, #tpu.memory_space<vmem>>
    %c0_i32_22 = arith.constant 0 : i32
    %c0_i32_23 = arith.constant 0 : i32
    %c0_i32_24 = arith.constant 0 : i32
    %c0_i32_25 = arith.constant 0 : i32
    %c0_i32_26 = arith.constant 0 : i32
    %9 = tpu.memref_slice %arg4[%c0_i32_15, %c0_i32_22, %c0_i32_23, %c0_i32_24, %c0_i32_25, %c0_i32_26] : memref<48x6x2x16x32x128xf32, #tpu.memory_space<any>> -> memref<1x6x2x16x32x128xf32, #tpu.memory_space<any>>
    %10 = tpu.memref_squeeze %9 : memref<1x6x2x16x32x128xf32, #tpu.memory_space<any>> -> memref<6x2x16x32x128xf32, #tpu.memory_space<any>>
    %11 = tpu.memref_slice %arg6[%c1_i32_16] : memref<2x!tpu.dma_semaphore, #tpu.memory_space<semaphore_mem>> -> memref<1x!tpu.dma_semaphore, #tpu.memory_space<semaphore_mem>>
    %12 = tpu.memref_squeeze %11 : memref<1x!tpu.dma_semaphore, #tpu.memory_space<semaphore_mem>> -> memref<!tpu.dma_semaphore, #tpu.memory_space<semaphore_mem>>
    tpu.wait_dma2 semaphore(%12 : memref<!tpu.dma_semaphore, #tpu.memory_space<semaphore_mem>>) src(%8 : memref<6x2x16x32x128xf32, #tpu.memory_space<vmem>>) dst(%10 : memref<6x2x16x32x128xf32, #tpu.memory_space<any>>)
    return
  }
  func.func @transform_1(%arg0: i32, %arg1: memref<4x8xi32, #tpu.memory_space<smem>>) -> (i32, i32, i32, i32, i32) {
    %c0_i32 = arith.constant 0 : i32
    %c0_i32_0 = arith.constant 0 : i32
    %c0_i32_1 = arith.constant 0 : i32
    %c0_i32_2 = arith.constant 0 : i32
    %c0_i32_3 = arith.constant 0 : i32
    return %arg0, %c0_i32, %c0_i32_0, %c0_i32_1, %c0_i32_2 : i32, i32, i32, i32, i32
  }
}

</mosaic_0001>

<llo_original>
// kernel: _attention_page_example.1
$region0: #{_attention_page_example.1}
  #allocation0 [shape = 'u32[]', space=smem, size = 0x4, offset = 0x4, fixed_abs, tag = 'smem constant byte address 0x4 - core index']
  #allocation1 [shape = 'u32[144,128]{1,0:T(1,128)}', space=vmem, size = 0x12000, scoped, tag = 'internal scratch']
  #allocation2 [shape = 'f32[2,6,2,16,32,128]{5,4,3,2,1,0:T(8,128)}', space=vmem, size = 0x600000, scoped, tag = 'scratch operand']
  #allocation3 [shape = 's32[2]{0}', space=sflag, size = 0x8, scoped, tag = 'scratch operand']
  #allocation4 [shape = 's32[1]{0}', space=sflag, size = 0x4, scoped, tag = 'scoped memory for _attention_page_example.1']
  #allocation5 [shape = 'u8[2048]{0}', space=smem, size = 0x800, scoped, tag = 'prefetched SMEM operand 0']
  #allocation6 [shape = 's32[]', space=sflag, size = 0x4, offset = 0, fixed_abs, tag = 'sflag constant byte address 0x0 - dummy sync flag']
  #allocation7 [shape = 's32[]', space=sflag, size = 0x4, offset = 0, fixed_abs, tag = 'sflag constant byte address 0x0 - dummy sync flag']
  #allocation8 [shape = 'u32[]', space=smem, size = 0x4, offset = 0x44, fixed_abs, tag = 'smem constant byte address 0x44 - assertion arg 0']
  #allocation9 [shape = 'u32[]', space=smem, size = 0x4, offset = 0x48, fixed_abs, tag = 'smem constant byte address 0x48 - assertion arg 1']
  #allocation10 [shape = 's32[]', space=sflag, size = 0x4, offset = 0, fixed_abs, tag = 'sflag constant byte address 0x0 - dummy sync flag']
  #allocation11 [shape = 's32[]', space=sflag, size = 0x4, offset = 0, fixed_abs, tag = 'sflag constant byte address 0x0 - dummy sync flag']
  %s0 = inlined_call_operand.hbm [shape: s32[4,8], index: 0, kind: input, shape index: {}]
  %s1 = inlined_call_operand.hbm [shape: f32[48,6,2,16,32,128], index: 1, kind: input, shape index: {}, may-alias: {1,3}]
  %s2 = inlined_call_operand.vmem [shape: f32[4,8,16,32,128], index: 2, kind: output, shape index: {0}]
  %s3 = inlined_call_operand.hbm [shape: f32[48,6,2,16,32,128], index: 3, kind: output, shape index: {1}, may-alias: {1,3}]
  %4 = xla_tuple %s2, %s3
  %s5 = sld [smem:[#allocation0]]
  $region48: #{_attention_page_example.1} parent=0
    _
  %s7 = ssub.s32 1, %s5
  %s8 = scalar_select 0, %s7, %s5
  %10 = dma.hbm_to_smem %s0, 64, [#allocation5], [#allocation4]
  %11 = dma.done [#allocation4], 64
  %12 = sfence
  loop: start=0, step=1, limit=5
  $region2: #{_attention_page_example.1} parent=0 // loop_pre_header
    _
  $region3: #{_attention_page_example.1} parent=0 // loop_header
    %s14 = sphi 0, %s18
    %p15 = scmp.ge.s32.totalorder %s14, 5
    %s23 = sphi 0, %s25
    %s26 = sphi 0, %s23
    %s36 = sphi 0, %s26
  $region4: #{_attention_page_example.1} parent=0 // loop_header_branch
    %17 = sbr.rel (%p15) target = $region8
  $region5: #{_attention_page_example.1} parent=0 // loop_body
    %s19 = ssub.s32 %s14, 1
    %s20 = sadd.s32 %s14, 1
    %s21 = ssub.s32 %s14, %s20
    %p22 = scmp.eq.s32.totalorder %s21, 0
    %s24 = sadd.s32 %s23, 1
    %s25 = scalar_select %p22, %s23, %s24
    %p27 = pneg %p22
    %p28 = scmp.eq.s32.totalorder %s14, 3
    %p29 = por %p27, %p28
    %p30 = scmp.ne.s32.totalorder %s23, %s26
    %p31 = scmp.eq.s32.totalorder %s14, 0
    %p32 = por %p30, %p31
    %p33 = scmp.ne.s32.totalorder %s23, %s26
    %p34 = scmp.eq.s32.totalorder %s19, 3
    %p35 = por %p33, %p34
    %p37 = scmp.ne.s32.totalorder %s26, %s36
    %p38 = scmp.eq.s32.totalorder %s19, 0
    %p39 = por %p37, %p38
    %p40 = scmp.lt.s32.totalorder %s14, 4
    // Predicated region
    $region9: #{_attention_page_example.1} parent=5 // pred_check
      %p41 = pneg %p40
    $region10: #{_attention_page_example.1} parent=5 // pred_check_branch
      %43 = sbr.rel (%p41) target = $region12
    $region11: #{_attention_page_example.1} parent=5 // pred_region
      %p44 = pneg %p32
      %p45 = pneg %p29
      %p46 = scmp.lt.s32.totalorder %s14, 3
      %s47 = scalar_select %p46, %s14, 3
      %s48 = smul.addr %s47, 512
      %s49 = smul.addr %s48, 8
      %s50 = scalar_lea.vmem %s2, %s49
      %p51 = scmp.lt.s32.totalorder %s14, 3
      %s52 = scalar_select %p51, %s14, 3
      %s53 = smul.addr %s52, 512
      %s54 = smul.addr %s53, 8
      %s55 = scalar_lea.vmem %s2, %s54
      loop: start=0, step=1, limit=4
      $region13: #{_attention_page_example.1} parent=11 // loop_pre_header
        _
      $region14: #{_attention_page_example.1} parent=11 // loop_header
        %s57 = sphi 0, %s61
        %p58 = scmp.ge.s32.totalorder %s57, 4
      $region15: #{_attention_page_example.1} parent=11 // loop_header_branch
        %60 = sbr.rel (%p58) target = $region19
      $region16: #{_attention_page_example.1} parent=11 // loop_body
        %s62 = smul.u32 %s57, 2
        %p63 = scmp.ge.s32.totalorder %s57, 1
        // Predicated region
        $region20: #{_attention_page_example.1} parent=16 // pred_check
          %p64 = pneg %p63
        $region21: #{_attention_page_example.1} parent=16 // pred_check_branch
          %66 = sbr.rel (%p64) target = $region23
        $region22: #{_attention_page_example.1} parent=16 // pred_region
          %s67 = smul.u32 6, 2
          %s68 = smul.u32 %s67, 16
          %s69 = smul.u32 %s68, 32
          %s70 = smul.u32 %s69, 1
          %s71 = sshll.u32 %s70, 4
          %72 = dma.done [#allocation3], %s71
        $region23: #{_attention_page_example.1} parent=16 // pred_fallthru
          _
        %73 = vst [vmem:[#allocation2] sm:$0xff] 2.0
        %74 = vst [vmem:[#allocation2 + $0x8] sm:$0xff] 2.0
        %75 = vst [vmem:[#allocation2 + $0x10] sm:$0xff] 2.0
        %76 = vst [vmem:[#allocation2 + $0x18] sm:$0xff] 2.0
        %77 = vst [vmem:[#allocation2 + $0x20] sm:$0xff] 2.0
        %78 = vst [vmem:[#allocation2 + $0x28] sm:$0xff] 2.0
        %79 = vst [vmem:[#allocation2 + $0x30] sm:$0xff] 2.0
        %80 = vst [vmem:[#allocation2 + $0x38] sm:$0xff] 2.0
        %81 = vst [vmem:[#allocation2 + $0x40] sm:$0xff] 2.0
        %82 = vst [vmem:[#allocation2 + $0x48] sm:$0xff] 2.0
        %83 = vst [vmem:[#allocation2 + $0x50] sm:$0xff] 2.0
        %84 = vst [vmem:[#allocation2 + $0x58] sm:$0xff] 2.0
        %85 = vst [vmem:[#allocation2 + $0x60] sm:$0xff] 2.0
        %86 = vst [vmem:[#allocation2 + $0x68] sm:$0xff] 2.0
        %87 = vst [vmem:[#allocation2 + $0x70] sm:$0xff] 2.0
        %88 = vst [vmem:[#allocation2 + $0x78] sm:$0xff] 2.0
        %89 = vst [vmem:[#allocation2 + $0x80] sm:$0xff] 2.0
        %90 = vst [vmem:[#allocation2 + $0x88] sm:$0xff] 2.0
        %91 = vst [vmem:[#allocation2 + $0x90] sm:$0xff] 2.0
        %92 = vst [vmem:[#allocation2 + $0x98] sm:$0xff] 2.0
        %93 = vst [vmem:[#allocation2 + $0xa0] sm:$0xff] 2.0
        %94 = vst [vmem:[#allocation2 + $0xa8] sm:$0xff] 2.0
        %95 = vst [vmem:[#allocation2 + $0xb0] sm:$0xff] 2.0
        %96 = vst [vmem:[#allocation2 + $0xb8] sm:$0xff] 2.0
        %97 = vst [vmem:[#allocation2 + $0xc0] sm:$0xff] 2.0
        %98 = vst [vmem:[#allocation2 + $0xc8] sm:$0xff] 2.0
        %99 = vst [vmem:[#allocation2 + $0xd0] sm:$0xff] 2.0
        %100 = vst [vmem:[#allocation2 + $0xd8] sm:$0xff] 2.0
        %101 = vst [vmem:[#allocation2 + $0xe0] sm:$0xff] 2.0
        %102 = vst [vmem:[#allocation2 + $0xe8] sm:$0xff] 2.0
        %103 = vst [vmem:[#allocation2 + $0xf0] sm:$0xff] 2.0
        %104 = vst [vmem:[#allocation2 + $0xf8] sm:$0xff] 2.0
        %105 = vst [vmem:[#allocation2 + $0x100] sm:$0xff] 2.0
        %106 = vst [vmem:[#allocation2 + $0x108] sm:$0xff] 2.0
        %107 = vst [vmem:[#allocation2 + $0x110] sm:$0xff] 2.0
        %108 = vst [vmem:[#allocation2 + $0x118] sm:$0xff] 2.0
        %109 = vst [vmem:[#allocation2 + $0x120] sm:$0xff] 2.0
        %110 = vst [vmem:[#allocation2 + $0x128] sm:$0xff] 2.0
        %111 = vst [vmem:[#allocation2 + $0x130] sm:$0xff] 2.0
        %112 = vst [vmem:[#allocation2 + $0x138] sm:$0xff] 2.0
        %113 = vst [vmem:[#allocation2 + $0x140] sm:$0xff] 2.0
        %114 = vst [vmem:[#allocation2 + $0x148] sm:$0xff] 2.0
        %115 = vst [vmem:[#allocation2 + $0x150] sm:$0xff] 2.0
        %116 = vst [vmem:[#allocation2 + $0x158] sm:$0xff] 2.0
        %117 = vst [vmem:[#allocation2 + $0x160] sm:$0xff] 2.0
        %118 = vst [vmem:[#allocation2 + $0x168] sm:$0xff] 2.0
        %119 = vst [vmem:[#allocation2 + $0x170] sm:$0xff] 2.0
        %120 = vst [vmem:[#allocation2 + $0x178] sm:$0xff] 2.0
        %121 = vst [vmem:[#allocation2 + $0x180] sm:$0xff] 2.0
        %122 = vst [vmem:[#allocation2 + $0x188] sm:$0xff] 2.0
        %123 = vst [vmem:[#allocation2 + $0x190] sm:$0xff] 2.0
        %124 = vst [vmem:[#allocation2 + $0x198] sm:$0xff] 2.0
        %125 = vst [vmem:[#allocation2 + $0x1a0] sm:$0xff] 2.0
        %126 = vst [vmem:[#allocation2 + $0x1a8] sm:$0xff] 2.0
        %127 = vst [vmem:[#allocation2 + $0x1b0] sm:$0xff] 2.0
        %128 = vst [vmem:[#allocation2 + $0x1b8] sm:$0xff] 2.0
        %129 = vst [vmem:[#allocation2 + $0x1c0] sm:$0xff] 2.0
        %130 = vst [vmem:[#allocation2 + $0x1c8] sm:$0xff] 2.0
        %131 = vst [vmem:[#allocation2 + $0x1d0] sm:$0xff] 2.0
        %132 = vst [vmem:[#allocation2 + $0x1d8] sm:$0xff] 2.0
        %133 = vst [vmem:[#allocation2 + $0x1e0] sm:$0xff] 2.0
        %134 = vst [vmem:[#allocation2 + $0x1e8] sm:$0xff] 2.0
        %135 = vst [vmem:[#allocation2 + $0x1f0] sm:$0xff] 2.0
        %136 = vst [vmem:[#allocation2 + $0x1f8] sm:$0xff] 2.0
        %s137 = scalar_lea.vmem [#allocation2], 512
        %138 = vst [vmem:[%s137] sm:$0xff] 4.0
        %139 = vst [vmem:[%s137 + $0x8] sm:$0xff] 4.0
        %140 = vst [vmem:[%s137 + $0x10] sm:$0xff] 4.0
        %141 = vst [vmem:[%s137 + $0x18] sm:$0xff] 4.0
        %142 = vst [vmem:[%s137 + $0x20] sm:$0xff] 4.0
        %143 = vst [vmem:[%s137 + $0x28] sm:$0xff] 4.0
        %144 = vst [vmem:[%s137 + $0x30] sm:$0xff] 4.0
        %145 = vst [vmem:[%s137 + $0x38] sm:$0xff] 4.0
        %146 = vst [vmem:[%s137 + $0x40] sm:$0xff] 4.0
        %147 = vst [vmem:[%s137 + $0x48] sm:$0xff] 4.0
        %148 = vst [vmem:[%s137 + $0x50] sm:$0xff] 4.0
        %149 = vst [vmem:[%s137 + $0x58] sm:$0xff] 4.0
        %150 = vst [vmem:[%s137 + $0x60] sm:$0xff] 4.0
        %151 = vst [vmem:[%s137 + $0x68] sm:$0xff] 4.0
        %152 = vst [vmem:[%s137 + $0x70] sm:$0xff] 4.0
        %153 = vst [vmem:[%s137 + $0x78] sm:$0xff] 4.0
        %154 = vst [vmem:[%s137 + $0x80] sm:$0xff] 4.0
        %155 = vst [vmem:[%s137 + $0x88] sm:$0xff] 4.0
        %156 = vst [vmem:[%s137 + $0x90] sm:$0xff] 4.0
        %157 = vst [vmem:[%s137 + $0x98] sm:$0xff] 4.0
        %158 = vst [vmem:[%s137 + $0xa0] sm:$0xff] 4.0
        %159 = vst [vmem:[%s137 + $0xa8] sm:$0xff] 4.0
        %160 = vst [vmem:[%s137 + $0xb0] sm:$0xff] 4.0
        %161 = vst [vmem:[%s137 + $0xb8] sm:$0xff] 4.0
        %162 = vst [vmem:[%s137 + $0xc0] sm:$0xff] 4.0
        %163 = vst [vmem:[%s137 + $0xc8] sm:$0xff] 4.0
        %164 = vst [vmem:[%s137 + $0xd0] sm:$0xff] 4.0
        %165 = vst [vmem:[%s137 + $0xd8] sm:$0xff] 4.0
        %166 = vst [vmem:[%s137 + $0xe0] sm:$0xff] 4.0
        %167 = vst [vmem:[%s137 + $0xe8] sm:$0xff] 4.0
        %168 = vst [vmem:[%s137 + $0xf0] sm:$0xff] 4.0
        %169 = vst [vmem:[%s137 + $0xf8] sm:$0xff] 4.0
        %170 = vst [vmem:[%s137 + $0x100] sm:$0xff] 4.0
        %171 = vst [vmem:[%s137 + $0x108] sm:$0xff] 4.0
        %172 = vst [vmem:[%s137 + $0x110] sm:$0xff] 4.0
        %173 = vst [vmem:[%s137 + $0x118] sm:$0xff] 4.0
        %174 = vst [vmem:[%s137 + $0x120] sm:$0xff] 4.0
        %175 = vst [vmem:[%s137 + $0x128] sm:$0xff] 4.0
        %176 = vst [vmem:[%s137 + $0x130] sm:$0xff] 4.0
        %177 = vst [vmem:[%s137 + $0x138] sm:$0xff] 4.0
        %178 = vst [vmem:[%s137 + $0x140] sm:$0xff] 4.0
        %179 = vst [vmem:[%s137 + $0x148] sm:$0xff] 4.0
        %180 = vst [vmem:[%s137 + $0x150] sm:$0xff] 4.0
        %181 = vst [vmem:[%s137 + $0x158] sm:$0xff] 4.0
        %182 = vst [vmem:[%s137 + $0x160] sm:$0xff] 4.0
        %183 = vst [vmem:[%s137 + $0x168] sm:$0xff] 4.0
        %184 = vst [vmem:[%s137 + $0x170] sm:$0xff] 4.0
        %185 = vst [vmem:[%s137 + $0x178] sm:$0xff] 4.0
        %186 = vst [vmem:[%s137 + $0x180] sm:$0xff] 4.0
        %187 = vst [vmem:[%s137 + $0x188] sm:$0xff] 4.0
        %188 = vst [vmem:[%s137 + $0x190] sm:$0xff] 4.0
        %189 = vst [vmem:[%s137 + $0x198] sm:$0xff] 4.0
        %190 = vst [vmem:[%s137 + $0x1a0] sm:$0xff] 4.0
        %191 = vst [vmem:[%s137 + $0x1a8] sm:$0xff] 4.0
        %192 = vst [vmem:[%s137 + $0x1b0] sm:$0xff] 4.0
        %193 = vst [vmem:[%s137 + $0x1b8] sm:$0xff] 4.0
        %194 = vst [vmem:[%s137 + $0x1c0] sm:$0xff] 4.0
        %195 = vst [vmem:[%s137 + $0x1c8] sm:$0xff] 4.0
        %196 = vst [vmem:[%s137 + $0x1d0] sm:$0xff] 4.0
        %197 = vst [vmem:[%s137 + $0x1d8] sm:$0xff] 4.0
        %198 = vst [vmem:[%s137 + $0x1e0] sm:$0xff] 4.0
        %199 = vst [vmem:[%s137 + $0x1e8] sm:$0xff] 4.0
        %200 = vst [vmem:[%s137 + $0x1f0] sm:$0xff] 4.0
        %201 = vst [vmem:[%s137 + $0x1f8] sm:$0xff] 4.0
        %s202 = scalar_lea.vmem [#allocation2], 1024
        %203 = vst [vmem:[%s202] sm:$0xff] 18.0
        %204 = vst [vmem:[%s202 + $0x8] sm:$0xff] 18.0
        %205 = vst [vmem:[%s202 + $0x10] sm:$0xff] 18.0
        %206 = vst [vmem:[%s202 + $0x18] sm:$0xff] 18.0
        %207 = vst [vmem:[%s202 + $0x20] sm:$0xff] 18.0
        %208 = vst [vmem:[%s202 + $0x28] sm:$0xff] 18.0
        %209 = vst [vmem:[%s202 + $0x30] sm:$0xff] 18.0
        %210 = vst [vmem:[%s202 + $0x38] sm:$0xff] 18.0
        %211 = vst [vmem:[%s202 + $0x40] sm:$0xff] 18.0
        %212 = vst [vmem:[%s202 + $0x48] sm:$0xff] 18.0
        %213 = vst [vmem:[%s202 + $0x50] sm:$0xff] 18.0
        %214 = vst [vmem:[%s202 + $0x58] sm:$0xff] 18.0
        %215 = vst [vmem:[%s202 + $0x60] sm:$0xff] 18.0
        %216 = vst [vmem:[%s202 + $0x68] sm:$0xff] 18.0
        %217 = vst [vmem:[%s202 + $0x70] sm:$0xff] 18.0
        %218 = vst [vmem:[%s202 + $0x78] sm:$0xff] 18.0
        %219 = vst [vmem:[%s202 + $0x80] sm:$0xff] 18.0
        %220 = vst [vmem:[%s202 + $0x88] sm:$0xff] 18.0
        %221 = vst [vmem:[%s202 + $0x90] sm:$0xff] 18.0
        %222 = vst [vmem:[%s202 + $0x98] sm:$0xff] 18.0
        %223 = vst [vmem:[%s202 + $0xa0] sm:$0xff] 18.0
        %224 = vst [vmem:[%s202 + $0xa8] sm:$0xff] 18.0
        %225 = vst [vmem:[%s202 + $0xb0] sm:$0xff] 18.0
        %226 = vst [vmem:[%s202 + $0xb8] sm:$0xff] 18.0
        %227 = vst [vmem:[%s202 + $0xc0] sm:$0xff] 18.0
        %228 = vst [vmem:[%s202 + $0xc8] sm:$0xff] 18.0
        %229 = vst [vmem:[%s202 + $0xd0] sm:$0xff] 18.0
        %230 = vst [vmem:[%s202 + $0xd8] sm:$0xff] 18.0
        %231 = vst [vmem:[%s202 + $0xe0] sm:$0xff] 18.0
        %232 = vst [vmem:[%s202 + $0xe8] sm:$0xff] 18.0
        %233 = vst [vmem:[%s202 + $0xf0] sm:$0xff] 18.0
        %234 = vst [vmem:[%s202 + $0xf8] sm:$0xff] 18.0
        %235 = vst [vmem:[%s202 + $0x100] sm:$0xff] 18.0
        %236 = vst [vmem:[%s202 + $0x108] sm:$0xff] 18.0
        %237 = vst [vmem:[%s202 + $0x110] sm:$0xff] 18.0
        %238 = vst [vmem:[%s202 + $0x118] sm:$0xff] 18.0
        %239 = vst [vmem:[%s202 + $0x120] sm:$0xff] 18.0
        %240 = vst [vmem:[%s202 + $0x128] sm:$0xff] 18.0
        %241 = vst [vmem:[%s202 + $0x130] sm:$0xff] 18.0
        %242 = vst [vmem:[%s202 + $0x138] sm:$0xff] 18.0
        %243 = vst [vmem:[%s202 + $0x140] sm:$0xff] 18.0
        %244 = vst [vmem:[%s202 + $0x148] sm:$0xff] 18.0
        %245 = vst [vmem:[%s202 + $0x150] sm:$0xff] 18.0
        %246 = vst [vmem:[%s202 + $0x158] sm:$0xff] 18.0
        %247 = vst [vmem:[%s202 + $0x160] sm:$0xff] 18.0
        %248 = vst [vmem:[%s202 + $0x168] sm:$0xff] 18.0
        %249 = vst [vmem:[%s202 + $0x170] sm:$0xff] 18.0
        %250 = vst [vmem:[%s202 + $0x178] sm:$0xff] 18.0
        %251 = vst [vmem:[%s202 + $0x180] sm:$0xff] 18.0
        %252 = vst [vmem:[%s202 + $0x188] sm:$0xff] 18.0
        %253 = vst [vmem:[%s202 + $0x190] sm:$0xff] 18.0
        %254 = vst [vmem:[%s202 + $0x198] sm:$0xff] 18.0
        %255 = vst [vmem:[%s202 + $0x1a0] sm:$0xff] 18.0
        %256 = vst [vmem:[%s202 + $0x1a8] sm:$0xff] 18.0
        %257 = vst [vmem:[%s202 + $0x1b0] sm:$0xff] 18.0
        %258 = vst [vmem:[%s202 + $0x1b8] sm:$0xff] 18.0
        %259 = vst [vmem:[%s202 + $0x1c0] sm:$0xff] 18.0
        %260 = vst [vmem:[%s202 + $0x1c8] sm:$0xff] 18.0
        %261 = vst [vmem:[%s202 + $0x1d0] sm:$0xff] 18.0
        %262 = vst [vmem:[%s202 + $0x1d8] sm:$0xff] 18.0
        %263 = vst [vmem:[%s202 + $0x1e0] sm:$0xff] 18.0
        %264 = vst [vmem:[%s202 + $0x1e8] sm:$0xff] 18.0
        %265 = vst [vmem:[%s202 + $0x1f0] sm:$0xff] 18.0
        %266 = vst [vmem:[%s202 + $0x1f8] sm:$0xff] 18.0
        %s267 = scalar_lea.vmem [#allocation2], 1536
        %268 = vst [vmem:[%s267] sm:$0xff] 36.0
        %269 = vst [vmem:[%s267 + $0x8] sm:$0xff] 36.0
        %270 = vst [vmem:[%s267 + $0x10] sm:$0xff] 36.0
        %271 = vst [vmem:[%s267 + $0x18] sm:$0xff] 36.0
        %272 = vst [vmem:[%s267 + $0x20] sm:$0xff] 36.0
        %273 = vst [vmem:[%s267 + $0x28] sm:$0xff] 36.0
        %274 = vst [vmem:[%s267 + $0x30] sm:$0xff] 36.0
        %275 = vst [vmem:[%s267 + $0x38] sm:$0xff] 36.0
        %276 = vst [vmem:[%s267 + $0x40] sm:$0xff] 36.0
        %277 = vst [vmem:[%s267 + $0x48] sm:$0xff] 36.0
        %278 = vst [vmem:[%s267 + $0x50] sm:$0xff] 36.0
        %279 = vst [vmem:[%s267 + $0x58] sm:$0xff] 36.0
        %280 = vst [vmem:[%s267 + $0x60] sm:$0xff] 36.0
        %281 = vst [vmem:[%s267 + $0x68] sm:$0xff] 36.0
        %282 = vst [vmem:[%s267 + $0x70] sm:$0xff] 36.0
        %283 = vst [vmem:[%s267 + $0x78] sm:$0xff] 36.0
        %284 = vst [vmem:[%s267 + $0x80] sm:$0xff] 36.0
        %285 = vst [vmem:[%s267 + $0x88] sm:$0xff] 36.0
        %286 = vst [vmem:[%s267 + $0x90] sm:$0xff] 36.0
        %287 = vst [vmem:[%s267 + $0x98] sm:$0xff] 36.0
        %288 = vst [vmem:[%s267 + $0xa0] sm:$0xff] 36.0
        %289 = vst [vmem:[%s267 + $0xa8] sm:$0xff] 36.0
        %290 = vst [vmem:[%s267 + $0xb0] sm:$0xff] 36.0
        %291 = vst [vmem:[%s267 + $0xb8] sm:$0xff] 36.0
        %292 = vst [vmem:[%s267 + $0xc0] sm:$0xff] 36.0
        %293 = vst [vmem:[%s267 + $0xc8] sm:$0xff] 36.0
        %294 = vst [vmem:[%s267 + $0xd0] sm:$0xff] 36.0
        %295 = vst [vmem:[%s267 + $0xd8] sm:$0xff] 36.0
        %296 = vst [vmem:[%s267 + $0xe0] sm:$0xff] 36.0
        %297 = vst [vmem:[%s267 + $0xe8] sm:$0xff] 36.0
        %298 = vst [vmem:[%s267 + $0xf0] sm:$0xff] 36.0
        %299 = vst [vmem:[%s267 + $0xf8] sm:$0xff] 36.0
        %300 = vst [vmem:[%s267 + $0x100] sm:$0xff] 36.0
        %301 = vst [vmem:[%s267 + $0x108] sm:$0xff] 36.0
        %302 = vst [vmem:[%s267 + $0x110] sm:$0xff] 36.0
        %303 = vst [vmem:[%s267 + $0x118] sm:$0xff] 36.0
        %304 = vst [vmem:[%s267 + $0x120] sm:$0xff] 36.0
        %305 = vst [vmem:[%s267 + $0x128] sm:$0xff] 36.0
        %306 = vst [vmem:[%s267 + $0x130] sm:$0xff] 36.0
        %307 = vst [vmem:[%s267 + $0x138] sm:$0xff] 36.0
        %308 = vst [vmem:[%s267 + $0x140] sm:$0xff] 36.0
        %309 = vst [vmem:[%s267 + $0x148] sm:$0xff] 36.0
        %310 = vst [vmem:[%s267 + $0x150] sm:$0xff] 36.0
        %311 = vst [vmem:[%s267 + $0x158] sm:$0xff] 36.0
        %312 = vst [vmem:[%s267 + $0x160] sm:$0xff] 36.0
        %313 = vst [vmem:[%s267 + $0x168] sm:$0xff] 36.0
        %314 = vst [vmem:[%s267 + $0x170] sm:$0xff] 36.0
        %315 = vst [vmem:[%s267 + $0x178] sm:$0xff] 36.0
        %316 = vst [vmem:[%s267 + $0x180] sm:$0xff] 36.0
        %317 = vst [vmem:[%s267 + $0x188] sm:$0xff] 36.0
        %318 = vst [vmem:[%s267 + $0x190] sm:$0xff] 36.0
        %319 = vst [vmem:[%s267 + $0x198] sm:$0xff] 36.0
        %320 = vst [vmem:[%s267 + $0x1a0] sm:$0xff] 36.0
        %321 = vst [vmem:[%s267 + $0x1a8] sm:$0xff] 36.0
        %322 = vst [vmem:[%s267 + $0x1b0] sm:$0xff] 36.0
        %323 = vst [vmem:[%s267 + $0x1b8] sm:$0xff] 36.0
        %324 = vst [vmem:[%s267 + $0x1c0] sm:$0xff] 36.0
        %325 = vst [vmem:[%s267 + $0x1c8] sm:$0xff] 36.0
        %326 = vst [vmem:[%s267 + $0x1d0] sm:$0xff] 36.0
        %327 = vst [vmem:[%s267 + $0x1d8] sm:$0xff] 36.0
        %328 = vst [vmem:[%s267 + $0x1e0] sm:$0xff] 36.0
        %329 = vst [vmem:[%s267 + $0x1e8] sm:$0xff] 36.0
        %330 = vst [vmem:[%s267 + $0x1f0] sm:$0xff] 36.0
        %331 = vst [vmem:[%s267 + $0x1f8] sm:$0xff] 36.0
        %s332 = scalar_lea.vmem [#allocation2], 2048
        %333 = vst [vmem:[%s332] sm:$0xff] 11682.0
        %334 = vst [vmem:[%s332 + $0x8] sm:$0xff] 11682.0
        %335 = vst [vmem:[%s332 + $0x10] sm:$0xff] 11682.0
        %336 = vst [vmem:[%s332 + $0x18] sm:$0xff] 11682.0
        %337 = vst [vmem:[%s332 + $0x20] sm:$0xff] 11682.0
        %338 = vst [vmem:[%s332 + $0x28] sm:$0xff] 11682.0
        %339 = vst [vmem:[%s332 + $0x30] sm:$0xff] 11682.0
        %340 = vst [vmem:[%s332 + $0x38] sm:$0xff] 11682.0
        %341 = vst [vmem:[%s332 + $0x40] sm:$0xff] 11682.0
        %342 = vst [vmem:[%s332 + $0x48] sm:$0xff] 11682.0
        %343 = vst [vmem:[%s332 + $0x50] sm:$0xff] 11682.0
        %344 = vst [vmem:[%s332 + $0x58] sm:$0xff] 11682.0
        %345 = vst [vmem:[%s332 + $0x60] sm:$0xff] 11682.0
        %346 = vst [vmem:[%s332 + $0x68] sm:$0xff] 11682.0
        %347 = vst [vmem:[%s332 + $0x70] sm:$0xff] 11682.0
        %348 = vst [vmem:[%s332 + $0x78] sm:$0xff] 11682.0
        %349 = vst [vmem:[%s332 + $0x80] sm:$0xff] 11682.0
        %350 = vst [vmem:[%s332 + $0x88] sm:$0xff] 11682.0
        %351 = vst [vmem:[%s332 + $0x90] sm:$0xff] 11682.0
        %352 = vst [vmem:[%s332 + $0x98] sm:$0xff] 11682.0
        %353 = vst [vmem:[%s332 + $0xa0] sm:$0xff] 11682.0
        %354 = vst [vmem:[%s332 + $0xa8] sm:$0xff] 11682.0
        %355 = vst [vmem:[%s332 + $0xb0] sm:$0xff] 11682.0
        %356 = vst [vmem:[%s332 + $0xb8] sm:$0xff] 11682.0
        %357 = vst [vmem:[%s332 + $0xc0] sm:$0xff] 11682.0
        %358 = vst [vmem:[%s332 + $0xc8] sm:$0xff] 11682.0
        %359 = vst [vmem:[%s332 + $0xd0] sm:$0xff] 11682.0
        %360 = vst [vmem:[%s332 + $0xd8] sm:$0xff] 11682.0
        %361 = vst [vmem:[%s332 + $0xe0] sm:$0xff] 11682.0
        %362 = vst [vmem:[%s332 + $0xe8] sm:$0xff] 11682.0
        %363 = vst [vmem:[%s332 + $0xf0] sm:$0xff] 11682.0
        %364 = vst [vmem:[%s332 + $0xf8] sm:$0xff] 11682.0
        %365 = vst [vmem:[%s332 + $0x100] sm:$0xff] 11682.0
        %366 = vst [vmem:[%s332 + $0x108] sm:$0xff] 11682.0
        %367 = vst [vmem:[%s332 + $0x110] sm:$0xff] 11682.0
        %368 = vst [vmem:[%s332 + $0x118] sm:$0xff] 11682.0
        %369 = vst [vmem:[%s332 + $0x120] sm:$0xff] 11682.0
        %370 = vst [vmem:[%s332 + $0x128] sm:$0xff] 11682.0
        %371 = vst [vmem:[%s332 + $0x130] sm:$0xff] 11682.0
        %372 = vst [vmem:[%s332 + $0x138] sm:$0xff] 11682.0
        %373 = vst [vmem:[%s332 + $0x140] sm:$0xff] 11682.0
        %374 = vst [vmem:[%s332 + $0x148] sm:$0xff] 11682.0
        %375 = vst [vmem:[%s332 + $0x150] sm:$0xff] 11682.0
        %376 = vst [vmem:[%s332 + $0x158] sm:$0xff] 11682.0
        %377 = vst [vmem:[%s332 + $0x160] sm:$0xff] 11682.0
        %378 = vst [vmem:[%s332 + $0x168] sm:$0xff] 11682.0
        %379 = vst [vmem:[%s332 + $0x170] sm:$0xff] 11682.0
        %380 = vst [vmem:[%s332 + $0x178] sm:$0xff] 11682.0
        %381 = vst [vmem:[%s332 + $0x180] sm:$0xff] 11682.0
        %382 = vst [vmem:[%s332 + $0x188] sm:$0xff] 11682.0
        %383 = vst [vmem:[%s332 + $0x190] sm:$0xff] 11682.0
        %384 = vst [vmem:[%s332 + $0x198] sm:$0xff] 11682.0
        %385 = vst [vmem:[%s332 + $0x1a0] sm:$0xff] 11682.0
        %386 = vst [vmem:[%s332 + $0x1a8] sm:$0xff] 11682.0
        %387 = vst [vmem:[%s332 + $0x1b0] sm:$0xff] 11682.0
        %388 = vst [vmem:[%s332 + $0x1b8] sm:$0xff] 11682.0
        %389 = vst [vmem:[%s332 + $0x1c0] sm:$0xff] 11682.0
        %390 = vst [vmem:[%s332 + $0x1c8] sm:$0xff] 11682.0
        %391 = vst [vmem:[%s332 + $0x1d0] sm:$0xff] 11682.0
        %392 = vst [vmem:[%s332 + $0x1d8] sm:$0xff] 11682.0
        %393 = vst [vmem:[%s332 + $0x1e0] sm:$0xff] 11682.0
        %394 = vst [vmem:[%s332 + $0x1e8] sm:$0xff] 11682.0
        %395 = vst [vmem:[%s332 + $0x1f0] sm:$0xff] 11682.0
        %396 = vst [vmem:[%s332 + $0x1f8] sm:$0xff] 11682.0
        %s397 = scalar_lea.vmem [#allocation2], 2560
        %398 = vst [vmem:[%s397] sm:$0xff] 23364.0
        %399 = vst [vmem:[%s397 + $0x8] sm:$0xff] 23364.0
        %400 = vst [vmem:[%s397 + $0x10] sm:$0xff] 23364.0
        %401 = vst [vmem:[%s397 + $0x18] sm:$0xff] 23364.0
        %402 = vst [vmem:[%s397 + $0x20] sm:$0xff] 23364.0
        %403 = vst [vmem:[%s397 + $0x28] sm:$0xff] 23364.0
        %404 = vst [vmem:[%s397 + $0x30] sm:$0xff] 23364.0
        %405 = vst [vmem:[%s397 + $0x38] sm:$0xff] 23364.0
        %406 = vst [vmem:[%s397 + $0x40] sm:$0xff] 23364.0
        %407 = vst [vmem:[%s397 + $0x48] sm:$0xff] 23364.0
        %408 = vst [vmem:[%s397 + $0x50] sm:$0xff] 23364.0
        %409 = vst [vmem:[%s397 + $0x58] sm:$0xff] 23364.0
        %410 = vst [vmem:[%s397 + $0x60] sm:$0xff] 23364.0
        %411 = vst [vmem:[%s397 + $0x68] sm:$0xff] 23364.0
        %412 = vst [vmem:[%s397 + $0x70] sm:$0xff] 23364.0
        %413 = vst [vmem:[%s397 + $0x78] sm:$0xff] 23364.0
        %414 = vst [vmem:[%s397 + $0x80] sm:$0xff] 23364.0
        %415 = vst [vmem:[%s397 + $0x88] sm:$0xff] 23364.0
        %416 = vst [vmem:[%s397 + $0x90] sm:$0xff] 23364.0
        %417 = vst [vmem:[%s397 + $0x98] sm:$0xff] 23364.0
        %418 = vst [vmem:[%s397 + $0xa0] sm:$0xff] 23364.0
        %419 = vst [vmem:[%s397 + $0xa8] sm:$0xff] 23364.0
        %420 = vst [vmem:[%s397 + $0xb0] sm:$0xff] 23364.0
        %421 = vst [vmem:[%s397 + $0xb8] sm:$0xff] 23364.0
        %422 = vst [vmem:[%s397 + $0xc0] sm:$0xff] 23364.0
        %423 = vst [vmem:[%s397 + $0xc8] sm:$0xff] 23364.0
        %424 = vst [vmem:[%s397 + $0xd0] sm:$0xff] 23364.0
        %425 = vst [vmem:[%s397 + $0xd8] sm:$0xff] 23364.0
        %426 = vst [vmem:[%s397 + $0xe0] sm:$0xff] 23364.0
        %427 = vst [vmem:[%s397 + $0xe8] sm:$0xff] 23364.0
        %428 = vst [vmem:[%s397 + $0xf0] sm:$0xff] 23364.0
        %429 = vst [vmem:[%s397 + $0xf8] sm:$0xff] 23364.0
        %430 = vst [vmem:[%s397 + $0x100] sm:$0xff] 23364.0
        %431 = vst [vmem:[%s397 + $0x108] sm:$0xff] 23364.0
        %432 = vst [vmem:[%s397 + $0x110] sm:$0xff] 23364.0
        %433 = vst [vmem:[%s397 + $0x118] sm:$0xff] 23364.0
        %434 = vst [vmem:[%s397 + $0x120] sm:$0xff] 23364.0
        %435 = vst [vmem:[%s397 + $0x128] sm:$0xff] 23364.0
        %436 = vst [vmem:[%s397 + $0x130] sm:$0xff] 23364.0
        %437 = vst [vmem:[%s397 + $0x138] sm:$0xff] 23364.0
        %438 = vst [vmem:[%s397 + $0x140] sm:$0xff] 23364.0
        %439 = vst [vmem:[%s397 + $0x148] sm:$0xff] 23364.0
        %440 = vst [vmem:[%s397 + $0x150] sm:$0xff] 23364.0
        %441 = vst [vmem:[%s397 + $0x158] sm:$0xff] 23364.0
        %442 = vst [vmem:[%s397 + $0x160] sm:$0xff] 23364.0
        %443 = vst [vmem:[%s397 + $0x168] sm:$0xff] 23364.0
        %444 = vst [vmem:[%s397 + $0x170] sm:$0xff] 23364.0
        %445 = vst [vmem:[%s397 + $0x178] sm:$0xff] 23364.0
        %446 = vst [vmem:[%s397 + $0x180] sm:$0xff] 23364.0
        %447 = vst [vmem:[%s397 + $0x188] sm:$0xff] 23364.0
        %448 = vst [vmem:[%s397 + $0x190] sm:$0xff] 23364.0
        %449 = vst [vmem:[%s397 + $0x198] sm:$0xff] 23364.0
        %450 = vst [vmem:[%s397 + $0x1a0] sm:$0xff] 23364.0
        %451 = vst [vmem:[%s397 + $0x1a8] sm:$0xff] 23364.0
        %452 = vst [vmem:[%s397 + $0x1b0] sm:$0xff] 23364.0
        %453 = vst [vmem:[%s397 + $0x1b8] sm:$0xff] 23364.0
        %454 = vst [vmem:[%s397 + $0x1c0] sm:$0xff] 23364.0
        %455 = vst [vmem:[%s397 + $0x1c8] sm:$0xff] 23364.0
        %456 = vst [vmem:[%s397 + $0x1d0] sm:$0xff] 23364.0
        %457 = vst [vmem:[%s397 + $0x1d8] sm:$0xff] 23364.0
        %458 = vst [vmem:[%s397 + $0x1e0] sm:$0xff] 23364.0
        %459 = vst [vmem:[%s397 + $0x1e8] sm:$0xff] 23364.0
        %460 = vst [vmem:[%s397 + $0x1f0] sm:$0xff] 23364.0
        %461 = vst [vmem:[%s397 + $0x1f8] sm:$0xff] 23364.0
        %s462 = scalar_lea.vmem [#allocation2], 3072
        %463 = vst [vmem:[%s462] sm:$0xff] 3.1884645e+12
        %464 = vst [vmem:[%s462 + $0x8] sm:$0xff] 3.1884645e+12
        %465 = vst [vmem:[%s462 + $0x10] sm:$0xff] 3.1884645e+12
        %466 = vst [vmem:[%s462 + $0x18] sm:$0xff] 3.1884645e+12
        %467 = vst [vmem:[%s462 + $0x20] sm:$0xff] 3.1884645e+12
        %468 = vst [vmem:[%s462 + $0x28] sm:$0xff] 3.1884645e+12
        %469 = vst [vmem:[%s462 + $0x30] sm:$0xff] 3.1884645e+12
        %470 = vst [vmem:[%s462 + $0x38] sm:$0xff] 3.1884645e+12
        %471 = vst [vmem:[%s462 + $0x40] sm:$0xff] 3.1884645e+12
        %472 = vst [vmem:[%s462 + $0x48] sm:$0xff] 3.1884645e+12
        %473 = vst [vmem:[%s462 + $0x50] sm:$0xff] 3.1884645e+12
        %474 = vst [vmem:[%s462 + $0x58] sm:$0xff] 3.1884645e+12
        %475 = vst [vmem:[%s462 + $0x60] sm:$0xff] 3.1884645e+12
        %476 = vst [vmem:[%s462 + $0x68] sm:$0xff] 3.1884645e+12
        %477 = vst [vmem:[%s462 + $0x70] sm:$0xff] 3.1884645e+12
        %478 = vst [vmem:[%s462 + $0x78] sm:$0xff] 3.1884645e+12
        %479 = vst [vmem:[%s462 + $0x80] sm:$0xff] 3.1884645e+12
        %480 = vst [vmem:[%s462 + $0x88] sm:$0xff] 3.1884645e+12
        %481 = vst [vmem:[%s462 + $0x90] sm:$0xff] 3.1884645e+12
        %482 = vst [vmem:[%s462 + $0x98] sm:$0xff] 3.1884645e+12
        %483 = vst [vmem:[%s462 + $0xa0] sm:$0xff] 3.1884645e+12
        %484 = vst [vmem:[%s462 + $0xa8] sm:$0xff] 3.1884645e+12
        %485 = vst [vmem:[%s462 + $0xb0] sm:$0xff] 3.1884645e+12
        %486 = vst [vmem:[%s462 + $0xb8] sm:$0xff] 3.1884645e+12
        %487 = vst [vmem:[%s462 + $0xc0] sm:$0xff] 3.1884645e+12
        %488 = vst [vmem:[%s462 + $0xc8] sm:$0xff] 3.1884645e+12
        %489 = vst [vmem:[%s462 + $0xd0] sm:$0xff] 3.1884645e+12
        %490 = vst [vmem:[%s462 + $0xd8] sm:$0xff] 3.1884645e+12
        %491 = vst [vmem:[%s462 + $0xe0] sm:$0xff] 3.1884645e+12
        %492 = vst [vmem:[%s462 + $0xe8] sm:$0xff] 3.1884645e+12
        %493 = vst [vmem:[%s462 + $0xf0] sm:$0xff] 3.1884645e+12
        %494 = vst [vmem:[%s462 + $0xf8] sm:$0xff] 3.1884645e+12
        %495 = vst [vmem:[%s462 + $0x100] sm:$0xff] 3.1884645e+12
        %496 = vst [vmem:[%s462 + $0x108] sm:$0xff] 3.1884645e+12
        %497 = vst [vmem:[%s462 + $0x110] sm:$0xff] 3.1884645e+12
        %498 = vst [vmem:[%s462 + $0x118] sm:$0xff] 3.1884645e+12
        %499 = vst [vmem:[%s462 + $0x120] sm:$0xff] 3.1884645e+12
        %500 = vst [vmem:[%s462 + $0x128] sm:$0xff] 3.1884645e+12
        %501 = vst [vmem:[%s462 + $0x130] sm:$0xff] 3.1884645e+12
        %502 = vst [vmem:[%s462 + $0x138] sm:$0xff] 3.1884645e+12
        %503 = vst [vmem:[%s462 + $0x140] sm:$0xff] 3.1884645e+12
        %504 = vst [vmem:[%s462 + $0x148] sm:$0xff] 3.1884645e+12
        %505 = vst [vmem:[%s462 + $0x150] sm:$0xff] 3.1884645e+12
        %506 = vst [vmem:[%s462 + $0x158] sm:$0xff] 3.1884645e+12
        %507 = vst [vmem:[%s462 + $0x160] sm:$0xff] 3.1884645e+12
        %508 = vst [vmem:[%s462 + $0x168] sm:$0xff] 3.1884645e+12
        %509 = vst [vmem:[%s462 + $0x170] sm:$0xff] 3.1884645e+12
        %510 = vst [vmem:[%s462 + $0x178] sm:$0xff] 3.1884645e+12
        %511 = vst [vmem:[%s462 + $0x180] sm:$0xff] 3.1884645e+12
        %512 = vst [vmem:[%s462 + $0x188] sm:$0xff] 3.1884645e+12
        %513 = vst [vmem:[%s462 + $0x190] sm:$0xff] 3.1884645e+12
        %514 = vst [vmem:[%s462 + $0x198] sm:$0xff] 3.1884645e+12
        %515 = vst [vmem:[%s462 + $0x1a0] sm:$0xff] 3.1884645e+12
        %516 = vst [vmem:[%s462 + $0x1a8] sm:$0xff] 3.1884645e+12
        %517 = vst [vmem:[%s462 + $0x1b0] sm:$0xff] 3.1884645e+12
        %518 = vst [vmem:[%s462 + $0x1b8] sm:$0xff] 3.1884645e+12
        %519 = vst [vmem:[%s462 + $0x1c0] sm:$0xff] 3.1884645e+12
        %520 = vst [vmem:[%s462 + $0x1c8] sm:$0xff] 3.1884645e+12
        %521 = vst [vmem:[%s462 + $0x1d0] sm:$0xff] 3.1884645e+12
        %522 = vst [vmem:[%s462 + $0x1d8] sm:$0xff] 3.1884645e+12
        %523 = vst [vmem:[%s462 + $0x1e0] sm:$0xff] 3.1884645e+12
        %524 = vst [vmem:[%s462 + $0x1e8] sm:$0xff] 3.1884645e+12
        %525 = vst [vmem:[%s462 + $0x1f0] sm:$0xff] 3.1884645e+12
        %526 = vst [vmem:[%s462 + $0x1f8] sm:$0xff] 3.1884645e+12
        %s527 = scalar_lea.vmem [#allocation2], 3584
        %528 = vst [vmem:[%s527] sm:$0xff] 6.376929e+12
        %529 = vst [vmem:[%s527 + $0x8] sm:$0xff] 6.376929e+12
        %530 = vst [vmem:[%s527 + $0x10] sm:$0xff] 6.376929e+12
        %531 = vst [vmem:[%s527 + $0x18] sm:$0xff] 6.376929e+12
        %532 = vst [vmem:[%s527 + $0x20] sm:$0xff] 6.376929e+12
        %533 = vst [vmem:[%s527 + $0x28] sm:$0xff] 6.376929e+12
        %534 = vst [vmem:[%s527 + $0x30] sm:$0xff] 6.376929e+12
        %535 = vst [vmem:[%s527 + $0x38] sm:$0xff] 6.376929e+12
        %536 = vst [vmem:[%s527 + $0x40] sm:$0xff] 6.376929e+12
        %537 = vst [vmem:[%s527 + $0x48] sm:$0xff] 6.376929e+12
        %538 = vst [vmem:[%s527 + $0x50] sm:$0xff] 6.376929e+12
        %539 = vst [vmem:[%s527 + $0x58] sm:$0xff] 6.376929e+12
        %540 = vst [vmem:[%s527 + $0x60] sm:$0xff] 6.376929e+12
        %541 = vst [vmem:[%s527 + $0x68] sm:$0xff] 6.376929e+12
        %542 = vst [vmem:[%s527 + $0x70] sm:$0xff] 6.376929e+12
        %543 = vst [vmem:[%s527 + $0x78] sm:$0xff] 6.376929e+12
        %544 = vst [vmem:[%s527 + $0x80] sm:$0xff] 6.376929e+12
        %545 = vst [vmem:[%s527 + $0x88] sm:$0xff] 6.376929e+12
        %546 = vst [vmem:[%s527 + $0x90] sm:$0xff] 6.376929e+12
        %547 = vst [vmem:[%s527 + $0x98] sm:$0xff] 6.376929e+12
        %548 = vst [vmem:[%s527 + $0xa0] sm:$0xff] 6.376929e+12
        %549 = vst [vmem:[%s527 + $0xa8] sm:$0xff] 6.376929e+12
        %550 = vst [vmem:[%s527 + $0xb0] sm:$0xff] 6.376929e+12
        %551 = vst [vmem:[%s527 + $0xb8] sm:$0xff] 6.376929e+12
        %552 = vst [vmem:[%s527 + $0xc0] sm:$0xff] 6.376929e+12
        %553 = vst [vmem:[%s527 + $0xc8] sm:$0xff] 6.376929e+12
        %554 = vst [vmem:[%s527 + $0xd0] sm:$0xff] 6.376929e+12
        %555 = vst [vmem:[%s527 + $0xd8] sm:$0xff] 6.376929e+12
        %556 = vst [vmem:[%s527 + $0xe0] sm:$0xff] 6.376929e+12
        %557 = vst [vmem:[%s527 + $0xe8] sm:$0xff] 6.376929e+12
        %558 = vst [vmem:[%s527 + $0xf0] sm:$0xff] 6.376929e+12
        %559 = vst [vmem:[%s527 + $0xf8] sm:$0xff] 6.376929e+12
        %560 = vst [vmem:[%s527 + $0x100] sm:$0xff] 6.376929e+12
        %561 = vst [vmem:[%s527 + $0x108] sm:$0xff] 6.376929e+12
        %562 = vst [vmem:[%s527 + $0x110] sm:$0xff] 6.376929e+12
        %563 = vst [vmem:[%s527 + $0x118] sm:$0xff] 6.376929e+12
        %564 = vst [vmem:[%s527 + $0x120] sm:$0xff] 6.376929e+12
        %565 = vst [vmem:[%s527 + $0x128] sm:$0xff] 6.376929e+12
        %566 = vst [vmem:[%s527 + $0x130] sm:$0xff] 6.376929e+12
        %567 = vst [vmem:[%s527 + $0x138] sm:$0xff] 6.376929e+12
        %568 = vst [vmem:[%s527 + $0x140] sm:$0xff] 6.376929e+12
        %569 = vst [vmem:[%s527 + $0x148] sm:$0xff] 6.376929e+12
        %570 = vst [vmem:[%s527 + $0x150] sm:$0xff] 6.376929e+12
        %571 = vst [vmem:[%s527 + $0x158] sm:$0xff] 6.376929e+12
        %572 = vst [vmem:[%s527 + $0x160] sm:$0xff] 6.376929e+12
        %573 = vst [vmem:[%s527 + $0x168] sm:$0xff] 6.376929e+12
        %574 = vst [vmem:[%s527 + $0x170] sm:$0xff] 6.376929e+12
        %575 = vst [vmem:[%s527 + $0x178] sm:$0xff] 6.376929e+12
        %576 = vst [vmem:[%s527 + $0x180] sm:$0xff] 6.376929e+12
        %577 = vst [vmem:[%s527 + $0x188] sm:$0xff] 6.376929e+12
        %578 = vst [vmem:[%s527 + $0x190] sm:$0xff] 6.376929e+12
        %579 = vst [vmem:[%s527 + $0x198] sm:$0xff] 6.376929e+12
        %580 = vst [vmem:[%s527 + $0x1a0] sm:$0xff] 6.376929e+12
        %581 = vst [vmem:[%s527 + $0x1a8] sm:$0xff] 6.376929e+12
        %582 = vst [vmem:[%s527 + $0x1b0] sm:$0xff] 6.376929e+12
        %583 = vst [vmem:[%s527 + $0x1b8] sm:$0xff] 6.376929e+12
        %584 = vst [vmem:[%s527 + $0x1c0] sm:$0xff] 6.376929e+12
        %585 = vst [vmem:[%s527 + $0x1c8] sm:$0xff] 6.376929e+12
        %586 = vst [vmem:[%s527 + $0x1d0] sm:$0xff] 6.376929e+12
        %587 = vst [vmem:[%s527 + $0x1d8] sm:$0xff] 6.376929e+12
        %588 = vst [vmem:[%s527 + $0x1e0] sm:$0xff] 6.376929e+12
        %589 = vst [vmem:[%s527 + $0x1e8] sm:$0xff] 6.376929e+12
        %590 = vst [vmem:[%s527 + $0x1f0] sm:$0xff] 6.376929e+12
        %591 = vst [vmem:[%s527 + $0x1f8] sm:$0xff] 6.376929e+12
        %s592 = scalar_lea.vmem [#allocation2], 4096
        %593 = vst [vmem:[%s592] sm:$0xff] 6.482981e+37
        %594 = vst [vmem:[%s592 + $0x8] sm:$0xff] 6.482981e+37
        %595 = vst [vmem:[%s592 + $0x10] sm:$0xff] 6.482981e+37
        %596 = vst [vmem:[%s592 + $0x18] sm:$0xff] 6.482981e+37
        %597 = vst [vmem:[%s592 + $0x20] sm:$0xff] 6.482981e+37
        %598 = vst [vmem:[%s592 + $0x28] sm:$0xff] 6.482981e+37
        %599 = vst [vmem:[%s592 + $0x30] sm:$0xff] 6.482981e+37
        %600 = vst [vmem:[%s592 + $0x38] sm:$0xff] 6.482981e+37
        %601 = vst [vmem:[%s592 + $0x40] sm:$0xff] 6.482981e+37
        %602 = vst [vmem:[%s592 + $0x48] sm:$0xff] 6.482981e+37
        %603 = vst [vmem:[%s592 + $0x50] sm:$0xff] 6.482981e+37
        %604 = vst [vmem:[%s592 + $0x58] sm:$0xff] 6.482981e+37
        %605 = vst [vmem:[%s592 + $0x60] sm:$0xff] 6.482981e+37
        %606 = vst [vmem:[%s592 + $0x68] sm:$0xff] 6.482981e+37
        %607 = vst [vmem:[%s592 + $0x70] sm:$0xff] 6.482981e+37
        %608 = vst [vmem:[%s592 + $0x78] sm:$0xff] 6.482981e+37
        %609 = vst [vmem:[%s592 + $0x80] sm:$0xff] 6.482981e+37
        %610 = vst [vmem:[%s592 + $0x88] sm:$0xff] 6.482981e+37
        %611 = vst [vmem:[%s592 + $0x90] sm:$0xff] 6.482981e+37
        %612 = vst [vmem:[%s592 + $0x98] sm:$0xff] 6.482981e+37
        %613 = vst [vmem:[%s592 + $0xa0] sm:$0xff] 6.482981e+37
        %614 = vst [vmem:[%s592 + $0xa8] sm:$0xff] 6.482981e+37
        %615 = vst [vmem:[%s592 + $0xb0] sm:$0xff] 6.482981e+37
        %616 = vst [vmem:[%s592 + $0xb8] sm:$0xff] 6.482981e+37
        %617 = vst [vmem:[%s592 + $0xc0] sm:$0xff] 6.482981e+37
        %618 = vst [vmem:[%s592 + $0xc8] sm:$0xff] 6.482981e+37
        %619 = vst [vmem:[%s592 + $0xd0] sm:$0xff] 6.482981e+37
        %620 = vst [vmem:[%s592 + $0xd8] sm:$0xff] 6.482981e+37
        %621 = vst [vmem:[%s592 + $0xe0] sm:$0xff] 6.482981e+37
        %622 = vst [vmem:[%s592 + $0xe8] sm:$0xff] 6.482981e+37
        %623 = vst [vmem:[%s592 + $0xf0] sm:$0xff] 6.482981e+37
        %624 = vst [vmem:[%s592 + $0xf8] sm:$0xff] 6.482981e+37
        %625 = vst [vmem:[%s592 + $0x100] sm:$0xff] 6.482981e+37
        %626 = vst [vmem:[%s592 + $0x108] sm:$0xff] 6.482981e+37
        %627 = vst [vmem:[%s592 + $0x110] sm:$0xff] 6.482981e+37
        %628 = vst [vmem:[%s592 + $0x118] sm:$0xff] 6.482981e+37
        %629 = vst [vmem:[%s592 + $0x120] sm:$0xff] 6.482981e+37
        %630 = vst [vmem:[%s592 + $0x128] sm:$0xff] 6.482981e+37
        %631 = vst [vmem:[%s592 + $0x130] sm:$0xff] 6.482981e+37
        %632 = vst [vmem:[%s592 + $0x138] sm:$0xff] 6.482981e+37
        %633 = vst [vmem:[%s592 + $0x140] sm:$0xff] 6.482981e+37
        %634 = vst [vmem:[%s592 + $0x148] sm:$0xff] 6.482981e+37
        %635 = vst [vmem:[%s592 + $0x150] sm:$0xff] 6.482981e+37
        %636 = vst [vmem:[%s592 + $0x158] sm:$0xff] 6.482981e+37
        %637 = vst [vmem:[%s592 + $0x160] sm:$0xff] 6.482981e+37
        %638 = vst [vmem:[%s592 + $0x168] sm:$0xff] 6.482981e+37
        %639 = vst [vmem:[%s592 + $0x170] sm:$0xff] 6.482981e+37
        %640 = vst [vmem:[%s592 + $0x178] sm:$0xff] 6.482981e+37
        %641 = vst [vmem:[%s592 + $0x180] sm:$0xff] 6.482981e+37
        %642 = vst [vmem:[%s592 + $0x188] sm:$0xff] 6.482981e+37
        %643 = vst [vmem:[%s592 + $0x190] sm:$0xff] 6.482981e+37
        %644 = vst [vmem:[%s592 + $0x198] sm:$0xff] 6.482981e+37
        %645 = vst [vmem:[%s592 + $0x1a0] sm:$0xff] 6.482981e+37
        %646 = vst [vmem:[%s592 + $0x1a8] sm:$0xff] 6.482981e+37
        %647 = vst [vmem:[%s592 + $0x1b0] sm:$0xff] 6.482981e+37
        %648 = vst [vmem:[%s592 + $0x1b8] sm:$0xff] 6.482981e+37
        %649 = vst [vmem:[%s592 + $0x1c0] sm:$0xff] 6.482981e+37
        %650 = vst [vmem:[%s592 + $0x1c8] sm:$0xff] 6.482981e+37
        %651 = vst [vmem:[%s592 + $0x1d0] sm:$0xff] 6.482981e+37
        %652 = vst [vmem:[%s592 + $0x1d8] sm:$0xff] 6.482981e+37
        %653 = vst [vmem:[%s592 + $0x1e0] sm:$0xff] 6.482981e+37
        %654 = vst [vmem:[%s592 + $0x1e8] sm:$0xff] 6.482981e+37
        %655 = vst [vmem:[%s592 + $0x1f0] sm:$0xff] 6.482981e+37
        %656 = vst [vmem:[%s592 + $0x1f8] sm:$0xff] 6.482981e+37
        %s657 = scalar_lea.vmem [#allocation2], 4608
        %658 = vst [vmem:[%s657] sm:$0xff] 1.2965962e+38
        %659 = vst [vmem:[%s657 + $0x8] sm:$0xff] 1.2965962e+38
        %660 = vst [vmem:[%s657 + $0x10] sm:$0xff] 1.2965962e+38
        %661 = vst [vmem:[%s657 + $0x18] sm:$0xff] 1.2965962e+38
        %662 = vst [vmem:[%s657 + $0x20] sm:$0xff] 1.2965962e+38
        %663 = vst [vmem:[%s657 + $0x28] sm:$0xff] 1.2965962e+38
        %664 = vst [vmem:[%s657 + $0x30] sm:$0xff] 1.2965962e+38
        %665 = vst [vmem:[%s657 + $0x38] sm:$0xff] 1.2965962e+38
        %666 = vst [vmem:[%s657 + $0x40] sm:$0xff] 1.2965962e+38
        %667 = vst [vmem:[%s657 + $0x48] sm:$0xff] 1.2965962e+38
        %668 = vst [vmem:[%s657 + $0x50] sm:$0xff] 1.2965962e+38
        %669 = vst [vmem:[%s657 + $0x58] sm:$0xff] 1.2965962e+38
        %670 = vst [vmem:[%s657 + $0x60] sm:$0xff] 1.2965962e+38
        %671 = vst [vmem:[%s657 + $0x68] sm:$0xff] 1.2965962e+38
        %672 = vst [vmem:[%s657 + $0x70] sm:$0xff] 1.2965962e+38
        %673 = vst [vmem:[%s657 + $0x78] sm:$0xff] 1.2965962e+38
        %674 = vst [vmem:[%s657 + $0x80] sm:$0xff] 1.2965962e+38
        %675 = vst [vmem:[%s657 + $0x88] sm:$0xff] 1.2965962e+38
        %676 = vst [vmem:[%s657 + $0x90] sm:$0xff] 1.2965962e+38
        %677 = vst [vmem:[%s657 + $0x98] sm:$0xff] 1.2965962e+38
        %678 = vst [vmem:[%s657 + $0xa0] sm:$0xff] 1.2965962e+38
        %679 = vst [vmem:[%s657 + $0xa8] sm:$0xff] 1.2965962e+38
        %680 = vst [vmem:[%s657 + $0xb0] sm:$0xff] 1.2965962e+38
        %681 = vst [vmem:[%s657 + $0xb8] sm:$0xff] 1.2965962e+38
        %682 = vst [vmem:[%s657 + $0xc0] sm:$0xff] 1.2965962e+38
        %683 = vst [vmem:[%s657 + $0xc8] sm:$0xff] 1.2965962e+38
        %684 = vst [vmem:[%s657 + $0xd0] sm:$0xff] 1.2965962e+38
        %685 = vst [vmem:[%s657 + $0xd8] sm:$0xff] 1.2965962e+38
        %686 = vst [vmem:[%s657 + $0xe0] sm:$0xff] 1.2965962e+38
        %687 = vst [vmem:[%s657 + $0xe8] sm:$0xff] 1.2965962e+38
        %688 = vst [vmem:[%s657 + $0xf0] sm:$0xff] 1.2965962e+38
        %689 = vst [vmem:[%s657 + $0xf8] sm:$0xff] 1.2965962e+38
        %690 = vst [vmem:[%s657 + $0x100] sm:$0xff] 1.2965962e+38
        %691 = vst [vmem:[%s657 + $0x108] sm:$0xff] 1.2965962e+38
        %692 = vst [vmem:[%s657 + $0x110] sm:$0xff] 1.2965962e+38
        %693 = vst [vmem:[%s657 + $0x118] sm:$0xff] 1.2965962e+38
        %694 = vst [vmem:[%s657 + $0x120] sm:$0xff] 1.2965962e+38
        %695 = vst [vmem:[%s657 + $0x128] sm:$0xff] 1.2965962e+38
        %696 = vst [vmem:[%s657 + $0x130] sm:$0xff] 1.2965962e+38
        %697 = vst [vmem:[%s657 + $0x138] sm:$0xff] 1.2965962e+38
        %698 = vst [vmem:[%s657 + $0x140] sm:$0xff] 1.2965962e+38
        %699 = vst [vmem:[%s657 + $0x148] sm:$0xff] 1.2965962e+38
        %700 = vst [vmem:[%s657 + $0x150] sm:$0xff] 1.2965962e+38
        %701 = vst [vmem:[%s657 + $0x158] sm:$0xff] 1.2965962e+38
        %702 = vst [vmem:[%s657 + $0x160] sm:$0xff] 1.2965962e+38
        %703 = vst [vmem:[%s657 + $0x168] sm:$0xff] 1.2965962e+38
        %704 = vst [vmem:[%s657 + $0x170] sm:$0xff] 1.2965962e+38
        %705 = vst [vmem:[%s657 + $0x178] sm:$0xff] 1.2965962e+38
        %706 = vst [vmem:[%s657 + $0x180] sm:$0xff] 1.2965962e+38
        %707 = vst [vmem:[%s657 + $0x188] sm:$0xff] 1.2965962e+38
        %708 = vst [vmem:[%s657 + $0x190] sm:$0xff] 1.2965962e+38
        %709 = vst [vmem:[%s657 + $0x198] sm:$0xff] 1.2965962e+38
        %710 = vst [vmem:[%s657 + $0x1a0] sm:$0xff] 1.2965962e+38
        %711 = vst [vmem:[%s657 + $0x1a8] sm:$0xff] 1.2965962e+38
        %712 = vst [vmem:[%s657 + $0x1b0] sm:$0xff] 1.2965962e+38
        %713 = vst [vmem:[%s657 + $0x1b8] sm:$0xff] 1.2965962e+38
        %714 = vst [vmem:[%s657 + $0x1c0] sm:$0xff] 1.2965962e+38
        %715 = vst [vmem:[%s657 + $0x1c8] sm:$0xff] 1.2965962e+38
        %716 = vst [vmem:[%s657 + $0x1d0] sm:$0xff] 1.2965962e+38
        %717 = vst [vmem:[%s657 + $0x1d8] sm:$0xff] 1.2965962e+38
        %718 = vst [vmem:[%s657 + $0x1e0] sm:$0xff] 1.2965962e+38
        %719 = vst [vmem:[%s657 + $0x1e8] sm:$0xff] 1.2965962e+38
        %720 = vst [vmem:[%s657 + $0x1f0] sm:$0xff] 1.2965962e+38
        %721 = vst [vmem:[%s657 + $0x1f8] sm:$0xff] 1.2965962e+38
        %s722 = scalar_lea.vmem [#allocation2], 5120
        %723 = vst [vmem:[%s722] sm:$0xff] inf
        %724 = vst [vmem:[%s722 + $0x8] sm:$0xff] inf
        %725 = vst [vmem:[%s722 + $0x10] sm:$0xff] inf
        %726 = vst [vmem:[%s722 + $0x18] sm:$0xff] inf
        %727 = vst [vmem:[%s722 + $0x20] sm:$0xff] inf
        %728 = vst [vmem:[%s722 + $0x28] sm:$0xff] inf
        %729 = vst [vmem:[%s722 + $0x30] sm:$0xff] inf
        %730 = vst [vmem:[%s722 + $0x38] sm:$0xff] inf
        %731 = vst [vmem:[%s722 + $0x40] sm:$0xff] inf
        %732 = vst [vmem:[%s722 + $0x48] sm:$0xff] inf
        %733 = vst [vmem:[%s722 + $0x50] sm:$0xff] inf
        %734 = vst [vmem:[%s722 + $0x58] sm:$0xff] inf
        %735 = vst [vmem:[%s722 + $0x60] sm:$0xff] inf
        %736 = vst [vmem:[%s722 + $0x68] sm:$0xff] inf
        %737 = vst [vmem:[%s722 + $0x70] sm:$0xff] inf
        %738 = vst [vmem:[%s722 + $0x78] sm:$0xff] inf
        %739 = vst [vmem:[%s722 + $0x80] sm:$0xff] inf
        %740 = vst [vmem:[%s722 + $0x88] sm:$0xff] inf
        %741 = vst [vmem:[%s722 + $0x90] sm:$0xff] inf
        %742 = vst [vmem:[%s722 + $0x98] sm:$0xff] inf
        %743 = vst [vmem:[%s722 + $0xa0] sm:$0xff] inf
        %744 = vst [vmem:[%s722 + $0xa8] sm:$0xff] inf
        %745 = vst [vmem:[%s722 + $0xb0] sm:$0xff] inf
        %746 = vst [vmem:[%s722 + $0xb8] sm:$0xff] inf
        %747 = vst [vmem:[%s722 + $0xc0] sm:$0xff] inf
        %748 = vst [vmem:[%s722 + $0xc8] sm:$0xff] inf
        %749 = vst [vmem:[%s722 + $0xd0] sm:$0xff] inf
        %750 = vst [vmem:[%s722 + $0xd8] sm:$0xff] inf
        %751 = vst [vmem:[%s722 + $0xe0] sm:$0xff] inf
        %752 = vst [vmem:[%s722 + $0xe8] sm:$0xff] inf
        %753 = vst [vmem:[%s722 + $0xf0] sm:$0xff] inf
        %754 = vst [vmem:[%s722 + $0xf8] sm:$0xff] inf
        %755 = vst [vmem:[%s722 + $0x100] sm:$0xff] inf
        %756 = vst [vmem:[%s722 + $0x108] sm:$0xff] inf
        %757 = vst [vmem:[%s722 + $0x110] sm:$0xff] inf
        %758 = vst [vmem:[%s722 + $0x118] sm:$0xff] inf
        %759 = vst [vmem:[%s722 + $0x120] sm:$0xff] inf
        %760 = vst [vmem:[%s722 + $0x128] sm:$0xff] inf
        %761 = vst [vmem:[%s722 + $0x130] sm:$0xff] inf
        %762 = vst [vmem:[%s722 + $0x138] sm:$0xff] inf
        %763 = vst [vmem:[%s722 + $0x140] sm:$0xff] inf
        %764 = vst [vmem:[%s722 + $0x148] sm:$0xff] inf
        %765 = vst [vmem:[%s722 + $0x150] sm:$0xff] inf
        %766 = vst [vmem:[%s722 + $0x158] sm:$0xff] inf
        %767 = vst [vmem:[%s722 + $0x160] sm:$0xff] inf
        %768 = vst [vmem:[%s722 + $0x168] sm:$0xff] inf
        %769 = vst [vmem:[%s722 + $0x170] sm:$0xff] inf
        %770 = vst [vmem:[%s722 + $0x178] sm:$0xff] inf
        %771 = vst [vmem:[%s722 + $0x180] sm:$0xff] inf
        %772 = vst [vmem:[%s722 + $0x188] sm:$0xff] inf
        %773 = vst [vmem:[%s722 + $0x190] sm:$0xff] inf
        %774 = vst [vmem:[%s722 + $0x198] sm:$0xff] inf
        %775 = vst [vmem:[%s722 + $0x1a0] sm:$0xff] inf
        %776 = vst [vmem:[%s722 + $0x1a8] sm:$0xff] inf
        %777 = vst [vmem:[%s722 + $0x1b0] sm:$0xff] inf
        %778 = vst [vmem:[%s722 + $0x1b8] sm:$0xff] inf
        %779 = vst [vmem:[%s722 + $0x1c0] sm:$0xff] inf
        %780 = vst [vmem:[%s722 + $0x1c8] sm:$0xff] inf
        %781 = vst [vmem:[%s722 + $0x1d0] sm:$0xff] inf
        %782 = vst [vmem:[%s722 + $0x1d8] sm:$0xff] inf
        %783 = vst [vmem:[%s722 + $0x1e0] sm:$0xff] inf
        %784 = vst [vmem:[%s722 + $0x1e8] sm:$0xff] inf
        %785 = vst [vmem:[%s722 + $0x1f0] sm:$0xff] inf
        %786 = vst [vmem:[%s722 + $0x1f8] sm:$0xff] inf
        %s787 = scalar_lea.vmem [#allocation2], 5632
        %788 = vst [vmem:[%s787] sm:$0xff] inf
        %789 = vst [vmem:[%s787 + $0x8] sm:$0xff] inf
        %790 = vst [vmem:[%s787 + $0x10] sm:$0xff] inf
        %791 = vst [vmem:[%s787 + $0x18] sm:$0xff] inf
        %792 = vst [vmem:[%s787 + $0x20] sm:$0xff] inf
        %793 = vst [vmem:[%s787 + $0x28] sm:$0xff] inf
        %794 = vst [vmem:[%s787 + $0x30] sm:$0xff] inf
        %795 = vst [vmem:[%s787 + $0x38] sm:$0xff] inf
        %796 = vst [vmem:[%s787 + $0x40] sm:$0xff] inf
        %797 = vst [vmem:[%s787 + $0x48] sm:$0xff] inf
        %798 = vst [vmem:[%s787 + $0x50] sm:$0xff] inf
        %799 = vst [vmem:[%s787 + $0x58] sm:$0xff] inf
        %800 = vst [vmem:[%s787 + $0x60] sm:$0xff] inf
        %801 = vst [vmem:[%s787 + $0x68] sm:$0xff] inf
        %802 = vst [vmem:[%s787 + $0x70] sm:$0xff] inf
        %803 = vst [vmem:[%s787 + $0x78] sm:$0xff] inf
        %804 = vst [vmem:[%s787 + $0x80] sm:$0xff] inf
        %805 = vst [vmem:[%s787 + $0x88] sm:$0xff] inf
        %806 = vst [vmem:[%s787 + $0x90] sm:$0xff] inf
        %807 = vst [vmem:[%s787 + $0x98] sm:$0xff] inf
        %808 = vst [vmem:[%s787 + $0xa0] sm:$0xff] inf
        %809 = vst [vmem:[%s787 + $0xa8] sm:$0xff] inf
        %810 = vst [vmem:[%s787 + $0xb0] sm:$0xff] inf
        %811 = vst [vmem:[%s787 + $0xb8] sm:$0xff] inf
        %812 = vst [vmem:[%s787 + $0xc0] sm:$0xff] inf
        %813 = vst [vmem:[%s787 + $0xc8] sm:$0xff] inf
        %814 = vst [vmem:[%s787 + $0xd0] sm:$0xff] inf
        %815 = vst [vmem:[%s787 + $0xd8] sm:$0xff] inf
        %816 = vst [vmem:[%s787 + $0xe0] sm:$0xff] inf
        %817 = vst [vmem:[%s787 + $0xe8] sm:$0xff] inf
        %818 = vst [vmem:[%s787 + $0xf0] sm:$0xff] inf
        %819 = vst [vmem:[%s787 + $0xf8] sm:$0xff] inf
        %820 = vst [vmem:[%s787 + $0x100] sm:$0xff] inf
        %821 = vst [vmem:[%s787 + $0x108] sm:$0xff] inf
        %822 = vst [vmem:[%s787 + $0x110] sm:$0xff] inf
        %823 = vst [vmem:[%s787 + $0x118] sm:$0xff] inf
        %824 = vst [vmem:[%s787 + $0x120] sm:$0xff] inf
        %825 = vst [vmem:[%s787 + $0x128] sm:$0xff] inf
        %826 = vst [vmem:[%s787 + $0x130] sm:$0xff] inf
        %827 = vst [vmem:[%s787 + $0x138] sm:$0xff] inf
        %828 = vst [vmem:[%s787 + $0x140] sm:$0xff] inf
        %829 = vst [vmem:[%s787 + $0x148] sm:$0xff] inf
        %830 = vst [vmem:[%s787 + $0x150] sm:$0xff] inf
        %831 = vst [vmem:[%s787 + $0x158] sm:$0xff] inf
        %832 = vst [vmem:[%s787 + $0x160] sm:$0xff] inf
        %833 = vst [vmem:[%s787 + $0x168] sm:$0xff] inf
        %834 = vst [vmem:[%s787 + $0x170] sm:$0xff] inf
        %835 = vst [vmem:[%s787 + $0x178] sm:$0xff] inf
        %836 = vst [vmem:[%s787 + $0x180] sm:$0xff] inf
        %837 = vst [vmem:[%s787 + $0x188] sm:$0xff] inf
        %838 = vst [vmem:[%s787 + $0x190] sm:$0xff] inf
        %839 = vst [vmem:[%s787 + $0x198] sm:$0xff] inf
        %840 = vst [vmem:[%s787 + $0x1a0] sm:$0xff] inf
        %841 = vst [vmem:[%s787 + $0x1a8] sm:$0xff] inf
        %842 = vst [vmem:[%s787 + $0x1b0] sm:$0xff] inf
        %843 = vst [vmem:[%s787 + $0x1b8] sm:$0xff] inf
        %844 = vst [vmem:[%s787 + $0x1c0] sm:$0xff] inf
        %845 = vst [vmem:[%s787 + $0x1c8] sm:$0xff] inf
        %846 = vst [vmem:[%s787 + $0x1d0] sm:$0xff] inf
        %847 = vst [vmem:[%s787 + $0x1d8] sm:$0xff] inf
        %848 = vst [vmem:[%s787 + $0x1e0] sm:$0xff] inf
        %849 = vst [vmem:[%s787 + $0x1e8] sm:$0xff] inf
        %850 = vst [vmem:[%s787 + $0x1f0] sm:$0xff] inf
        %851 = vst [vmem:[%s787 + $0x1f8] sm:$0xff] inf
        %s852 = smul.u32 %s62, 512
        %s853 = scalar_lea.vmem %s55, %s852
        %854 = vst [vmem:[%s853] sm:$0xff] inf
        %855 = vst [vmem:[%s853 + $0x8] sm:$0xff] inf
        %856 = vst [vmem:[%s853 + $0x10] sm:$0xff] inf
        %857 = vst [vmem:[%s853 + $0x18] sm:$0xff] inf
        %858 = vst [vmem:[%s853 + $0x20] sm:$0xff] inf
        %859 = vst [vmem:[%s853 + $0x28] sm:$0xff] inf
        %860 = vst [vmem:[%s853 + $0x30] sm:$0xff] inf
        %861 = vst [vmem:[%s853 + $0x38] sm:$0xff] inf
        %862 = vst [vmem:[%s853 + $0x40] sm:$0xff] inf
        %863 = vst [vmem:[%s853 + $0x48] sm:$0xff] inf
        %864 = vst [vmem:[%s853 + $0x50] sm:$0xff] inf
        %865 = vst [vmem:[%s853 + $0x58] sm:$0xff] inf
        %866 = vst [vmem:[%s853 + $0x60] sm:$0xff] inf
        %867 = vst [vmem:[%s853 + $0x68] sm:$0xff] inf
        %868 = vst [vmem:[%s853 + $0x70] sm:$0xff] inf
        %869 = vst [vmem:[%s853 + $0x78] sm:$0xff] inf
        %870 = vst [vmem:[%s853 + $0x80] sm:$0xff] inf
        %871 = vst [vmem:[%s853 + $0x88] sm:$0xff] inf
        %872 = vst [vmem:[%s853 + $0x90] sm:$0xff] inf
        %873 = vst [vmem:[%s853 + $0x98] sm:$0xff] inf
        %874 = vst [vmem:[%s853 + $0xa0] sm:$0xff] inf
        %875 = vst [vmem:[%s853 + $0xa8] sm:$0xff] inf
        %876 = vst [vmem:[%s853 + $0xb0] sm:$0xff] inf
        %877 = vst [vmem:[%s853 + $0xb8] sm:$0xff] inf
        %878 = vst [vmem:[%s853 + $0xc0] sm:$0xff] inf
        %879 = vst [vmem:[%s853 + $0xc8] sm:$0xff] inf
        %880 = vst [vmem:[%s853 + $0xd0] sm:$0xff] inf
        %881 = vst [vmem:[%s853 + $0xd8] sm:$0xff] inf
        %882 = vst [vmem:[%s853 + $0xe0] sm:$0xff] inf
        %883 = vst [vmem:[%s853 + $0xe8] sm:$0xff] inf
        %884 = vst [vmem:[%s853 + $0xf0] sm:$0xff] inf
        %885 = vst [vmem:[%s853 + $0xf8] sm:$0xff] inf
        %886 = vst [vmem:[%s853 + $0x100] sm:$0xff] inf
        %887 = vst [vmem:[%s853 + $0x108] sm:$0xff] inf
        %888 = vst [vmem:[%s853 + $0x110] sm:$0xff] inf
        %889 = vst [vmem:[%s853 + $0x118] sm:$0xff] inf
        %890 = vst [vmem:[%s853 + $0x120] sm:$0xff] inf
        %891 = vst [vmem:[%s853 + $0x128] sm:$0xff] inf
        %892 = vst [vmem:[%s853 + $0x130] sm:$0xff] inf
        %893 = vst [vmem:[%s853 + $0x138] sm:$0xff] inf
        %894 = vst [vmem:[%s853 + $0x140] sm:$0xff] inf
        %895 = vst [vmem:[%s853 + $0x148] sm:$0xff] inf
        %896 = vst [vmem:[%s853 + $0x150] sm:$0xff] inf
        %897 = vst [vmem:[%s853 + $0x158] sm:$0xff] inf
        %898 = vst [vmem:[%s853 + $0x160] sm:$0xff] inf
        %899 = vst [vmem:[%s853 + $0x168] sm:$0xff] inf
        %900 = vst [vmem:[%s853 + $0x170] sm:$0xff] inf
        %901 = vst [vmem:[%s853 + $0x178] sm:$0xff] inf
        %902 = vst [vmem:[%s853 + $0x180] sm:$0xff] inf
        %903 = vst [vmem:[%s853 + $0x188] sm:$0xff] inf
        %904 = vst [vmem:[%s853 + $0x190] sm:$0xff] inf
        %905 = vst [vmem:[%s853 + $0x198] sm:$0xff] inf
        %906 = vst [vmem:[%s853 + $0x1a0] sm:$0xff] inf
        %907 = vst [vmem:[%s853 + $0x1a8] sm:$0xff] inf
        %908 = vst [vmem:[%s853 + $0x1b0] sm:$0xff] inf
        %909 = vst [vmem:[%s853 + $0x1b8] sm:$0xff] inf
        %910 = vst [vmem:[%s853 + $0x1c0] sm:$0xff] inf
        %911 = vst [vmem:[%s853 + $0x1c8] sm:$0xff] inf
        %912 = vst [vmem:[%s853 + $0x1d0] sm:$0xff] inf
        %913 = vst [vmem:[%s853 + $0x1d8] sm:$0xff] inf
        %914 = vst [vmem:[%s853 + $0x1e0] sm:$0xff] inf
        %915 = vst [vmem:[%s853 + $0x1e8] sm:$0xff] inf
        %916 = vst [vmem:[%s853 + $0x1f0] sm:$0xff] inf
        %917 = vst [vmem:[%s853 + $0x1f8] sm:$0xff] inf
        %s918 = sshra.s32 %s62, 7
        %s919 = sand.u32 %s62, 127
        %s920 = sadd.s32 %s918, %s14
        %s921 = smul.u32 %s920, 128
        %s922 = sshra.s32 %s62, 7
        %s923 = sand.u32 %s62, 127
        %s924 = sadd.s32 %s921, %s923
        %s925 = sld [smem:[#allocation5 + %s924]]
        %s926 = smul.u32 %s925, 6144
        %s927 = smul.addr %s926, 16
        %s928 = scalar_lea.hbm %s3, %s927
        // Predicated region
        $region24: #{_attention_page_example.1} parent=16 // pred_check
          _
        $region25: #{_attention_page_example.1} parent=16 // pred_check_branch
          %930 = sbr.rel target = $region27
        $region26: #{_attention_page_example.1} parent=16 // pred_region
          %931 = sst [smem:[#allocation8]] [#allocation7]
          %932 = sst [smem:[#allocation9]] [#allocation6]
        $region27: #{_attention_page_example.1} parent=16 // pred_fallthru
          _
        %934 = shalt.err (0)
        %s936 = sshll.u32 [#allocation2], 4
        %s937 = int_to_ptr.vmem [resolvable:$true] %s936
        %939 = dma.vmem_to_hbm [thread:$0]  %s937, 98304, %s928, [#allocation3]
        %s940 = sadd.s32 %s62, 1
        // Predicated region
        $region28: #{_attention_page_example.1} parent=16 // pred_check
          %p941 = pneg %p63
        $region29: #{_attention_page_example.1} parent=16 // pred_check_branch
          %943 = sbr.rel (%p941) target = $region31
        $region30: #{_attention_page_example.1} parent=16 // pred_region
          %s944 = scalar_lea.sflag [#allocation3], 1
          %s945 = smul.u32 6, 2
          %s946 = smul.u32 %s945, 16
          %s947 = smul.u32 %s946, 32
          %s948 = smul.u32 %s947, 1
          %s949 = sshll.u32 %s948, 4
          %950 = dma.done %s944, %s949
        $region31: #{_attention_page_example.1} parent=16 // pred_fallthru
          _
        %s951 = scalar_lea.vmem [#allocation2], 6144
        %952 = vst [vmem:[%s951] sm:$0xff] 2.0
        %953 = vst [vmem:[%s951 + $0x8] sm:$0xff] 2.0
        %954 = vst [vmem:[%s951 + $0x10] sm:$0xff] 2.0
        %955 = vst [vmem:[%s951 + $0x18] sm:$0xff] 2.0
        %956 = vst [vmem:[%s951 + $0x20] sm:$0xff] 2.0
        %957 = vst [vmem:[%s951 + $0x28] sm:$0xff] 2.0
        %958 = vst [vmem:[%s951 + $0x30] sm:$0xff] 2.0
        %959 = vst [vmem:[%s951 + $0x38] sm:$0xff] 2.0
        %960 = vst [vmem:[%s951 + $0x40] sm:$0xff] 2.0
        %961 = vst [vmem:[%s951 + $0x48] sm:$0xff] 2.0
        %962 = vst [vmem:[%s951 + $0x50] sm:$0xff] 2.0
        %963 = vst [vmem:[%s951 + $0x58] sm:$0xff] 2.0
        %964 = vst [vmem:[%s951 + $0x60] sm:$0xff] 2.0
        %965 = vst [vmem:[%s951 + $0x68] sm:$0xff] 2.0
        %966 = vst [vmem:[%s951 + $0x70] sm:$0xff] 2.0
        %967 = vst [vmem:[%s951 + $0x78] sm:$0xff] 2.0
        %968 = vst [vmem:[%s951 + $0x80] sm:$0xff] 2.0
        %969 = vst [vmem:[%s951 + $0x88] sm:$0xff] 2.0
        %970 = vst [vmem:[%s951 + $0x90] sm:$0xff] 2.0
        %971 = vst [vmem:[%s951 + $0x98] sm:$0xff] 2.0
        %972 = vst [vmem:[%s951 + $0xa0] sm:$0xff] 2.0
        %973 = vst [vmem:[%s951 + $0xa8] sm:$0xff] 2.0
        %974 = vst [vmem:[%s951 + $0xb0] sm:$0xff] 2.0
        %975 = vst [vmem:[%s951 + $0xb8] sm:$0xff] 2.0
        %976 = vst [vmem:[%s951 + $0xc0] sm:$0xff] 2.0
        %977 = vst [vmem:[%s951 + $0xc8] sm:$0xff] 2.0
        %978 = vst [vmem:[%s951 + $0xd0] sm:$0xff] 2.0
        %979 = vst [vmem:[%s951 + $0xd8] sm:$0xff] 2.0
        %980 = vst [vmem:[%s951 + $0xe0] sm:$0xff] 2.0
        %981 = vst [vmem:[%s951 + $0xe8] sm:$0xff] 2.0
        %982 = vst [vmem:[%s951 + $0xf0] sm:$0xff] 2.0
        %983 = vst [vmem:[%s951 + $0xf8] sm:$0xff] 2.0
        %984 = vst [vmem:[%s951 + $0x100] sm:$0xff] 2.0
        %985 = vst [vmem:[%s951 + $0x108] sm:$0xff] 2.0
        %986 = vst [vmem:[%s951 + $0x110] sm:$0xff] 2.0
        %987 = vst [vmem:[%s951 + $0x118] sm:$0xff] 2.0
        %988 = vst [vmem:[%s951 + $0x120] sm:$0xff] 2.0
        %989 = vst [vmem:[%s951 + $0x128] sm:$0xff] 2.0
        %990 = vst [vmem:[%s951 + $0x130] sm:$0xff] 2.0
        %991 = vst [vmem:[%s951 + $0x138] sm:$0xff] 2.0
        %992 = vst [vmem:[%s951 + $0x140] sm:$0xff] 2.0
        %993 = vst [vmem:[%s951 + $0x148] sm:$0xff] 2.0
        %994 = vst [vmem:[%s951 + $0x150] sm:$0xff] 2.0
        %995 = vst [vmem:[%s951 + $0x158] sm:$0xff] 2.0
        %996 = vst [vmem:[%s951 + $0x160] sm:$0xff] 2.0
        %997 = vst [vmem:[%s951 + $0x168] sm:$0xff] 2.0
        %998 = vst [vmem:[%s951 + $0x170] sm:$0xff] 2.0
        %999 = vst [vmem:[%s951 + $0x178] sm:$0xff] 2.0
        %1000 = vst [vmem:[%s951 + $0x180] sm:$0xff] 2.0
        %1001 = vst [vmem:[%s951 + $0x188] sm:$0xff] 2.0
        %1002 = vst [vmem:[%s951 + $0x190] sm:$0xff] 2.0
        %1003 = vst [vmem:[%s951 + $0x198] sm:$0xff] 2.0
        %1004 = vst [vmem:[%s951 + $0x1a0] sm:$0xff] 2.0
        %1005 = vst [vmem:[%s951 + $0x1a8] sm:$0xff] 2.0
        %1006 = vst [vmem:[%s951 + $0x1b0] sm:$0xff] 2.0
        %1007 = vst [vmem:[%s951 + $0x1b8] sm:$0xff] 2.0
        %1008 = vst [vmem:[%s951 + $0x1c0] sm:$0xff] 2.0
        %1009 = vst [vmem:[%s951 + $0x1c8] sm:$0xff] 2.0
        %1010 = vst [vmem:[%s951 + $0x1d0] sm:$0xff] 2.0
        %1011 = vst [vmem:[%s951 + $0x1d8] sm:$0xff] 2.0
        %1012 = vst [vmem:[%s951 + $0x1e0] sm:$0xff] 2.0
        %1013 = vst [vmem:[%s951 + $0x1e8] sm:$0xff] 2.0
        %1014 = vst [vmem:[%s951 + $0x1f0] sm:$0xff] 2.0
        %1015 = vst [vmem:[%s951 + $0x1f8] sm:$0xff] 2.0
        %s1016 = scalar_lea.vmem [#allocation2], 6656
        %1017 = vst [vmem:[%s1016] sm:$0xff] 4.0
        %1018 = vst [vmem:[%s1016 + $0x8] sm:$0xff] 4.0
        %1019 = vst [vmem:[%s1016 + $0x10] sm:$0xff] 4.0
        %1020 = vst [vmem:[%s1016 + $0x18] sm:$0xff] 4.0
        %1021 = vst [vmem:[%s1016 + $0x20] sm:$0xff] 4.0
        %1022 = vst [vmem:[%s1016 + $0x28] sm:$0xff] 4.0
        %1023 = vst [vmem:[%s1016 + $0x30] sm:$0xff] 4.0
        %1024 = vst [vmem:[%s1016 + $0x38] sm:$0xff] 4.0
        %1025 = vst [vmem:[%s1016 + $0x40] sm:$0xff] 4.0
        %1026 = vst [vmem:[%s1016 + $0x48] sm:$0xff] 4.0
        %1027 = vst [vmem:[%s1016 + $0x50] sm:$0xff] 4.0
        %1028 = vst [vmem:[%s1016 + $0x58] sm:$0xff] 4.0
        %1029 = vst [vmem:[%s1016 + $0x60] sm:$0xff] 4.0
        %1030 = vst [vmem:[%s1016 + $0x68] sm:$0xff] 4.0
        %1031 = vst [vmem:[%s1016 + $0x70] sm:$0xff] 4.0
        %1032 = vst [vmem:[%s1016 + $0x78] sm:$0xff] 4.0
        %1033 = vst [vmem:[%s1016 + $0x80] sm:$0xff] 4.0
        %1034 = vst [vmem:[%s1016 + $0x88] sm:$0xff] 4.0
        %1035 = vst [vmem:[%s1016 + $0x90] sm:$0xff] 4.0
        %1036 = vst [vmem:[%s1016 + $0x98] sm:$0xff] 4.0
        %1037 = vst [vmem:[%s1016 + $0xa0] sm:$0xff] 4.0
        %1038 = vst [vmem:[%s1016 + $0xa8] sm:$0xff] 4.0
        %1039 = vst [vmem:[%s1016 + $0xb0] sm:$0xff] 4.0
        %1040 = vst [vmem:[%s1016 + $0xb8] sm:$0xff] 4.0
        %1041 = vst [vmem:[%s1016 + $0xc0] sm:$0xff] 4.0
        %1042 = vst [vmem:[%s1016 + $0xc8] sm:$0xff] 4.0
        %1043 = vst [vmem:[%s1016 + $0xd0] sm:$0xff] 4.0
        %1044 = vst [vmem:[%s1016 + $0xd8] sm:$0xff] 4.0
        %1045 = vst [vmem:[%s1016 + $0xe0] sm:$0xff] 4.0
        %1046 = vst [vmem:[%s1016 + $0xe8] sm:$0xff] 4.0
        %1047 = vst [vmem:[%s1016 + $0xf0] sm:$0xff] 4.0
        %1048 = vst [vmem:[%s1016 + $0xf8] sm:$0xff] 4.0
        %1049 = vst [vmem:[%s1016 + $0x100] sm:$0xff] 4.0
        %1050 = vst [vmem:[%s1016 + $0x108] sm:$0xff] 4.0
        %1051 = vst [vmem:[%s1016 + $0x110] sm:$0xff] 4.0
        %1052 = vst [vmem:[%s1016 + $0x118] sm:$0xff] 4.0
        %1053 = vst [vmem:[%s1016 + $0x120] sm:$0xff] 4.0
        %1054 = vst [vmem:[%s1016 + $0x128] sm:$0xff] 4.0
        %1055 = vst [vmem:[%s1016 + $0x130] sm:$0xff] 4.0
        %1056 = vst [vmem:[%s1016 + $0x138] sm:$0xff] 4.0
        %1057 = vst [vmem:[%s1016 + $0x140] sm:$0xff] 4.0
        %1058 = vst [vmem:[%s1016 + $0x148] sm:$0xff] 4.0
        %1059 = vst [vmem:[%s1016 + $0x150] sm:$0xff] 4.0
        %1060 = vst [vmem:[%s1016 + $0x158] sm:$0xff] 4.0
        %1061 = vst [vmem:[%s1016 + $0x160] sm:$0xff] 4.0
        %1062 = vst [vmem:[%s1016 + $0x168] sm:$0xff] 4.0
        %1063 = vst [vmem:[%s1016 + $0x170] sm:$0xff] 4.0
        %1064 = vst [vmem:[%s1016 + $0x178] sm:$0xff] 4.0
        %1065 = vst [vmem:[%s1016 + $0x180] sm:$0xff] 4.0
        %1066 = vst [vmem:[%s1016 + $0x188] sm:$0xff] 4.0
        %1067 = vst [vmem:[%s1016 + $0x190] sm:$0xff] 4.0
        %1068 = vst [vmem:[%s1016 + $0x198] sm:$0xff] 4.0
        %1069 = vst [vmem:[%s1016 + $0x1a0] sm:$0xff] 4.0
        %1070 = vst [vmem:[%s1016 + $0x1a8] sm:$0xff] 4.0
        %1071 = vst [vmem:[%s1016 + $0x1b0] sm:$0xff] 4.0
        %1072 = vst [vmem:[%s1016 + $0x1b8] sm:$0xff] 4.0
        %1073 = vst [vmem:[%s1016 + $0x1c0] sm:$0xff] 4.0
        %1074 = vst [vmem:[%s1016 + $0x1c8] sm:$0xff] 4.0
        %1075 = vst [vmem:[%s1016 + $0x1d0] sm:$0xff] 4.0
        %1076 = vst [vmem:[%s1016 + $0x1d8] sm:$0xff] 4.0
        %1077 = vst [vmem:[%s1016 + $0x1e0] sm:$0xff] 4.0
        %1078 = vst [vmem:[%s1016 + $0x1e8] sm:$0xff] 4.0
        %1079 = vst [vmem:[%s1016 + $0x1f0] sm:$0xff] 4.0
        %1080 = vst [vmem:[%s1016 + $0x1f8] sm:$0xff] 4.0
        %s1081 = scalar_lea.vmem [#allocation2], 7168
        %1082 = vst [vmem:[%s1081] sm:$0xff] 18.0
        %1083 = vst [vmem:[%s1081 + $0x8] sm:$0xff] 18.0
        %1084 = vst [vmem:[%s1081 + $0x10] sm:$0xff] 18.0
        %1085 = vst [vmem:[%s1081 + $0x18] sm:$0xff] 18.0
        %1086 = vst [vmem:[%s1081 + $0x20] sm:$0xff] 18.0
        %1087 = vst [vmem:[%s1081 + $0x28] sm:$0xff] 18.0
        %1088 = vst [vmem:[%s1081 + $0x30] sm:$0xff] 18.0
        %1089 = vst [vmem:[%s1081 + $0x38] sm:$0xff] 18.0
        %1090 = vst [vmem:[%s1081 + $0x40] sm:$0xff] 18.0
        %1091 = vst [vmem:[%s1081 + $0x48] sm:$0xff] 18.0
        %1092 = vst [vmem:[%s1081 + $0x50] sm:$0xff] 18.0
        %1093 = vst [vmem:[%s1081 + $0x58] sm:$0xff] 18.0
        %1094 = vst [vmem:[%s1081 + $0x60] sm:$0xff] 18.0
        %1095 = vst [vmem:[%s1081 + $0x68] sm:$0xff] 18.0
        %1096 = vst [vmem:[%s1081 + $0x70] sm:$0xff] 18.0
        %1097 = vst [vmem:[%s1081 + $0x78] sm:$0xff] 18.0
        %1098 = vst [vmem:[%s1081 + $0x80] sm:$0xff] 18.0
        %1099 = vst [vmem:[%s1081 + $0x88] sm:$0xff] 18.0
        %1100 = vst [vmem:[%s1081 + $0x90] sm:$0xff] 18.0
        %1101 = vst [vmem:[%s1081 + $0x98] sm:$0xff] 18.0
        %1102 = vst [vmem:[%s1081 + $0xa0] sm:$0xff] 18.0
        %1103 = vst [vmem:[%s1081 + $0xa8] sm:$0xff] 18.0
        %1104 = vst [vmem:[%s1081 + $0xb0] sm:$0xff] 18.0
        %1105 = vst [vmem:[%s1081 + $0xb8] sm:$0xff] 18.0
        %1106 = vst [vmem:[%s1081 + $0xc0] sm:$0xff] 18.0
        %1107 = vst [vmem:[%s1081 + $0xc8] sm:$0xff] 18.0
        %1108 = vst [vmem:[%s1081 + $0xd0] sm:$0xff] 18.0
        %1109 = vst [vmem:[%s1081 + $0xd8] sm:$0xff] 18.0
        %1110 = vst [vmem:[%s1081 + $0xe0] sm:$0xff] 18.0
        %1111 = vst [vmem:[%s1081 + $0xe8] sm:$0xff] 18.0
        %1112 = vst [vmem:[%s1081 + $0xf0] sm:$0xff] 18.0
        %1113 = vst [vmem:[%s1081 + $0xf8] sm:$0xff] 18.0
        %1114 = vst [vmem:[%s1081 + $0x100] sm:$0xff] 18.0
        %1115 = vst [vmem:[%s1081 + $0x108] sm:$0xff] 18.0
        %1116 = vst [vmem:[%s1081 + $0x110] sm:$0xff] 18.0
        %1117 = vst [vmem:[%s1081 + $0x118] sm:$0xff] 18.0
        %1118 = vst [vmem:[%s1081 + $0x120] sm:$0xff] 18.0
        %1119 = vst [vmem:[%s1081 + $0x128] sm:$0xff] 18.0
        %1120 = vst [vmem:[%s1081 + $0x130] sm:$0xff] 18.0
        %1121 = vst [vmem:[%s1081 + $0x138] sm:$0xff] 18.0
        %1122 = vst [vmem:[%s1081 + $0x140] sm:$0xff] 18.0
        %1123 = vst [vmem:[%s1081 + $0x148] sm:$0xff] 18.0
        %1124 = vst [vmem:[%s1081 + $0x150] sm:$0xff] 18.0
        %1125 = vst [vmem:[%s1081 + $0x158] sm:$0xff] 18.0
        %1126 = vst [vmem:[%s1081 + $0x160] sm:$0xff] 18.0
        %1127 = vst [vmem:[%s1081 + $0x168] sm:$0xff] 18.0
        %1128 = vst [vmem:[%s1081 + $0x170] sm:$0xff] 18.0
        %1129 = vst [vmem:[%s1081 + $0x178] sm:$0xff] 18.0
        %1130 = vst [vmem:[%s1081 + $0x180] sm:$0xff] 18.0
        %1131 = vst [vmem:[%s1081 + $0x188] sm:$0xff] 18.0
        %1132 = vst [vmem:[%s1081 + $0x190] sm:$0xff] 18.0
        %1133 = vst [vmem:[%s1081 + $0x198] sm:$0xff] 18.0
        %1134 = vst [vmem:[%s1081 + $0x1a0] sm:$0xff] 18.0
        %1135 = vst [vmem:[%s1081 + $0x1a8] sm:$0xff] 18.0
        %1136 = vst [vmem:[%s1081 + $0x1b0] sm:$0xff] 18.0
        %1137 = vst [vmem:[%s1081 + $0x1b8] sm:$0xff] 18.0
        %1138 = vst [vmem:[%s1081 + $0x1c0] sm:$0xff] 18.0
        %1139 = vst [vmem:[%s1081 + $0x1c8] sm:$0xff] 18.0
        %1140 = vst [vmem:[%s1081 + $0x1d0] sm:$0xff] 18.0
        %1141 = vst [vmem:[%s1081 + $0x1d8] sm:$0xff] 18.0
        %1142 = vst [vmem:[%s1081 + $0x1e0] sm:$0xff] 18.0
        %1143 = vst [vmem:[%s1081 + $0x1e8] sm:$0xff] 18.0
        %1144 = vst [vmem:[%s1081 + $0x1f0] sm:$0xff] 18.0
        %1145 = vst [vmem:[%s1081 + $0x1f8] sm:$0xff] 18.0
        %s1146 = scalar_lea.vmem [#allocation2], 7680
        %1147 = vst [vmem:[%s1146] sm:$0xff] 36.0
        %1148 = vst [vmem:[%s1146 + $0x8] sm:$0xff] 36.0
        %1149 = vst [vmem:[%s1146 + $0x10] sm:$0xff] 36.0
        %1150 = vst [vmem:[%s1146 + $0x18] sm:$0xff] 36.0
        %1151 = vst [vmem:[%s1146 + $0x20] sm:$0xff] 36.0
        %1152 = vst [vmem:[%s1146 + $0x28] sm:$0xff] 36.0
        %1153 = vst [vmem:[%s1146 + $0x30] sm:$0xff] 36.0
        %1154 = vst [vmem:[%s1146 + $0x38] sm:$0xff] 36.0
        %1155 = vst [vmem:[%s1146 + $0x40] sm:$0xff] 36.0
        %1156 = vst [vmem:[%s1146 + $0x48] sm:$0xff] 36.0
        %1157 = vst [vmem:[%s1146 + $0x50] sm:$0xff] 36.0
        %1158 = vst [vmem:[%s1146 + $0x58] sm:$0xff] 36.0
        %1159 = vst [vmem:[%s1146 + $0x60] sm:$0xff] 36.0
        %1160 = vst [vmem:[%s1146 + $0x68] sm:$0xff] 36.0
        %1161 = vst [vmem:[%s1146 + $0x70] sm:$0xff] 36.0
        %1162 = vst [vmem:[%s1146 + $0x78] sm:$0xff] 36.0
        %1163 = vst [vmem:[%s1146 + $0x80] sm:$0xff] 36.0
        %1164 = vst [vmem:[%s1146 + $0x88] sm:$0xff] 36.0
        %1165 = vst [vmem:[%s1146 + $0x90] sm:$0xff] 36.0
        %1166 = vst [vmem:[%s1146 + $0x98] sm:$0xff] 36.0
        %1167 = vst [vmem:[%s1146 + $0xa0] sm:$0xff] 36.0
        %1168 = vst [vmem:[%s1146 + $0xa8] sm:$0xff] 36.0
        %1169 = vst [vmem:[%s1146 + $0xb0] sm:$0xff] 36.0
        %1170 = vst [vmem:[%s1146 + $0xb8] sm:$0xff] 36.0
        %1171 = vst [vmem:[%s1146 + $0xc0] sm:$0xff] 36.0
        %1172 = vst [vmem:[%s1146 + $0xc8] sm:$0xff] 36.0
        %1173 = vst [vmem:[%s1146 + $0xd0] sm:$0xff] 36.0
        %1174 = vst [vmem:[%s1146 + $0xd8] sm:$0xff] 36.0
        %1175 = vst [vmem:[%s1146 + $0xe0] sm:$0xff] 36.0
        %1176 = vst [vmem:[%s1146 + $0xe8] sm:$0xff] 36.0
        %1177 = vst [vmem:[%s1146 + $0xf0] sm:$0xff] 36.0
        %1178 = vst [vmem:[%s1146 + $0xf8] sm:$0xff] 36.0
        %1179 = vst [vmem:[%s1146 + $0x100] sm:$0xff] 36.0
        %1180 = vst [vmem:[%s1146 + $0x108] sm:$0xff] 36.0
        %1181 = vst [vmem:[%s1146 + $0x110] sm:$0xff] 36.0
        %1182 = vst [vmem:[%s1146 + $0x118] sm:$0xff] 36.0
        %1183 = vst [vmem:[%s1146 + $0x120] sm:$0xff] 36.0
        %1184 = vst [vmem:[%s1146 + $0x128] sm:$0xff] 36.0
        %1185 = vst [vmem:[%s1146 + $0x130] sm:$0xff] 36.0
        %1186 = vst [vmem:[%s1146 + $0x138] sm:$0xff] 36.0
        %1187 = vst [vmem:[%s1146 + $0x140] sm:$0xff] 36.0
        %1188 = vst [vmem:[%s1146 + $0x148] sm:$0xff] 36.0
        %1189 = vst [vmem:[%s1146 + $0x150] sm:$0xff] 36.0
        %1190 = vst [vmem:[%s1146 + $0x158] sm:$0xff] 36.0
        %1191 = vst [vmem:[%s1146 + $0x160] sm:$0xff] 36.0
        %1192 = vst [vmem:[%s1146 + $0x168] sm:$0xff] 36.0
        %1193 = vst [vmem:[%s1146 + $0x170] sm:$0xff] 36.0
        %1194 = vst [vmem:[%s1146 + $0x178] sm:$0xff] 36.0
        %1195 = vst [vmem:[%s1146 + $0x180] sm:$0xff] 36.0
        %1196 = vst [vmem:[%s1146 + $0x188] sm:$0xff] 36.0
        %1197 = vst [vmem:[%s1146 + $0x190] sm:$0xff] 36.0
        %1198 = vst [vmem:[%s1146 + $0x198] sm:$0xff] 36.0
        %1199 = vst [vmem:[%s1146 + $0x1a0] sm:$0xff] 36.0
        %1200 = vst [vmem:[%s1146 + $0x1a8] sm:$0xff] 36.0
        %1201 = vst [vmem:[%s1146 + $0x1b0] sm:$0xff] 36.0
        %1202 = vst [vmem:[%s1146 + $0x1b8] sm:$0xff] 36.0
        %1203 = vst [vmem:[%s1146 + $0x1c0] sm:$0xff] 36.0
        %1204 = vst [vmem:[%s1146 + $0x1c8] sm:$0xff] 36.0
        %1205 = vst [vmem:[%s1146 + $0x1d0] sm:$0xff] 36.0
        %1206 = vst [vmem:[%s1146 + $0x1d8] sm:$0xff] 36.0
        %1207 = vst [vmem:[%s1146 + $0x1e0] sm:$0xff] 36.0
        %1208 = vst [vmem:[%s1146 + $0x1e8] sm:$0xff] 36.0
        %1209 = vst [vmem:[%s1146 + $0x1f0] sm:$0xff] 36.0
        %1210 = vst [vmem:[%s1146 + $0x1f8] sm:$0xff] 36.0
        %s1211 = scalar_lea.vmem [#allocation2], 8192
        %1212 = vst [vmem:[%s1211] sm:$0xff] 11682.0
        %1213 = vst [vmem:[%s1211 + $0x8] sm:$0xff] 11682.0
        %1214 = vst [vmem:[%s1211 + $0x10] sm:$0xff] 11682.0
        %1215 = vst [vmem:[%s1211 + $0x18] sm:$0xff] 11682.0
        %1216 = vst [vmem:[%s1211 + $0x20] sm:$0xff] 11682.0
        %1217 = vst [vmem:[%s1211 + $0x28] sm:$0xff] 11682.0
        %1218 = vst [vmem:[%s1211 + $0x30] sm:$0xff] 11682.0
        %1219 = vst [vmem:[%s1211 + $0x38] sm:$0xff] 11682.0
        %1220 = vst [vmem:[%s1211 + $0x40] sm:$0xff] 11682.0
        %1221 = vst [vmem:[%s1211 + $0x48] sm:$0xff] 11682.0
        %1222 = vst [vmem:[%s1211 + $0x50] sm:$0xff] 11682.0
        %1223 = vst [vmem:[%s1211 + $0x58] sm:$0xff] 11682.0
        %1224 = vst [vmem:[%s1211 + $0x60] sm:$0xff] 11682.0
        %1225 = vst [vmem:[%s1211 + $0x68] sm:$0xff] 11682.0
        %1226 = vst [vmem:[%s1211 + $0x70] sm:$0xff] 11682.0
        %1227 = vst [vmem:[%s1211 + $0x78] sm:$0xff] 11682.0
        %1228 = vst [vmem:[%s1211 + $0x80] sm:$0xff] 11682.0
        %1229 = vst [vmem:[%s1211 + $0x88] sm:$0xff] 11682.0
        %1230 = vst [vmem:[%s1211 + $0x90] sm:$0xff] 11682.0
        %1231 = vst [vmem:[%s1211 + $0x98] sm:$0xff] 11682.0
        %1232 = vst [vmem:[%s1211 + $0xa0] sm:$0xff] 11682.0
        %1233 = vst [vmem:[%s1211 + $0xa8] sm:$0xff] 11682.0
        %1234 = vst [vmem:[%s1211 + $0xb0] sm:$0xff] 11682.0
        %1235 = vst [vmem:[%s1211 + $0xb8] sm:$0xff] 11682.0
        %1236 = vst [vmem:[%s1211 + $0xc0] sm:$0xff] 11682.0
        %1237 = vst [vmem:[%s1211 + $0xc8] sm:$0xff] 11682.0
        %1238 = vst [vmem:[%s1211 + $0xd0] sm:$0xff] 11682.0
        %1239 = vst [vmem:[%s1211 + $0xd8] sm:$0xff] 11682.0
        %1240 = vst [vmem:[%s1211 + $0xe0] sm:$0xff] 11682.0
        %1241 = vst [vmem:[%s1211 + $0xe8] sm:$0xff] 11682.0
        %1242 = vst [vmem:[%s1211 + $0xf0] sm:$0xff] 11682.0
        %1243 = vst [vmem:[%s1211 + $0xf8] sm:$0xff] 11682.0
        %1244 = vst [vmem:[%s1211 + $0x100] sm:$0xff] 11682.0
        %1245 = vst [vmem:[%s1211 + $0x108] sm:$0xff] 11682.0
        %1246 = vst [vmem:[%s1211 + $0x110] sm:$0xff] 11682.0
        %1247 = vst [vmem:[%s1211 + $0x118] sm:$0xff] 11682.0
        %1248 = vst [vmem:[%s1211 + $0x120] sm:$0xff] 11682.0
        %1249 = vst [vmem:[%s1211 + $0x128] sm:$0xff] 11682.0
        %1250 = vst [vmem:[%s1211 + $0x130] sm:$0xff] 11682.0
        %1251 = vst [vmem:[%s1211 + $0x138] sm:$0xff] 11682.0
        %1252 = vst [vmem:[%s1211 + $0x140] sm:$0xff] 11682.0
        %1253 = vst [vmem:[%s1211 + $0x148] sm:$0xff] 11682.0
        %1254 = vst [vmem:[%s1211 + $0x150] sm:$0xff] 11682.0
        %1255 = vst [vmem:[%s1211 + $0x158] sm:$0xff] 11682.0
        %1256 = vst [vmem:[%s1211 + $0x160] sm:$0xff] 11682.0
        %1257 = vst [vmem:[%s1211 + $0x168] sm:$0xff] 11682.0
        %1258 = vst [vmem:[%s1211 + $0x170] sm:$0xff] 11682.0
        %1259 = vst [vmem:[%s1211 + $0x178] sm:$0xff] 11682.0
        %1260 = vst [vmem:[%s1211 + $0x180] sm:$0xff] 11682.0
        %1261 = vst [vmem:[%s1211 + $0x188] sm:$0xff] 11682.0
        %1262 = vst [vmem:[%s1211 + $0x190] sm:$0xff] 11682.0
        %1263 = vst [vmem:[%s1211 + $0x198] sm:$0xff] 11682.0
        %1264 = vst [vmem:[%s1211 + $0x1a0] sm:$0xff] 11682.0
        %1265 = vst [vmem:[%s1211 + $0x1a8] sm:$0xff] 11682.0
        %1266 = vst [vmem:[%s1211 + $0x1b0] sm:$0xff] 11682.0
        %1267 = vst [vmem:[%s1211 + $0x1b8] sm:$0xff] 11682.0
        %1268 = vst [vmem:[%s1211 + $0x1c0] sm:$0xff] 11682.0
        %1269 = vst [vmem:[%s1211 + $0x1c8] sm:$0xff] 11682.0
        %1270 = vst [vmem:[%s1211 + $0x1d0] sm:$0xff] 11682.0
        %1271 = vst [vmem:[%s1211 + $0x1d8] sm:$0xff] 11682.0
        %1272 = vst [vmem:[%s1211 + $0x1e0] sm:$0xff] 11682.0
        %1273 = vst [vmem:[%s1211 + $0x1e8] sm:$0xff] 11682.0
        %1274 = vst [vmem:[%s1211 + $0x1f0] sm:$0xff] 11682.0
        %1275 = vst [vmem:[%s1211 + $0x1f8] sm:$0xff] 11682.0
        %s1276 = scalar_lea.vmem [#allocation2], 8704
        %1277 = vst [vmem:[%s1276] sm:$0xff] 23364.0
        %1278 = vst [vmem:[%s1276 + $0x8] sm:$0xff] 23364.0
        %1279 = vst [vmem:[%s1276 + $0x10] sm:$0xff] 23364.0
        %1280 = vst [vmem:[%s1276 + $0x18] sm:$0xff] 23364.0
        %1281 = vst [vmem:[%s1276 + $0x20] sm:$0xff] 23364.0
        %1282 = vst [vmem:[%s1276 + $0x28] sm:$0xff] 23364.0
        %1283 = vst [vmem:[%s1276 + $0x30] sm:$0xff] 23364.0
        %1284 = vst [vmem:[%s1276 + $0x38] sm:$0xff] 23364.0
        %1285 = vst [vmem:[%s1276 + $0x40] sm:$0xff] 23364.0
        %1286 = vst [vmem:[%s1276 + $0x48] sm:$0xff] 23364.0
        %1287 = vst [vmem:[%s1276 + $0x50] sm:$0xff] 23364.0
        %1288 = vst [vmem:[%s1276 + $0x58] sm:$0xff] 23364.0
        %1289 = vst [vmem:[%s1276 + $0x60] sm:$0xff] 23364.0
        %1290 = vst [vmem:[%s1276 + $0x68] sm:$0xff] 23364.0
        %1291 = vst [vmem:[%s1276 + $0x70] sm:$0xff] 23364.0
        %1292 = vst [vmem:[%s1276 + $0x78] sm:$0xff] 23364.0
        %1293 = vst [vmem:[%s1276 + $0x80] sm:$0xff] 23364.0
        %1294 = vst [vmem:[%s1276 + $0x88] sm:$0xff] 23364.0
        %1295 = vst [vmem:[%s1276 + $0x90] sm:$0xff] 23364.0
        %1296 = vst [vmem:[%s1276 + $0x98] sm:$0xff] 23364.0
        %1297 = vst [vmem:[%s1276 + $0xa0] sm:$0xff] 23364.0
        %1298 = vst [vmem:[%s1276 + $0xa8] sm:$0xff] 23364.0
        %1299 = vst [vmem:[%s1276 + $0xb0] sm:$0xff] 23364.0
        %1300 = vst [vmem:[%s1276 + $0xb8] sm:$0xff] 23364.0
        %1301 = vst [vmem:[%s1276 + $0xc0] sm:$0xff] 23364.0
        %1302 = vst [vmem:[%s1276 + $0xc8] sm:$0xff] 23364.0
        %1303 = vst [vmem:[%s1276 + $0xd0] sm:$0xff] 23364.0
        %1304 = vst [vmem:[%s1276 + $0xd8] sm:$0xff] 23364.0
        %1305 = vst [vmem:[%s1276 + $0xe0] sm:$0xff] 23364.0
        %1306 = vst [vmem:[%s1276 + $0xe8] sm:$0xff] 23364.0
        %1307 = vst [vmem:[%s1276 + $0xf0] sm:$0xff] 23364.0
        %1308 = vst [vmem:[%s1276 + $0xf8] sm:$0xff] 23364.0
        %1309 = vst [vmem:[%s1276 + $0x100] sm:$0xff] 23364.0
        %1310 = vst [vmem:[%s1276 + $0x108] sm:$0xff] 23364.0
        %1311 = vst [vmem:[%s1276 + $0x110] sm:$0xff] 23364.0
        %1312 = vst [vmem:[%s1276 + $0x118] sm:$0xff] 23364.0
        %1313 = vst [vmem:[%s1276 + $0x120] sm:$0xff] 23364.0
        %1314 = vst [vmem:[%s1276 + $0x128] sm:$0xff] 23364.0
        %1315 = vst [vmem:[%s1276 + $0x130] sm:$0xff] 23364.0
        %1316 = vst [vmem:[%s1276 + $0x138] sm:$0xff] 23364.0
        %1317 = vst [vmem:[%s1276 + $0x140] sm:$0xff] 23364.0
        %1318 = vst [vmem:[%s1276 + $0x148] sm:$0xff] 23364.0
        %1319 = vst [vmem:[%s1276 + $0x150] sm:$0xff] 23364.0
        %1320 = vst [vmem:[%s1276 + $0x158] sm:$0xff] 23364.0
        %1321 = vst [vmem:[%s1276 + $0x160] sm:$0xff] 23364.0
        %1322 = vst [vmem:[%s1276 + $0x168] sm:$0xff] 23364.0
        %1323 = vst [vmem:[%s1276 + $0x170] sm:$0xff] 23364.0
        %1324 = vst [vmem:[%s1276 + $0x178] sm:$0xff] 23364.0
        %1325 = vst [vmem:[%s1276 + $0x180] sm:$0xff] 23364.0
        %1326 = vst [vmem:[%s1276 + $0x188] sm:$0xff] 23364.0
        %1327 = vst [vmem:[%s1276 + $0x190] sm:$0xff] 23364.0
        %1328 = vst [vmem:[%s1276 + $0x198] sm:$0xff] 23364.0
        %1329 = vst [vmem:[%s1276 + $0x1a0] sm:$0xff] 23364.0
        %1330 = vst [vmem:[%s1276 + $0x1a8] sm:$0xff] 23364.0
        %1331 = vst [vmem:[%s1276 + $0x1b0] sm:$0xff] 23364.0
        %1332 = vst [vmem:[%s1276 + $0x1b8] sm:$0xff] 23364.0
        %1333 = vst [vmem:[%s1276 + $0x1c0] sm:$0xff] 23364.0
        %1334 = vst [vmem:[%s1276 + $0x1c8] sm:$0xff] 23364.0
        %1335 = vst [vmem:[%s1276 + $0x1d0] sm:$0xff] 23364.0
        %1336 = vst [vmem:[%s1276 + $0x1d8] sm:$0xff] 23364.0
        %1337 = vst [vmem:[%s1276 + $0x1e0] sm:$0xff] 23364.0
        %1338 = vst [vmem:[%s1276 + $0x1e8] sm:$0xff] 23364.0
        %1339 = vst [vmem:[%s1276 + $0x1f0] sm:$0xff] 23364.0
        %1340 = vst [vmem:[%s1276 + $0x1f8] sm:$0xff] 23364.0
        %s1341 = scalar_lea.vmem [#allocation2], 9216
        %1342 = vst [vmem:[%s1341] sm:$0xff] 3.1884645e+12
        %1343 = vst [vmem:[%s1341 + $0x8] sm:$0xff] 3.1884645e+12
        %1344 = vst [vmem:[%s1341 + $0x10] sm:$0xff] 3.1884645e+12
        %1345 = vst [vmem:[%s1341 + $0x18] sm:$0xff] 3.1884645e+12
        %1346 = vst [vmem:[%s1341 + $0x20] sm:$0xff] 3.1884645e+12
        %1347 = vst [vmem:[%s1341 + $0x28] sm:$0xff] 3.1884645e+12
        %1348 = vst [vmem:[%s1341 + $0x30] sm:$0xff] 3.1884645e+12
        %1349 = vst [vmem:[%s1341 + $0x38] sm:$0xff] 3.1884645e+12
        %1350 = vst [vmem:[%s1341 + $0x40] sm:$0xff] 3.1884645e+12
        %1351 = vst [vmem:[%s1341 + $0x48] sm:$0xff] 3.1884645e+12
        %1352 = vst [vmem:[%s1341 + $0x50] sm:$0xff] 3.1884645e+12
        %1353 = vst [vmem:[%s1341 + $0x58] sm:$0xff] 3.1884645e+12
        %1354 = vst [vmem:[%s1341 + $0x60] sm:$0xff] 3.1884645e+12
        %1355 = vst [vmem:[%s1341 + $0x68] sm:$0xff] 3.1884645e+12
        %1356 = vst [vmem:[%s1341 + $0x70] sm:$0xff] 3.1884645e+12
        %1357 = vst [vmem:[%s1341 + $0x78] sm:$0xff] 3.1884645e+12
        %1358 = vst [vmem:[%s1341 + $0x80] sm:$0xff] 3.1884645e+12
        %1359 = vst [vmem:[%s1341 + $0x88] sm:$0xff] 3.1884645e+12
        %1360 = vst [vmem:[%s1341 + $0x90] sm:$0xff] 3.1884645e+12
        %1361 = vst [vmem:[%s1341 + $0x98] sm:$0xff] 3.1884645e+12
        %1362 = vst [vmem:[%s1341 + $0xa0] sm:$0xff] 3.1884645e+12
        %1363 = vst [vmem:[%s1341 + $0xa8] sm:$0xff] 3.1884645e+12
        %1364 = vst [vmem:[%s1341 + $0xb0] sm:$0xff] 3.1884645e+12
        %1365 = vst [vmem:[%s1341 + $0xb8] sm:$0xff] 3.1884645e+12
        %1366 = vst [vmem:[%s1341 + $0xc0] sm:$0xff] 3.1884645e+12
        %1367 = vst [vmem:[%s1341 + $0xc8] sm:$0xff] 3.1884645e+12
        %1368 = vst [vmem:[%s1341 + $0xd0] sm:$0xff] 3.1884645e+12
        %1369 = vst [vmem:[%s1341 + $0xd8] sm:$0xff] 3.1884645e+12
        %1370 = vst [vmem:[%s1341 + $0xe0] sm:$0xff] 3.1884645e+12
        %1371 = vst [vmem:[%s1341 + $0xe8] sm:$0xff] 3.1884645e+12
        %1372 = vst [vmem:[%s1341 + $0xf0] sm:$0xff] 3.1884645e+12
        %1373 = vst [vmem:[%s1341 + $0xf8] sm:$0xff] 3.1884645e+12
        %1374 = vst [vmem:[%s1341 + $0x100] sm:$0xff] 3.1884645e+12
        %1375 = vst [vmem:[%s1341 + $0x108] sm:$0xff] 3.1884645e+12
        %1376 = vst [vmem:[%s1341 + $0x110] sm:$0xff] 3.1884645e+12
        %1377 = vst [vmem:[%s1341 + $0x118] sm:$0xff] 3.1884645e+12
        %1378 = vst [vmem:[%s1341 + $0x120] sm:$0xff] 3.1884645e+12
        %1379 = vst [vmem:[%s1341 + $0x128] sm:$0xff] 3.1884645e+12
        %1380 = vst [vmem:[%s1341 + $0x130] sm:$0xff] 3.1884645e+12
        %1381 = vst [vmem:[%s1341 + $0x138] sm:$0xff] 3.1884645e+12
        %1382 = vst [vmem:[%s1341 + $0x140] sm:$0xff] 3.1884645e+12
        %1383 = vst [vmem:[%s1341 + $0x148] sm:$0xff] 3.1884645e+12
        %1384 = vst [vmem:[%s1341 + $0x150] sm:$0xff] 3.1884645e+12
        %1385 = vst [vmem:[%s1341 + $0x158] sm:$0xff] 3.1884645e+12
        %1386 = vst [vmem:[%s1341 + $0x160] sm:$0xff] 3.1884645e+12
        %1387 = vst [vmem:[%s1341 + $0x168] sm:$0xff] 3.1884645e+12
        %1388 = vst [vmem:[%s1341 + $0x170] sm:$0xff] 3.1884645e+12
        %1389 = vst [vmem:[%s1341 + $0x178] sm:$0xff] 3.1884645e+12
        %1390 = vst [vmem:[%s1341 + $0x180] sm:$0xff] 3.1884645e+12
        %1391 = vst [vmem:[%s1341 + $0x188] sm:$0xff] 3.1884645e+12
        %1392 = vst [vmem:[%s1341 + $0x190] sm:$0xff] 3.1884645e+12
        %1393 = vst [vmem:[%s1341 + $0x198] sm:$0xff] 3.1884645e+12
        %1394 = vst [vmem:[%s1341 + $0x1a0] sm:$0xff] 3.1884645e+12
        %1395 = vst [vmem:[%s1341 + $0x1a8] sm:$0xff] 3.1884645e+12
        %1396 = vst [vmem:[%s1341 + $0x1b0] sm:$0xff] 3.1884645e+12
        %1397 = vst [vmem:[%s1341 + $0x1b8] sm:$0xff] 3.1884645e+12
        %1398 = vst [vmem:[%s1341 + $0x1c0] sm:$0xff] 3.1884645e+12
        %1399 = vst [vmem:[%s1341 + $0x1c8] sm:$0xff] 3.1884645e+12
        %1400 = vst [vmem:[%s1341 + $0x1d0] sm:$0xff] 3.1884645e+12
        %1401 = vst [vmem:[%s1341 + $0x1d8] sm:$0xff] 3.1884645e+12
        %1402 = vst [vmem:[%s1341 + $0x1e0] sm:$0xff] 3.1884645e+12
        %1403 = vst [vmem:[%s1341 + $0x1e8] sm:$0xff] 3.1884645e+12
        %1404 = vst [vmem:[%s1341 + $0x1f0] sm:$0xff] 3.1884645e+12
        %1405 = vst [vmem:[%s1341 + $0x1f8] sm:$0xff] 3.1884645e+12
        %s1406 = scalar_lea.vmem [#allocation2], 9728
        %1407 = vst [vmem:[%s1406] sm:$0xff] 6.376929e+12
        %1408 = vst [vmem:[%s1406 + $0x8] sm:$0xff] 6.376929e+12
        %1409 = vst [vmem:[%s1406 + $0x10] sm:$0xff] 6.376929e+12
        %1410 = vst [vmem:[%s1406 + $0x18] sm:$0xff] 6.376929e+12
        %1411 = vst [vmem:[%s1406 + $0x20] sm:$0xff] 6.376929e+12
        %1412 = vst [vmem:[%s1406 + $0x28] sm:$0xff] 6.376929e+12
        %1413 = vst [vmem:[%s1406 + $0x30] sm:$0xff] 6.376929e+12
        %1414 = vst [vmem:[%s1406 + $0x38] sm:$0xff] 6.376929e+12
        %1415 = vst [vmem:[%s1406 + $0x40] sm:$0xff] 6.376929e+12
        %1416 = vst [vmem:[%s1406 + $0x48] sm:$0xff] 6.376929e+12
        %1417 = vst [vmem:[%s1406 + $0x50] sm:$0xff] 6.376929e+12
        %1418 = vst [vmem:[%s1406 + $0x58] sm:$0xff] 6.376929e+12
        %1419 = vst [vmem:[%s1406 + $0x60] sm:$0xff] 6.376929e+12
        %1420 = vst [vmem:[%s1406 + $0x68] sm:$0xff] 6.376929e+12
        %1421 = vst [vmem:[%s1406 + $0x70] sm:$0xff] 6.376929e+12
        %1422 = vst [vmem:[%s1406 + $0x78] sm:$0xff] 6.376929e+12
        %1423 = vst [vmem:[%s1406 + $0x80] sm:$0xff] 6.376929e+12
        %1424 = vst [vmem:[%s1406 + $0x88] sm:$0xff] 6.376929e+12
        %1425 = vst [vmem:[%s1406 + $0x90] sm:$0xff] 6.376929e+12
        %1426 = vst [vmem:[%s1406 + $0x98] sm:$0xff] 6.376929e+12
        %1427 = vst [vmem:[%s1406 + $0xa0] sm:$0xff] 6.376929e+12
        %1428 = vst [vmem:[%s1406 + $0xa8] sm:$0xff] 6.376929e+12
        %1429 = vst [vmem:[%s1406 + $0xb0] sm:$0xff] 6.376929e+12
        %1430 = vst [vmem:[%s1406 + $0xb8] sm:$0xff] 6.376929e+12
        %1431 = vst [vmem:[%s1406 + $0xc0] sm:$0xff] 6.376929e+12
        %1432 = vst [vmem:[%s1406 + $0xc8] sm:$0xff] 6.376929e+12
        %1433 = vst [vmem:[%s1406 + $0xd0] sm:$0xff] 6.376929e+12
        %1434 = vst [vmem:[%s1406 + $0xd8] sm:$0xff] 6.376929e+12
        %1435 = vst [vmem:[%s1406 + $0xe0] sm:$0xff] 6.376929e+12
        %1436 = vst [vmem:[%s1406 + $0xe8] sm:$0xff] 6.376929e+12
        %1437 = vst [vmem:[%s1406 + $0xf0] sm:$0xff] 6.376929e+12
        %1438 = vst [vmem:[%s1406 + $0xf8] sm:$0xff] 6.376929e+12
        %1439 = vst [vmem:[%s1406 + $0x100] sm:$0xff] 6.376929e+12
        %1440 = vst [vmem:[%s1406 + $0x108] sm:$0xff] 6.376929e+12
        %1441 = vst [vmem:[%s1406 + $0x110] sm:$0xff] 6.376929e+12
        %1442 = vst [vmem:[%s1406 + $0x118] sm:$0xff] 6.376929e+12
        %1443 = vst [vmem:[%s1406 + $0x120] sm:$0xff] 6.376929e+12
        %1444 = vst [vmem:[%s1406 + $0x128] sm:$0xff] 6.376929e+12
        %1445 = vst [vmem:[%s1406 + $0x130] sm:$0xff] 6.376929e+12
        %1446 = vst [vmem:[%s1406 + $0x138] sm:$0xff] 6.376929e+12
        %1447 = vst [vmem:[%s1406 + $0x140] sm:$0xff] 6.376929e+12
        %1448 = vst [vmem:[%s1406 + $0x148] sm:$0xff] 6.376929e+12
        %1449 = vst [vmem:[%s1406 + $0x150] sm:$0xff] 6.376929e+12
        %1450 = vst [vmem:[%s1406 + $0x158] sm:$0xff] 6.376929e+12
        %1451 = vst [vmem:[%s1406 + $0x160] sm:$0xff] 6.376929e+12
        %1452 = vst [vmem:[%s1406 + $0x168] sm:$0xff] 6.376929e+12
        %1453 = vst [vmem:[%s1406 + $0x170] sm:$0xff] 6.376929e+12
        %1454 = vst [vmem:[%s1406 + $0x178] sm:$0xff] 6.376929e+12
        %1455 = vst [vmem:[%s1406 + $0x180] sm:$0xff] 6.376929e+12
        %1456 = vst [vmem:[%s1406 + $0x188] sm:$0xff] 6.376929e+12
        %1457 = vst [vmem:[%s1406 + $0x190] sm:$0xff] 6.376929e+12
        %1458 = vst [vmem:[%s1406 + $0x198] sm:$0xff] 6.376929e+12
        %1459 = vst [vmem:[%s1406 + $0x1a0] sm:$0xff] 6.376929e+12
        %1460 = vst [vmem:[%s1406 + $0x1a8] sm:$0xff] 6.376929e+12
        %1461 = vst [vmem:[%s1406 + $0x1b0] sm:$0xff] 6.376929e+12
        %1462 = vst [vmem:[%s1406 + $0x1b8] sm:$0xff] 6.376929e+12
        %1463 = vst [vmem:[%s1406 + $0x1c0] sm:$0xff] 6.376929e+12
        %1464 = vst [vmem:[%s1406 + $0x1c8] sm:$0xff] 6.376929e+12
        %1465 = vst [vmem:[%s1406 + $0x1d0] sm:$0xff] 6.376929e+12
        %1466 = vst [vmem:[%s1406 + $0x1d8] sm:$0xff] 6.376929e+12
        %1467 = vst [vmem:[%s1406 + $0x1e0] sm:$0xff] 6.376929e+12
        %1468 = vst [vmem:[%s1406 + $0x1e8] sm:$0xff] 6.376929e+12
        %1469 = vst [vmem:[%s1406 + $0x1f0] sm:$0xff] 6.376929e+12
        %1470 = vst [vmem:[%s1406 + $0x1f8] sm:$0xff] 6.376929e+12
        %s1471 = scalar_lea.vmem [#allocation2], 10240
        %1472 = vst [vmem:[%s1471] sm:$0xff] 6.482981e+37
        %1473 = vst [vmem:[%s1471 + $0x8] sm:$0xff] 6.482981e+37
        %1474 = vst [vmem:[%s1471 + $0x10] sm:$0xff] 6.482981e+37
        %1475 = vst [vmem:[%s1471 + $0x18] sm:$0xff] 6.482981e+37
        %1476 = vst [vmem:[%s1471 + $0x20] sm:$0xff] 6.482981e+37
        %1477 = vst [vmem:[%s1471 + $0x28] sm:$0xff] 6.482981e+37
        %1478 = vst [vmem:[%s1471 + $0x30] sm:$0xff] 6.482981e+37
        %1479 = vst [vmem:[%s1471 + $0x38] sm:$0xff] 6.482981e+37
        %1480 = vst [vmem:[%s1471 + $0x40] sm:$0xff] 6.482981e+37
        %1481 = vst [vmem:[%s1471 + $0x48] sm:$0xff] 6.482981e+37
        %1482 = vst [vmem:[%s1471 + $0x50] sm:$0xff] 6.482981e+37
        %1483 = vst [vmem:[%s1471 + $0x58] sm:$0xff] 6.482981e+37
        %1484 = vst [vmem:[%s1471 + $0x60] sm:$0xff] 6.482981e+37
        %1485 = vst [vmem:[%s1471 + $0x68] sm:$0xff] 6.482981e+37
        %1486 = vst [vmem:[%s1471 + $0x70] sm:$0xff] 6.482981e+37
        %1487 = vst [vmem:[%s1471 + $0x78] sm:$0xff] 6.482981e+37
        %1488 = vst [vmem:[%s1471 + $0x80] sm:$0xff] 6.482981e+37
        %1489 = vst [vmem:[%s1471 + $0x88] sm:$0xff] 6.482981e+37
        %1490 = vst [vmem:[%s1471 + $0x90] sm:$0xff] 6.482981e+37
        %1491 = vst [vmem:[%s1471 + $0x98] sm:$0xff] 6.482981e+37
        %1492 = vst [vmem:[%s1471 + $0xa0] sm:$0xff] 6.482981e+37
        %1493 = vst [vmem:[%s1471 + $0xa8] sm:$0xff] 6.482981e+37
        %1494 = vst [vmem:[%s1471 + $0xb0] sm:$0xff] 6.482981e+37
        %1495 = vst [vmem:[%s1471 + $0xb8] sm:$0xff] 6.482981e+37
        %1496 = vst [vmem:[%s1471 + $0xc0] sm:$0xff] 6.482981e+37
        %1497 = vst [vmem:[%s1471 + $0xc8] sm:$0xff] 6.482981e+37
        %1498 = vst [vmem:[%s1471 + $0xd0] sm:$0xff] 6.482981e+37
        %1499 = vst [vmem:[%s1471 + $0xd8] sm:$0xff] 6.482981e+37
        %1500 = vst [vmem:[%s1471 + $0xe0] sm:$0xff] 6.482981e+37
        %1501 = vst [vmem:[%s1471 + $0xe8] sm:$0xff] 6.482981e+37
        %1502 = vst [vmem:[%s1471 + $0xf0] sm:$0xff] 6.482981e+37
        %1503 = vst [vmem:[%s1471 + $0xf8] sm:$0xff] 6.482981e+37
        %1504 = vst [vmem:[%s1471 + $0x100] sm:$0xff] 6.482981e+37
        %1505 = vst [vmem:[%s1471 + $0x108] sm:$0xff] 6.482981e+37
        %1506 = vst [vmem:[%s1471 + $0x110] sm:$0xff] 6.482981e+37
        %1507 = vst [vmem:[%s1471 + $0x118] sm:$0xff] 6.482981e+37
        %1508 = vst [vmem:[%s1471 + $0x120] sm:$0xff] 6.482981e+37
        %1509 = vst [vmem:[%s1471 + $0x128] sm:$0xff] 6.482981e+37
        %1510 = vst [vmem:[%s1471 + $0x130] sm:$0xff] 6.482981e+37
        %1511 = vst [vmem:[%s1471 + $0x138] sm:$0xff] 6.482981e+37
        %1512 = vst [vmem:[%s1471 + $0x140] sm:$0xff] 6.482981e+37
        %1513 = vst [vmem:[%s1471 + $0x148] sm:$0xff] 6.482981e+37
        %1514 = vst [vmem:[%s1471 + $0x150] sm:$0xff] 6.482981e+37
        %1515 = vst [vmem:[%s1471 + $0x158] sm:$0xff] 6.482981e+37
        %1516 = vst [vmem:[%s1471 + $0x160] sm:$0xff] 6.482981e+37
        %1517 = vst [vmem:[%s1471 + $0x168] sm:$0xff] 6.482981e+37
        %1518 = vst [vmem:[%s1471 + $0x170] sm:$0xff] 6.482981e+37
        %1519 = vst [vmem:[%s1471 + $0x178] sm:$0xff] 6.482981e+37
        %1520 = vst [vmem:[%s1471 + $0x180] sm:$0xff] 6.482981e+37
        %1521 = vst [vmem:[%s1471 + $0x188] sm:$0xff] 6.482981e+37
        %1522 = vst [vmem:[%s1471 + $0x190] sm:$0xff] 6.482981e+37
        %1523 = vst [vmem:[%s1471 + $0x198] sm:$0xff] 6.482981e+37
        %1524 = vst [vmem:[%s1471 + $0x1a0] sm:$0xff] 6.482981e+37
        %1525 = vst [vmem:[%s1471 + $0x1a8] sm:$0xff] 6.482981e+37
        %1526 = vst [vmem:[%s1471 + $0x1b0] sm:$0xff] 6.482981e+37
        %1527 = vst [vmem:[%s1471 + $0x1b8] sm:$0xff] 6.482981e+37
        %1528 = vst [vmem:[%s1471 + $0x1c0] sm:$0xff] 6.482981e+37
        %1529 = vst [vmem:[%s1471 + $0x1c8] sm:$0xff] 6.482981e+37
        %1530 = vst [vmem:[%s1471 + $0x1d0] sm:$0xff] 6.482981e+37
        %1531 = vst [vmem:[%s1471 + $0x1d8] sm:$0xff] 6.482981e+37
        %1532 = vst [vmem:[%s1471 + $0x1e0] sm:$0xff] 6.482981e+37
        %1533 = vst [vmem:[%s1471 + $0x1e8] sm:$0xff] 6.482981e+37
        %1534 = vst [vmem:[%s1471 + $0x1f0] sm:$0xff] 6.482981e+37
        %1535 = vst [vmem:[%s1471 + $0x1f8] sm:$0xff] 6.482981e+37
        %s1536 = scalar_lea.vmem [#allocation2], 10752
        %1537 = vst [vmem:[%s1536] sm:$0xff] 1.2965962e+38
        %1538 = vst [vmem:[%s1536 + $0x8] sm:$0xff] 1.2965962e+38
        %1539 = vst [vmem:[%s1536 + $0x10] sm:$0xff] 1.2965962e+38
        %1540 = vst [vmem:[%s1536 + $0x18] sm:$0xff] 1.2965962e+38
        %1541 = vst [vmem:[%s1536 + $0x20] sm:$0xff] 1.2965962e+38
        %1542 = vst [vmem:[%s1536 + $0x28] sm:$0xff] 1.2965962e+38
        %1543 = vst [vmem:[%s1536 + $0x30] sm:$0xff] 1.2965962e+38
        %1544 = vst [vmem:[%s1536 + $0x38] sm:$0xff] 1.2965962e+38
        %1545 = vst [vmem:[%s1536 + $0x40] sm:$0xff] 1.2965962e+38
        %1546 = vst [vmem:[%s1536 + $0x48] sm:$0xff] 1.2965962e+38
        %1547 = vst [vmem:[%s1536 + $0x50] sm:$0xff] 1.2965962e+38
        %1548 = vst [vmem:[%s1536 + $0x58] sm:$0xff] 1.2965962e+38
        %1549 = vst [vmem:[%s1536 + $0x60] sm:$0xff] 1.2965962e+38
        %1550 = vst [vmem:[%s1536 + $0x68] sm:$0xff] 1.2965962e+38
        %1551 = vst [vmem:[%s1536 + $0x70] sm:$0xff] 1.2965962e+38
        %1552 = vst [vmem:[%s1536 + $0x78] sm:$0xff] 1.2965962e+38
        %1553 = vst [vmem:[%s1536 + $0x80] sm:$0xff] 1.2965962e+38
        %1554 = vst [vmem:[%s1536 + $0x88] sm:$0xff] 1.2965962e+38
        %1555 = vst [vmem:[%s1536 + $0x90] sm:$0xff] 1.2965962e+38
        %1556 = vst [vmem:[%s1536 + $0x98] sm:$0xff] 1.2965962e+38
        %1557 = vst [vmem:[%s1536 + $0xa0] sm:$0xff] 1.2965962e+38
        %1558 = vst [vmem:[%s1536 + $0xa8] sm:$0xff] 1.2965962e+38
        %1559 = vst [vmem:[%s1536 + $0xb0] sm:$0xff] 1.2965962e+38
        %1560 = vst [vmem:[%s1536 + $0xb8] sm:$0xff] 1.2965962e+38
        %1561 = vst [vmem:[%s1536 + $0xc0] sm:$0xff] 1.2965962e+38
        %1562 = vst [vmem:[%s1536 + $0xc8] sm:$0xff] 1.2965962e+38
        %1563 = vst [vmem:[%s1536 + $0xd0] sm:$0xff] 1.2965962e+38
        %1564 = vst [vmem:[%s1536 + $0xd8] sm:$0xff] 1.2965962e+38
        %1565 = vst [vmem:[%s1536 + $0xe0] sm:$0xff] 1.2965962e+38
        %1566 = vst [vmem:[%s1536 + $0xe8] sm:$0xff] 1.2965962e+38
        %1567 = vst [vmem:[%s1536 + $0xf0] sm:$0xff] 1.2965962e+38
        %1568 = vst [vmem:[%s1536 + $0xf8] sm:$0xff] 1.2965962e+38
        %1569 = vst [vmem:[%s1536 + $0x100] sm:$0xff] 1.2965962e+38
        %1570 = vst [vmem:[%s1536 + $0x108] sm:$0xff] 1.2965962e+38
        %1571 = vst [vmem:[%s1536 + $0x110] sm:$0xff] 1.2965962e+38
        %1572 = vst [vmem:[%s1536 + $0x118] sm:$0xff] 1.2965962e+38
        %1573 = vst [vmem:[%s1536 + $0x120] sm:$0xff] 1.2965962e+38
        %1574 = vst [vmem:[%s1536 + $0x128] sm:$0xff] 1.2965962e+38
        %1575 = vst [vmem:[%s1536 + $0x130] sm:$0xff] 1.2965962e+38
        %1576 = vst [vmem:[%s1536 + $0x138] sm:$0xff] 1.2965962e+38
        %1577 = vst [vmem:[%s1536 + $0x140] sm:$0xff] 1.2965962e+38
        %1578 = vst [vmem:[%s1536 + $0x148] sm:$0xff] 1.2965962e+38
        %1579 = vst [vmem:[%s1536 + $0x150] sm:$0xff] 1.2965962e+38
        %1580 = vst [vmem:[%s1536 + $0x158] sm:$0xff] 1.2965962e+38
        %1581 = vst [vmem:[%s1536 + $0x160] sm:$0xff] 1.2965962e+38
        %1582 = vst [vmem:[%s1536 + $0x168] sm:$0xff] 1.2965962e+38
        %1583 = vst [vmem:[%s1536 + $0x170] sm:$0xff] 1.2965962e+38
        %1584 = vst [vmem:[%s1536 + $0x178] sm:$0xff] 1.2965962e+38
        %1585 = vst [vmem:[%s1536 + $0x180] sm:$0xff] 1.2965962e+38
        %1586 = vst [vmem:[%s1536 + $0x188] sm:$0xff] 1.2965962e+38
        %1587 = vst [vmem:[%s1536 + $0x190] sm:$0xff] 1.2965962e+38
        %1588 = vst [vmem:[%s1536 + $0x198] sm:$0xff] 1.2965962e+38
        %1589 = vst [vmem:[%s1536 + $0x1a0] sm:$0xff] 1.2965962e+38
        %1590 = vst [vmem:[%s1536 + $0x1a8] sm:$0xff] 1.2965962e+38
        %1591 = vst [vmem:[%s1536 + $0x1b0] sm:$0xff] 1.2965962e+38
        %1592 = vst [vmem:[%s1536 + $0x1b8] sm:$0xff] 1.2965962e+38
        %1593 = vst [vmem:[%s1536 + $0x1c0] sm:$0xff] 1.2965962e+38
        %1594 = vst [vmem:[%s1536 + $0x1c8] sm:$0xff] 1.2965962e+38
        %1595 = vst [vmem:[%s1536 + $0x1d0] sm:$0xff] 1.2965962e+38
        %1596 = vst [vmem:[%s1536 + $0x1d8] sm:$0xff] 1.2965962e+38
        %1597 = vst [vmem:[%s1536 + $0x1e0] sm:$0xff] 1.2965962e+38
        %1598 = vst [vmem:[%s1536 + $0x1e8] sm:$0xff] 1.2965962e+38
        %1599 = vst [vmem:[%s1536 + $0x1f0] sm:$0xff] 1.2965962e+38
        %1600 = vst [vmem:[%s1536 + $0x1f8] sm:$0xff] 1.2965962e+38
        %s1601 = scalar_lea.vmem [#allocation2], 11264
        %1602 = vst [vmem:[%s1601] sm:$0xff] inf
        %1603 = vst [vmem:[%s1601 + $0x8] sm:$0xff] inf
        %1604 = vst [vmem:[%s1601 + $0x10] sm:$0xff] inf
        %1605 = vst [vmem:[%s1601 + $0x18] sm:$0xff] inf
        %1606 = vst [vmem:[%s1601 + $0x20] sm:$0xff] inf
        %1607 = vst [vmem:[%s1601 + $0x28] sm:$0xff] inf
        %1608 = vst [vmem:[%s1601 + $0x30] sm:$0xff] inf
        %1609 = vst [vmem:[%s1601 + $0x38] sm:$0xff] inf
        %1610 = vst [vmem:[%s1601 + $0x40] sm:$0xff] inf
        %1611 = vst [vmem:[%s1601 + $0x48] sm:$0xff] inf
        %1612 = vst [vmem:[%s1601 + $0x50] sm:$0xff] inf
        %1613 = vst [vmem:[%s1601 + $0x58] sm:$0xff] inf
        %1614 = vst [vmem:[%s1601 + $0x60] sm:$0xff] inf
        %1615 = vst [vmem:[%s1601 + $0x68] sm:$0xff] inf
        %1616 = vst [vmem:[%s1601 + $0x70] sm:$0xff] inf
        %1617 = vst [vmem:[%s1601 + $0x78] sm:$0xff] inf
        %1618 = vst [vmem:[%s1601 + $0x80] sm:$0xff] inf
        %1619 = vst [vmem:[%s1601 + $0x88] sm:$0xff] inf
        %1620 = vst [vmem:[%s1601 + $0x90] sm:$0xff] inf
        %1621 = vst [vmem:[%s1601 + $0x98] sm:$0xff] inf
        %1622 = vst [vmem:[%s1601 + $0xa0] sm:$0xff] inf
        %1623 = vst [vmem:[%s1601 + $0xa8] sm:$0xff] inf
        %1624 = vst [vmem:[%s1601 + $0xb0] sm:$0xff] inf
        %1625 = vst [vmem:[%s1601 + $0xb8] sm:$0xff] inf
        %1626 = vst [vmem:[%s1601 + $0xc0] sm:$0xff] inf
        %1627 = vst [vmem:[%s1601 + $0xc8] sm:$0xff] inf
        %1628 = vst [vmem:[%s1601 + $0xd0] sm:$0xff] inf
        %1629 = vst [vmem:[%s1601 + $0xd8] sm:$0xff] inf
        %1630 = vst [vmem:[%s1601 + $0xe0] sm:$0xff] inf
        %1631 = vst [vmem:[%s1601 + $0xe8] sm:$0xff] inf
        %1632 = vst [vmem:[%s1601 + $0xf0] sm:$0xff] inf
        %1633 = vst [vmem:[%s1601 + $0xf8] sm:$0xff] inf
        %1634 = vst [vmem:[%s1601 + $0x100] sm:$0xff] inf
        %1635 = vst [vmem:[%s1601 + $0x108] sm:$0xff] inf
        %1636 = vst [vmem:[%s1601 + $0x110] sm:$0xff] inf
        %1637 = vst [vmem:[%s1601 + $0x118] sm:$0xff] inf
        %1638 = vst [vmem:[%s1601 + $0x120] sm:$0xff] inf
        %1639 = vst [vmem:[%s1601 + $0x128] sm:$0xff] inf
        %1640 = vst [vmem:[%s1601 + $0x130] sm:$0xff] inf
        %1641 = vst [vmem:[%s1601 + $0x138] sm:$0xff] inf
        %1642 = vst [vmem:[%s1601 + $0x140] sm:$0xff] inf
        %1643 = vst [vmem:[%s1601 + $0x148] sm:$0xff] inf
        %1644 = vst [vmem:[%s1601 + $0x150] sm:$0xff] inf
        %1645 = vst [vmem:[%s1601 + $0x158] sm:$0xff] inf
        %1646 = vst [vmem:[%s1601 + $0x160] sm:$0xff] inf
        %1647 = vst [vmem:[%s1601 + $0x168] sm:$0xff] inf
        %1648 = vst [vmem:[%s1601 + $0x170] sm:$0xff] inf
        %1649 = vst [vmem:[%s1601 + $0x178] sm:$0xff] inf
        %1650 = vst [vmem:[%s1601 + $0x180] sm:$0xff] inf
        %1651 = vst [vmem:[%s1601 + $0x188] sm:$0xff] inf
        %1652 = vst [vmem:[%s1601 + $0x190] sm:$0xff] inf
        %1653 = vst [vmem:[%s1601 + $0x198] sm:$0xff] inf
        %1654 = vst [vmem:[%s1601 + $0x1a0] sm:$0xff] inf
        %1655 = vst [vmem:[%s1601 + $0x1a8] sm:$0xff] inf
        %1656 = vst [vmem:[%s1601 + $0x1b0] sm:$0xff] inf
        %1657 = vst [vmem:[%s1601 + $0x1b8] sm:$0xff] inf
        %1658 = vst [vmem:[%s1601 + $0x1c0] sm:$0xff] inf
        %1659 = vst [vmem:[%s1601 + $0x1c8] sm:$0xff] inf
        %1660 = vst [vmem:[%s1601 + $0x1d0] sm:$0xff] inf
        %1661 = vst [vmem:[%s1601 + $0x1d8] sm:$0xff] inf
        %1662 = vst [vmem:[%s1601 + $0x1e0] sm:$0xff] inf
        %1663 = vst [vmem:[%s1601 + $0x1e8] sm:$0xff] inf
        %1664 = vst [vmem:[%s1601 + $0x1f0] sm:$0xff] inf
        %1665 = vst [vmem:[%s1601 + $0x1f8] sm:$0xff] inf
        %s1666 = scalar_lea.vmem [#allocation2], 11776
        %1667 = vst [vmem:[%s1666] sm:$0xff] inf
        %1668 = vst [vmem:[%s1666 + $0x8] sm:$0xff] inf
        %1669 = vst [vmem:[%s1666 + $0x10] sm:$0xff] inf
        %1670 = vst [vmem:[%s1666 + $0x18] sm:$0xff] inf
        %1671 = vst [vmem:[%s1666 + $0x20] sm:$0xff] inf
        %1672 = vst [vmem:[%s1666 + $0x28] sm:$0xff] inf
        %1673 = vst [vmem:[%s1666 + $0x30] sm:$0xff] inf
        %1674 = vst [vmem:[%s1666 + $0x38] sm:$0xff] inf
        %1675 = vst [vmem:[%s1666 + $0x40] sm:$0xff] inf
        %1676 = vst [vmem:[%s1666 + $0x48] sm:$0xff] inf
        %1677 = vst [vmem:[%s1666 + $0x50] sm:$0xff] inf
        %1678 = vst [vmem:[%s1666 + $0x58] sm:$0xff] inf
        %1679 = vst [vmem:[%s1666 + $0x60] sm:$0xff] inf
        %1680 = vst [vmem:[%s1666 + $0x68] sm:$0xff] inf
        %1681 = vst [vmem:[%s1666 + $0x70] sm:$0xff] inf
        %1682 = vst [vmem:[%s1666 + $0x78] sm:$0xff] inf
        %1683 = vst [vmem:[%s1666 + $0x80] sm:$0xff] inf
        %1684 = vst [vmem:[%s1666 + $0x88] sm:$0xff] inf
        %1685 = vst [vmem:[%s1666 + $0x90] sm:$0xff] inf
        %1686 = vst [vmem:[%s1666 + $0x98] sm:$0xff] inf
        %1687 = vst [vmem:[%s1666 + $0xa0] sm:$0xff] inf
        %1688 = vst [vmem:[%s1666 + $0xa8] sm:$0xff] inf
        %1689 = vst [vmem:[%s1666 + $0xb0] sm:$0xff] inf
        %1690 = vst [vmem:[%s1666 + $0xb8] sm:$0xff] inf
        %1691 = vst [vmem:[%s1666 + $0xc0] sm:$0xff] inf
        %1692 = vst [vmem:[%s1666 + $0xc8] sm:$0xff] inf
        %1693 = vst [vmem:[%s1666 + $0xd0] sm:$0xff] inf
        %1694 = vst [vmem:[%s1666 + $0xd8] sm:$0xff] inf
        %1695 = vst [vmem:[%s1666 + $0xe0] sm:$0xff] inf
        %1696 = vst [vmem:[%s1666 + $0xe8] sm:$0xff] inf
        %1697 = vst [vmem:[%s1666 + $0xf0] sm:$0xff] inf
        %1698 = vst [vmem:[%s1666 + $0xf8] sm:$0xff] inf
        %1699 = vst [vmem:[%s1666 + $0x100] sm:$0xff] inf
        %1700 = vst [vmem:[%s1666 + $0x108] sm:$0xff] inf
        %1701 = vst [vmem:[%s1666 + $0x110] sm:$0xff] inf
        %1702 = vst [vmem:[%s1666 + $0x118] sm:$0xff] inf
        %1703 = vst [vmem:[%s1666 + $0x120] sm:$0xff] inf
        %1704 = vst [vmem:[%s1666 + $0x128] sm:$0xff] inf
        %1705 = vst [vmem:[%s1666 + $0x130] sm:$0xff] inf
        %1706 = vst [vmem:[%s1666 + $0x138] sm:$0xff] inf
        %1707 = vst [vmem:[%s1666 + $0x140] sm:$0xff] inf
        %1708 = vst [vmem:[%s1666 + $0x148] sm:$0xff] inf
        %1709 = vst [vmem:[%s1666 + $0x150] sm:$0xff] inf
        %1710 = vst [vmem:[%s1666 + $0x158] sm:$0xff] inf
        %1711 = vst [vmem:[%s1666 + $0x160] sm:$0xff] inf
        %1712 = vst [vmem:[%s1666 + $0x168] sm:$0xff] inf
        %1713 = vst [vmem:[%s1666 + $0x170] sm:$0xff] inf
        %1714 = vst [vmem:[%s1666 + $0x178] sm:$0xff] inf
        %1715 = vst [vmem:[%s1666 + $0x180] sm:$0xff] inf
        %1716 = vst [vmem:[%s1666 + $0x188] sm:$0xff] inf
        %1717 = vst [vmem:[%s1666 + $0x190] sm:$0xff] inf
        %1718 = vst [vmem:[%s1666 + $0x198] sm:$0xff] inf
        %1719 = vst [vmem:[%s1666 + $0x1a0] sm:$0xff] inf
        %1720 = vst [vmem:[%s1666 + $0x1a8] sm:$0xff] inf
        %1721 = vst [vmem:[%s1666 + $0x1b0] sm:$0xff] inf
        %1722 = vst [vmem:[%s1666 + $0x1b8] sm:$0xff] inf
        %1723 = vst [vmem:[%s1666 + $0x1c0] sm:$0xff] inf
        %1724 = vst [vmem:[%s1666 + $0x1c8] sm:$0xff] inf
        %1725 = vst [vmem:[%s1666 + $0x1d0] sm:$0xff] inf
        %1726 = vst [vmem:[%s1666 + $0x1d8] sm:$0xff] inf
        %1727 = vst [vmem:[%s1666 + $0x1e0] sm:$0xff] inf
        %1728 = vst [vmem:[%s1666 + $0x1e8] sm:$0xff] inf
        %1729 = vst [vmem:[%s1666 + $0x1f0] sm:$0xff] inf
        %1730 = vst [vmem:[%s1666 + $0x1f8] sm:$0xff] inf
        %s1731 = smul.u32 %s940, 512
        %s1732 = scalar_lea.vmem %s55, %s1731
        %1733 = vst [vmem:[%s1732] sm:$0xff] inf
        %1734 = vst [vmem:[%s1732 + $0x8] sm:$0xff] inf
        %1735 = vst [vmem:[%s1732 + $0x10] sm:$0xff] inf
        %1736 = vst [vmem:[%s1732 + $0x18] sm:$0xff] inf
        %1737 = vst [vmem:[%s1732 + $0x20] sm:$0xff] inf
        %1738 = vst [vmem:[%s1732 + $0x28] sm:$0xff] inf
        %1739 = vst [vmem:[%s1732 + $0x30] sm:$0xff] inf
        %1740 = vst [vmem:[%s1732 + $0x38] sm:$0xff] inf
        %1741 = vst [vmem:[%s1732 + $0x40] sm:$0xff] inf
        %1742 = vst [vmem:[%s1732 + $0x48] sm:$0xff] inf
        %1743 = vst [vmem:[%s1732 + $0x50] sm:$0xff] inf
        %1744 = vst [vmem:[%s1732 + $0x58] sm:$0xff] inf
        %1745 = vst [vmem:[%s1732 + $0x60] sm:$0xff] inf
        %1746 = vst [vmem:[%s1732 + $0x68] sm:$0xff] inf
        %1747 = vst [vmem:[%s1732 + $0x70] sm:$0xff] inf
        %1748 = vst [vmem:[%s1732 + $0x78] sm:$0xff] inf
        %1749 = vst [vmem:[%s1732 + $0x80] sm:$0xff] inf
        %1750 = vst [vmem:[%s1732 + $0x88] sm:$0xff] inf
        %1751 = vst [vmem:[%s1732 + $0x90] sm:$0xff] inf
        %1752 = vst [vmem:[%s1732 + $0x98] sm:$0xff] inf
        %1753 = vst [vmem:[%s1732 + $0xa0] sm:$0xff] inf
        %1754 = vst [vmem:[%s1732 + $0xa8] sm:$0xff] inf
        %1755 = vst [vmem:[%s1732 + $0xb0] sm:$0xff] inf
        %1756 = vst [vmem:[%s1732 + $0xb8] sm:$0xff] inf
        %1757 = vst [vmem:[%s1732 + $0xc0] sm:$0xff] inf
        %1758 = vst [vmem:[%s1732 + $0xc8] sm:$0xff] inf
        %1759 = vst [vmem:[%s1732 + $0xd0] sm:$0xff] inf
        %1760 = vst [vmem:[%s1732 + $0xd8] sm:$0xff] inf
        %1761 = vst [vmem:[%s1732 + $0xe0] sm:$0xff] inf
        %1762 = vst [vmem:[%s1732 + $0xe8] sm:$0xff] inf
        %1763 = vst [vmem:[%s1732 + $0xf0] sm:$0xff] inf
        %1764 = vst [vmem:[%s1732 + $0xf8] sm:$0xff] inf
        %1765 = vst [vmem:[%s1732 + $0x100] sm:$0xff] inf
        %1766 = vst [vmem:[%s1732 + $0x108] sm:$0xff] inf
        %1767 = vst [vmem:[%s1732 + $0x110] sm:$0xff] inf
        %1768 = vst [vmem:[%s1732 + $0x118] sm:$0xff] inf
        %1769 = vst [vmem:[%s1732 + $0x120] sm:$0xff] inf
        %1770 = vst [vmem:[%s1732 + $0x128] sm:$0xff] inf
        %1771 = vst [vmem:[%s1732 + $0x130] sm:$0xff] inf
        %1772 = vst [vmem:[%s1732 + $0x138] sm:$0xff] inf
        %1773 = vst [vmem:[%s1732 + $0x140] sm:$0xff] inf
        %1774 = vst [vmem:[%s1732 + $0x148] sm:$0xff] inf
        %1775 = vst [vmem:[%s1732 + $0x150] sm:$0xff] inf
        %1776 = vst [vmem:[%s1732 + $0x158] sm:$0xff] inf
        %1777 = vst [vmem:[%s1732 + $0x160] sm:$0xff] inf
        %1778 = vst [vmem:[%s1732 + $0x168] sm:$0xff] inf
        %1779 = vst [vmem:[%s1732 + $0x170] sm:$0xff] inf
        %1780 = vst [vmem:[%s1732 + $0x178] sm:$0xff] inf
        %1781 = vst [vmem:[%s1732 + $0x180] sm:$0xff] inf
        %1782 = vst [vmem:[%s1732 + $0x188] sm:$0xff] inf
        %1783 = vst [vmem:[%s1732 + $0x190] sm:$0xff] inf
        %1784 = vst [vmem:[%s1732 + $0x198] sm:$0xff] inf
        %1785 = vst [vmem:[%s1732 + $0x1a0] sm:$0xff] inf
        %1786 = vst [vmem:[%s1732 + $0x1a8] sm:$0xff] inf
        %1787 = vst [vmem:[%s1732 + $0x1b0] sm:$0xff] inf
        %1788 = vst [vmem:[%s1732 + $0x1b8] sm:$0xff] inf
        %1789 = vst [vmem:[%s1732 + $0x1c0] sm:$0xff] inf
        %1790 = vst [vmem:[%s1732 + $0x1c8] sm:$0xff] inf
        %1791 = vst [vmem:[%s1732 + $0x1d0] sm:$0xff] inf
        %1792 = vst [vmem:[%s1732 + $0x1d8] sm:$0xff] inf
        %1793 = vst [vmem:[%s1732 + $0x1e0] sm:$0xff] inf
        %1794 = vst [vmem:[%s1732 + $0x1e8] sm:$0xff] inf
        %1795 = vst [vmem:[%s1732 + $0x1f0] sm:$0xff] inf
        %1796 = vst [vmem:[%s1732 + $0x1f8] sm:$0xff] inf
        %s1797 = sshra.s32 %s940, 7
        %s1798 = sand.u32 %s940, 127
        %s1799 = sadd.s32 %s1797, %s14
        %s1800 = smul.u32 %s1799, 128
        %s1801 = sshra.s32 %s940, 7
        %s1802 = sand.u32 %s940, 127
        %s1803 = sadd.s32 %s1800, %s1802
        %s1804 = sld [smem:[#allocation5 + %s1803]]
        %s1805 = smul.u32 %s1804, 6144
        %s1806 = smul.addr %s1805, 16
        %s1807 = scalar_lea.hbm %s3, %s1806
        %s1808 = scalar_lea.sflag [#allocation3], 1
        // Predicated region
        $region32: #{_attention_page_example.1} parent=16 // pred_check
          _
        $region33: #{_attention_page_example.1} parent=16 // pred_check_branch
          %1810 = sbr.rel target = $region35
        $region34: #{_attention_page_example.1} parent=16 // pred_region
          %1811 = sst [smem:[#allocation8]] [#allocation11]
          %1812 = sst [smem:[#allocation9]] [#allocation10]
        $region35: #{_attention_page_example.1} parent=16 // pred_fallthru
          _
        %1814 = shalt.err (0)
        %s1816 = sshll.u32 %s951, 4
        %s1817 = int_to_ptr.vmem [resolvable:$true] %s1816
        %1819 = dma.vmem_to_hbm [thread:$0]  %s1817, 98304, %s1807, %s1808
      $region17: #{_attention_page_example.1} parent=11 // loop_footer
        %s61 = sadd.s32 1, %s57
      $region18: #{_attention_page_example.1} parent=11 // loop_footer_branch
        %56 = sbr.rel target = $region14
      $region19: #{_attention_page_example.1} parent=11 // loop_exit
        _
      %s1820 = smul.u32 6, 2
      %s1821 = smul.u32 %s1820, 16
      %s1822 = smul.u32 %s1821, 32
      %s1823 = smul.u32 %s1822, 1
      %s1824 = sshll.u32 %s1823, 4
      %1825 = dma.done [#allocation3], %s1824
      %s1826 = scalar_lea.sflag [#allocation3], 1
      %s1827 = sshll.u32 %s1823, 4
      %1828 = dma.done %s1826, %s1827
      %p1829 = scmp.lt.s32.totalorder %s14, 3
      %s1830 = scalar_select %p1829, %s14, 3
      %s1831 = smul.addr %s1830, 512
      %s1832 = smul.addr %s1831, 8
      %s1833 = scalar_lea.vmem %s2, %s1832
      // Predicated region
      $region36: #{_attention_page_example.1} parent=11 // pred_check
        %p1834 = pneg %p29
      $region37: #{_attention_page_example.1} parent=11 // pred_check_branch
        %1836 = sbr.rel (%p1834) target = $region39
      $region38: #{_attention_page_example.1} parent=11 // pred_region
        _
      $region39: #{_attention_page_example.1} parent=11 // pred_fallthru
        _
    $region12: #{_attention_page_example.1} parent=5 // pred_fallthru
      _
    %p1837 = scmp.le.s32.totalorder 1, %s14
    // Predicated region
    $region40: #{_attention_page_example.1} parent=5 // pred_check
      %p1838 = pneg %p1837
    $region41: #{_attention_page_example.1} parent=5 // pred_check_branch
      %1840 = sbr.rel (%p1838) target = $region43
    $region42: #{_attention_page_example.1} parent=5 // pred_region
      %s1841 = ssub.s32 %s14, 1
      // Predicated region
      $region44: #{_attention_page_example.1} parent=42 // pred_check
        %p1842 = pneg %p35
      $region45: #{_attention_page_example.1} parent=42 // pred_check_branch
        %1844 = sbr.rel (%p1842) target = $region47
      $region46: #{_attention_page_example.1} parent=42 // pred_region
        %p1845 = scmp.lt.s32.totalorder %s19, 3
        %s1846 = scalar_select %p1845, %s19, 3
        %s1847 = smul.addr %s1846, 512
        %s1848 = smul.addr %s1847, 8
        %s1849 = scalar_lea.vmem %s2, %s1848
      $region47: #{_attention_page_example.1} parent=42 // pred_fallthru
        _
    $region43: #{_attention_page_example.1} parent=5 // pred_fallthru
      _
  $region6: #{_attention_page_example.1} parent=0 // loop_footer
    %s18 = sadd.s32 1, %s14
  $region7: #{_attention_page_example.1} parent=0 // loop_footer_branch
    %13 = sbr.rel target = $region3
  $region8: #{_attention_page_example.1} parent=0 // loop_exit
    _
  %1850 = vsyncmov [#allocation3]
  %s1851 = vpop.sfrf %1850
  %p1852 = scmp.eq.s32.totalorder %s1851, 0
  %p1853 = pneg %p1852
  %1855 = shalt.err (%p1853)
  %s1856 = scalar_lea.sflag [#allocation3], 1
  %1857 = vsyncmov %s1856
  %s1858 = vpop.sfrf %1857
  %p1859 = scmp.eq.s32.totalorder %s1858, 0
  %p1860 = pneg %p1859
  %1862 = shalt.err (%p1860)

</llo_original>
